<compile_context>
chip_gen: v7x
topology: tpu7x:2x2x1
jax: 0.10.0
libtpu: 0.0.40
codegen_flags: <defaults>
</compile_context>

<pallas_src>
import jax
import jax.numpy as jnp
import numpy as np
from jax.experimental import pallas as pl
from jax.experimental.pallas import tpu as pltpu

IN_CH, IMG = 3, 31        # forward() reshapes the flat input to (N, 3, 31, 31)
FC_C, FC_HW = 32, 3       # last conv stage output (N, 32, 3, 3) -> 288 features

_VMEM_LIMIT_BYTES = 48 * 1024 * 1024   # > v5e 16MiB default, < v7x 64MiB physical


def _round_up(x, m):
    return (x + m - 1) // m * m


def _pick_tm(m, tile_m):
    """Row-tile size: multiple of 16 (bf16 sublane tile), capped by tile_m,
    and >=2 tiles whenever possible so v7x's two TensorCores both get work."""
    if m <= 16:
        return m                                  # single full-extent block
    half = _round_up((m + 1) // 2, 16)
    return min(tile_m, half)


def _buffered_spec(block_shape, index_map, n_buf):
    """BlockSpec with requested pipeline depth; falls back to default (2)."""
    if n_buf > 2 and hasattr(pl, "Buffered"):
        try:
            return pl.BlockSpec(block_shape, index_map,
                                pipeline_mode=pl.Buffered(n_buf))
        except TypeError:
            pass
    return pl.BlockSpec(block_shape, index_map)


# ---------------------------------------------------------------------------
# Pallas kernels
# ---------------------------------------------------------------------------
def _conv_relu_pool_kernel(p_ref, w_ref, b_ref, o_ref):
    """Fused Conv2d(k=2, valid) + bias + ReLU + MaxPool2d(2, 2) on a row tile.

    p_ref: (4, TM, 4*Cin) bf16 stacked im2col patches (one group per pool
           corner); w_ref: (4*Cin, Cout) bf16; b_ref: (1, Cout) f32;
           o_ref: (TM, Cout) bf16 pooled activations.
    One tall matmul over all 4 corner groups, max-reduce, then bias + ReLU
    applied once (exact: bias shared across corners, ReLU monotone).
    """
    tm = o_ref.shape[0]
    w = w_ref[...]
    if tm % 16 == 0:
        # Single MXU push: (4*tm, K) @ (K, Cout), then max over corner groups.
        p = jnp.concatenate([p_ref[0], p_ref[1], p_ref[2], p_ref[3]], axis=0)
        y = jnp.dot(p, w, preferred_element_type=jnp.float32)
        m = jnp.maximum(jnp.maximum(y[0 * tm:1 * tm], y[1 * tm:2 * tm]),
                        jnp.maximum(y[2 * tm:3 * tm], y[3 * tm:4 * tm]))
    else:
        # Tiny / unaligned tile (batch==1 tails): 4 dots with a running max.
        m = None
        for g in range(4):
            d = jnp.dot(p_ref[g], w, preferred_element_type=jnp.float32)
            m = d if m is None else jnp.maximum(m, d)
    o_ref[...] = jnp.maximum(m + b_ref[...], 0.0).astype(o_ref.dtype)


def _mlp_kernel(x_ref, w1_ref, b1_ref, w2_ref, b2_ref, o_ref):
    """Linear(288 -> 256-padded 200) + ReLU + Linear(-> out_size), f32 accum."""
    h = jnp.dot(x_ref[...], w1_ref[...], preferred_element_type=jnp.float32)
    h = jnp.maximum(h + b1_ref[...], 0.0).astype(w2_ref.dtype)   # bf16 for 2nd dot
    o_ref[...] = (jnp.dot(h, w2_ref[...], preferred_element_type=jnp.float32)
                  + b2_ref[...]).astype(o_ref.dtype)


# ---------------------------------------------------------------------------
# pallas_call wrappers (grid over the row axis, weights resident)
# ---------------------------------------------------------------------------
def conv_relu_pool(p4, w2d, b2d, *, tile_m=4096):
    _, m, k = p4.shape
    cout = w2d.shape[1]
    tm = _pick_tm(m, tile_m)
    grid = pl.cdiv(m, tm)                      # partial last block: OOB writes dropped
    n_buf = 3 if grid >= 3 else 2
    return pl.pallas_call(
        _conv_relu_pool_kernel,
        out_shape=jax.ShapeDtypeStruct((m, cout), jnp.bfloat16),
        grid_spec=pltpu.PrefetchScalarGridSpec(
            num_scalar_prefetch=0,
            grid=(grid,),
            in_specs=[_buffered_spec((4, tm, k), lambda i: (0, i, 0), n_buf),
                      pl.BlockSpec((k, cout), lambda i: (0, 0)),   # resident weight
                      pl.BlockSpec((1, cout), lambda i: (0, 0))],  # resident bias
            out_specs=pl.BlockSpec((tm, cout), lambda i: (i, 0)),
        ),
        compiler_params=pltpu.CompilerParams(
            dimension_semantics=("parallel",),
            vmem_limit_bytes=_VMEM_LIMIT_BYTES),
    )(p4, w2d, b2d)


def mlp(feat, w1, b1, w2, b2, *, tile_m=4096):
    n, d = feat.shape
    h_pad = w1.shape[1]
    out = w2.shape[1]
    tm = _pick_tm(n, tile_m)
    grid = pl.cdiv(n, tm)
    n_buf = 3 if grid >= 3 else 2
    return pl.pallas_call(
        _mlp_kernel,
        out_shape=jax.ShapeDtypeStruct((n, out), jnp.float32),
        grid_spec=pltpu.PrefetchScalarGridSpec(
            num_scalar_prefetch=0,
            grid=(grid,),
            in_specs=[_buffered_spec((tm, d), lambda i: (i, 0), n_buf),
                      pl.BlockSpec((d, h_pad), lambda i: (0, 0)),
                      pl.BlockSpec((1, h_pad), lambda i: (0, 0)),
                      pl.BlockSpec((h_pad, out), lambda i: (0, 0)),
                      pl.BlockSpec((1, out), lambda i: (0, 0))],
            out_specs=pl.BlockSpec((tm, out), lambda i: (i, 0)),
        ),
        compiler_params=pltpu.CompilerParams(
            dimension_semantics=("parallel",),
            vmem_limit_bytes=_VMEM_LIMIT_BYTES),
    )(feat, w1, b1, w2, b2)


# ---------------------------------------------------------------------------
# JAX glue: im2col / layout plumbing (no heavy compute)
# ---------------------------------------------------------------------------
def _im2col_pooled_stacked(x_nhwc, ph, pw):
    """(4, N*ph*pw, 4*C) stacked corner patches for Conv2d(k=2)+MaxPool2d(2,2)."""
    n, h, w, c = x_nhwc.shape
    oh, ow = h - 1, w - 1                       # 'valid' conv output size
    assert 2 * ph <= oh and 2 * pw <= ow, (oh, ow, ph, pw)
    patches = jnp.concatenate(
        [x_nhwc[:, dh:dh + oh, dw:dw + ow, :] for dh in (0, 1) for dw in (0, 1)],
        axis=-1)                                # (N, OH, OW, 4*C), blocks (dh, dw)
    corners = [patches[:, i:i + 2 * ph:2, j:j + 2 * pw:2, :].reshape(n * ph * pw, 4 * c)
               for i in (0, 1) for j in (0, 1)]
    return jnp.stack(corners, axis=0)           # (4, M, 4C)


def init_params(key, out_size):
    """Deterministic synthetic parameters with the exact nn.Module shapes."""
    keys = jax.random.split(key, 10)
    conv_cfg = [(3, 6), (6, 18), (18, 32)]
    conv = []
    for idx, (cin, cout) in enumerate(conv_cfg):
        w = 0.1 * jax.random.normal(keys[2 * idx], (cout, cin, 2, 2), jnp.float32)  # OIHW
        b = 0.1 * jax.random.normal(keys[2 * idx + 1], (cout,), jnp.float32)
        conv.append((w, b))
    w1 = 0.1 * jax.random.normal(keys[6], (288, 200), jnp.float32)   # (in, out) = torch W.T
    b1 = 0.1 * jax.random.normal(keys[7], (200,), jnp.float32)
    w2 = 0.1 * jax.random.normal(keys[8], (200, out_size), jnp.float32)
    b2 = 0.1 * jax.random.normal(keys[9], (out_size,), jnp.float32)
    return {"conv": conv, "fc": (w1, b1, w2, b2)}


def prepare_params(params):
    """One-time reshape/permute/cast of canonical params into kernel layout."""
    conv = []
    for w, b in params["conv"]:
        cout, cin = w.shape[0], w.shape[1]
        # OIHW -> ((dh, dw, ci) x co), matching the im2col channel-block order.
        w2d = jnp.transpose(w, (2, 3, 1, 0)).reshape(4 * cin, cout).astype(jnp.bfloat16)
        conv.append((w2d, b.reshape(1, cout).astype(jnp.float32)))
    w1, b1, w2, b2 = params["fc"]
    hidden = w1.shape[1]
    # Absorb torch.flatten's NCHW (c, p, q) feature order into a one-time row
    # permutation of w1 so forward() can flatten the NHWC activation directly.
    w1_perm = (w1.reshape(FC_C, FC_HW, FC_HW, hidden)
                 .transpose(1, 2, 0, 3).reshape(FC_HW * FC_HW * FC_C, hidden))
    hpad = _round_up(hidden, 128)            # 200 -> 256: lane-dense hidden stores
    w1p = jnp.pad(w1_perm, ((0, 0), (0, hpad - hidden))).astype(jnp.bfloat16)
    b1p = jnp.pad(b1, (0, hpad - hidden)).reshape(1, hpad).astype(jnp.float32)
    w2p = jnp.pad(w2, ((0, hpad - hidden), (0, 0))).astype(jnp.bfloat16)
    b2p = b2.reshape(1, -1).astype(jnp.float32)
    return {"conv": conv, "fc": (w1p, b1p, w2p, b2p)}


def forward(kparams, x):
    """Pallas implementation of NeuralNet.forward: (N, 2883) -> (N, out_size)."""
    n = x.shape[0]
    h = (x.reshape(n, IN_CH, IMG, IMG).transpose(0, 2, 3, 1)     # NCHW -> NHWC
           .astype(jnp.bfloat16))                                # bf16 MXU inputs
    conv_tiles = (4096, 4096, 4096)            # per-stage row tiles (K=12/24/72)
    for (w2d, b2d), tile_m in zip(kparams["conv"], conv_tiles):
        cout = w2d.shape[1]
        ph = (h.shape[1] - 1) // 2     # conv(k=2, valid) then floor max-pool(2,2)
        p4 = _im2col_pooled_stacked(h, ph, ph)                   # (4, N*ph*ph, 4*Cin)
        pooled = conv_relu_pool(p4, w2d, b2d, tile_m=tile_m)     # (N*ph*ph, cout) bf16
        h = pooled.reshape(n, ph, ph, cout)                      # NHWC
    feat = h.reshape(n, -1)            # NHWC flatten; w1 rows were pre-permuted
    w1, b1, w2, b2 = kparams["fc"]
    return mlp(feat, w1, b1, w2, b2, tile_m=4096)


# ---------------------------------------------------------------------------
# Pure-JAX reference (canonical f32 params / layouts) for a sanity check
# ---------------------------------------------------------------------------
def reference_forward(params, x):
    n = x.shape[0]
    h = x.reshape(n, IN_CH, IMG, IMG)
    for w, b in params["conv"]:
        h = jax.lax.conv_general_dilated(
            h, w, window_strides=(1, 1), padding="VALID",
            dimension_numbers=("NCHW", "OIHW", "NCHW"))
        h = jnp.maximum(h + b[None, :, None, None], 0.0)
        h = jax.lax.reduce_window(h, -jnp.inf, jax.lax.max,
                                  (1, 1, 2, 2), (1, 1, 2, 2), "VALID")
    feat = h.reshape(n, -1)
    w1, b1, w2, b2 = params["fc"]
    return jnp.maximum(feat @ w1 + b1, 0.0) @ w2 + b2


if __name__ == "__main__":
    key = jax.random.PRNGKey(0)
    pkey, xkey = jax.random.split(key)
    batch, out_size = 2, 4
    params = init_params(pkey, out_size)
    kparams = prepare_params(params)
    x = jax.random.normal(xkey, (batch, IN_CH * IMG * IMG), jnp.float32)  # (2, 2883)

    fwd = jax.jit(forward)
    y = jax.block_until_ready(fwd(kparams, x))
    assert y.shape == (batch, out_size) and y.dtype == jnp.float32

    y_ref = jax.block_until_ready(reference_forward(params, x))
    assert np.allclose(np.asarray(y), np.asarray(y_ref), rtol=2e-2, atol=2e-2)

    print("KERNEL_OK")
</pallas_src>

<mosaic_0001>
module attributes {stable_mosaic.version = 11 : i64} {
  func.func @_conv_relu_pool_kernel(%arg0: i32, %arg1: memref<4x240x12xbf16, #tpu.memory_space<vmem>>, %arg2: memref<12x6xbf16, #tpu.memory_space<vmem>>, %arg3: memref<1x6xf32, #tpu.memory_space<vmem>>, %arg4: memref<240x6xbf16, #tpu.memory_space<vmem>>) attributes {dimension_semantics = [#tpu.dimension_semantics<parallel>], iteration_bounds = array<i64: 2>, scalar_prefetch = 0 : i64, scratch_operands = 0 : i64, tpu.core_type = #tpu.core_type<tc>, window_params = [{transform_indices = @transform_0, window_bounds = array<i64: 4, 240, 12>}, {pipeline_mode = #tpu.pipeline_mode<synchronous>, transform_indices = @transform_1, window_bounds = array<i64: 12, 6>}, {pipeline_mode = #tpu.pipeline_mode<synchronous>, transform_indices = @transform_2, window_bounds = array<i64: 1, 6>}, {transform_indices = @transform_3, window_bounds = array<i64: 240, 6>}]} {
    %c0 = arith.constant 0 : index
    %c0_0 = arith.constant 0 : index
    %0 = vector.load %arg2[%c0, %c0_0] : memref<12x6xbf16, #tpu.memory_space<vmem>>, vector<12x6xbf16>
    %c0_1 = arith.constant 0 : index
    %c0_2 = arith.constant 0 : index
    %c0_3 = arith.constant 0 : index
    %1 = vector.load %arg1[%c0_1, %c0_2, %c0_3] : memref<4x240x12xbf16, #tpu.memory_space<vmem>>, vector<1x240x12xbf16>
    %2 = vector.shape_cast %1 : vector<1x240x12xbf16> to vector<240x12xbf16>
    %c1 = arith.constant 1 : index
    %c0_4 = arith.constant 0 : index
    %c0_5 = arith.constant 0 : index
    %3 = vector.load %arg1[%c1, %c0_4, %c0_5] : memref<4x240x12xbf16, #tpu.memory_space<vmem>>, vector<1x240x12xbf16>
    %4 = vector.shape_cast %3 : vector<1x240x12xbf16> to vector<240x12xbf16>
    %c2 = arith.constant 2 : index
    %c0_6 = arith.constant 0 : index
    %c0_7 = arith.constant 0 : index
    %5 = vector.load %arg1[%c2, %c0_6, %c0_7] : memref<4x240x12xbf16, #tpu.memory_space<vmem>>, vector<1x240x12xbf16>
    %6 = vector.shape_cast %5 : vector<1x240x12xbf16> to vector<240x12xbf16>
    %c3 = arith.constant 3 : index
    %c0_8 = arith.constant 0 : index
    %c0_9 = arith.constant 0 : index
    %7 = vector.load %arg1[%c3, %c0_8, %c0_9] : memref<4x240x12xbf16, #tpu.memory_space<vmem>>, vector<1x240x12xbf16>
    %8 = vector.shape_cast %7 : vector<1x240x12xbf16> to vector<240x12xbf16>
    %9 = tpu.concatenate %2, %4, %6, %8 in 0 : vector<240x12xbf16>, vector<240x12xbf16>, vector<240x12xbf16>, vector<240x12xbf16> -> vector<960x12xbf16>
    %cst = arith.constant dense<0.000000e+00> : vector<960x6xf32>
    %10 = tpu.matmul %9, %0, %cst {dimension_numbers = #tpu.dot_dimension_numbers<[1], [0], [0], [1], [0, 0, 1, 1], [], []>} : vector<960x12xbf16>, vector<12x6xbf16>, vector<960x6xf32> -> vector<960x6xf32>
    %11 = vector.extract_strided_slice %10 {offsets = [0, 0], sizes = [240, 6], strides = [1, 1]} : vector<960x6xf32> to vector<240x6xf32>
    %12 = vector.extract_strided_slice %10 {offsets = [240, 0], sizes = [240, 6], strides = [1, 1]} : vector<960x6xf32> to vector<240x6xf32>
    %13 = arith.maximumf %11, %12 : vector<240x6xf32>
    %14 = vector.extract_strided_slice %10 {offsets = [480, 0], sizes = [240, 6], strides = [1, 1]} : vector<960x6xf32> to vector<240x6xf32>
    %15 = vector.extract_strided_slice %10 {offsets = [720, 0], sizes = [240, 6], strides = [1, 1]} : vector<960x6xf32> to vector<240x6xf32>
    %16 = arith.maximumf %14, %15 : vector<240x6xf32>
    %17 = arith.maximumf %13, %16 : vector<240x6xf32>
    %c0_10 = arith.constant 0 : index
    %c0_11 = arith.constant 0 : index
    %18 = vector.load %arg3[%c0_10, %c0_11] : memref<1x6xf32, #tpu.memory_space<vmem>>, vector<1x6xf32>
    %19 = vector.broadcast %18 : vector<1x6xf32> to vector<240x6xf32>
    %20 = arith.addf %17, %19 : vector<240x6xf32>
    %cst_12 = arith.constant 0.000000e+00 : f32
    %21 = vector.broadcast %cst_12 : f32 to vector<240x6xf32>
    %22 = arith.maximumf %20, %21 : vector<240x6xf32>
    %23 = arith.truncf %22 : vector<240x6xf32> to vector<240x6xbf16>
    %c0_13 = arith.constant 0 : index
    %c0_14 = arith.constant 0 : index
    %24 = vector.load %arg4[%c0_13, %c0_14] : memref<240x6xbf16, #tpu.memory_space<vmem>>, vector<240x6xbf16>
    tpu.vector_store %arg4[%c0_13, %c0_14], %23 {strides = array<i32>} : memref<240x6xbf16, #tpu.memory_space<vmem>>, vector<240x6xbf16>,
    return
  }
  func.func @transform_0(%arg0: i32) -> (i32, i32, i32) {
    %c0_i32 = arith.constant 0 : i32
    %c0_i32_0 = arith.constant 0 : i32
    %c0_i32_1 = arith.constant 0 : i32
    return %c0_i32, %arg0, %c0_i32_0 : i32, i32, i32
  }
  func.func @transform_1(%arg0: i32) -> (i32, i32) {
    %c0_i32 = arith.constant 0 : i32
    %c0_i32_0 = arith.constant 0 : i32
    %c0_i32_1 = arith.constant 0 : i32
    return %c0_i32, %c0_i32_0 : i32, i32
  }
  func.func @transform_2(%arg0: i32) -> (i32, i32) {
    %c0_i32 = arith.constant 0 : i32
    %c0_i32_0 = arith.constant 0 : i32
    %c0_i32_1 = arith.constant 0 : i32
    return %c0_i32, %c0_i32_0 : i32, i32
  }
  func.func @transform_3(%arg0: i32) -> (i32, i32) {
    %c0_i32 = arith.constant 0 : i32
    %c0_i32_0 = arith.constant 0 : i32
    return %arg0, %c0_i32 : i32, i32
  }
}

module attributes {stable_mosaic.version = 11 : i64} {
  func.func @_conv_relu_pool_kernel(%arg0: i32, %arg1: memref<4x64x24xbf16, #tpu.memory_space<vmem>>, %arg2: memref<24x18xbf16, #tpu.memory_space<vmem>>, %arg3: memref<1x18xf32, #tpu.memory_space<vmem>>, %arg4: memref<64x18xbf16, #tpu.memory_space<vmem>>) attributes {dimension_semantics = [#tpu.dimension_semantics<parallel>], iteration_bounds = array<i64: 2>, scalar_prefetch = 0 : i64, scratch_operands = 0 : i64, tpu.core_type = #tpu.core_type<tc>, window_params = [{transform_indices = @transform_0, window_bounds = array<i64: 4, 64, 24>}, {pipeline_mode = #tpu.pipeline_mode<synchronous>, transform_indices = @transform_1, window_bounds = array<i64: 24, 18>}, {pipeline_mode = #tpu.pipeline_mode<synchronous>, transform_indices = @transform_2, window_bounds = array<i64: 1, 18>}, {transform_indices = @transform_3, window_bounds = array<i64: 64, 18>}]} {
    %c0 = arith.constant 0 : index
    %c0_0 = arith.constant 0 : index
    %0 = vector.load %arg2[%c0, %c0_0] : memref<24x18xbf16, #tpu.memory_space<vmem>>, vector<24x18xbf16>
    %c0_1 = arith.constant 0 : index
    %c0_2 = arith.constant 0 : index
    %c0_3 = arith.constant 0 : index
    %1 = vector.load %arg1[%c0_1, %c0_2, %c0_3] : memref<4x64x24xbf16, #tpu.memory_space<vmem>>, vector<1x64x24xbf16>
    %2 = vector.shape_cast %1 : vector<1x64x24xbf16> to vector<64x24xbf16>
    %c1 = arith.constant 1 : index
    %c0_4 = arith.constant 0 : index
    %c0_5 = arith.constant 0 : index
    %3 = vector.load %arg1[%c1, %c0_4, %c0_5] : memref<4x64x24xbf16, #tpu.memory_space<vmem>>, vector<1x64x24xbf16>
    %4 = vector.shape_cast %3 : vector<1x64x24xbf16> to vector<64x24xbf16>
    %c2 = arith.constant 2 : index
    %c0_6 = arith.constant 0 : index
    %c0_7 = arith.constant 0 : index
    %5 = vector.load %arg1[%c2, %c0_6, %c0_7] : memref<4x64x24xbf16, #tpu.memory_space<vmem>>, vector<1x64x24xbf16>
    %6 = vector.shape_cast %5 : vector<1x64x24xbf16> to vector<64x24xbf16>
    %c3 = arith.constant 3 : index
    %c0_8 = arith.constant 0 : index
    %c0_9 = arith.constant 0 : index
    %7 = vector.load %arg1[%c3, %c0_8, %c0_9] : memref<4x64x24xbf16, #tpu.memory_space<vmem>>, vector<1x64x24xbf16>
    %8 = vector.shape_cast %7 : vector<1x64x24xbf16> to vector<64x24xbf16>
    %9 = tpu.concatenate %2, %4, %6, %8 in 0 : vector<64x24xbf16>, vector<64x24xbf16>, vector<64x24xbf16>, vector<64x24xbf16> -> vector<256x24xbf16>
    %cst = arith.constant dense<0.000000e+00> : vector<256x18xf32>
    %10 = tpu.matmul %9, %0, %cst {dimension_numbers = #tpu.dot_dimension_numbers<[1], [0], [0], [1], [0, 0, 1, 1], [], []>} : vector<256x24xbf16>, vector<24x18xbf16>, vector<256x18xf32> -> vector<256x18xf32>
    %11 = vector.extract_strided_slice %10 {offsets = [0, 0], sizes = [64, 18], strides = [1, 1]} : vector<256x18xf32> to vector<64x18xf32>
    %12 = vector.extract_strided_slice %10 {offsets = [64, 0], sizes = [64, 18], strides = [1, 1]} : vector<256x18xf32> to vector<64x18xf32>
    %13 = arith.maximumf %11, %12 : vector<64x18xf32>
    %14 = vector.extract_strided_slice %10 {offsets = [128, 0], sizes = [64, 18], strides = [1, 1]} : vector<256x18xf32> to vector<64x18xf32>
    %15 = vector.extract_strided_slice %10 {offsets = [192, 0], sizes = [64, 18], strides = [1, 1]} : vector<256x18xf32> to vector<64x18xf32>
    %16 = arith.maximumf %14, %15 : vector<64x18xf32>
    %17 = arith.maximumf %13, %16 : vector<64x18xf32>
    %c0_10 = arith.constant 0 : index
    %c0_11 = arith.constant 0 : index
    %18 = vector.load %arg3[%c0_10, %c0_11] : memref<1x18xf32, #tpu.memory_space<vmem>>, vector<1x18xf32>
    %19 = vector.broadcast %18 : vector<1x18xf32> to vector<64x18xf32>
    %20 = arith.addf %17, %19 : vector<64x18xf32>
    %cst_12 = arith.constant 0.000000e+00 : f32
    %21 = vector.broadcast %cst_12 : f32 to vector<64x18xf32>
    %22 = arith.maximumf %20, %21 : vector<64x18xf32>
    %23 = arith.truncf %22 : vector<64x18xf32> to vector<64x18xbf16>
    %c0_13 = arith.constant 0 : index
    %c0_14 = arith.constant 0 : index
    %24 = vector.load %arg4[%c0_13, %c0_14] : memref<64x18xbf16, #tpu.memory_space<vmem>>, vector<64x18xbf16>
    tpu.vector_store %arg4[%c0_13, %c0_14], %23 {strides = array<i32>} : memref<64x18xbf16, #tpu.memory_space<vmem>>, vector<64x18xbf16>,
    return
  }
  func.func @transform_0(%arg0: i32) -> (i32, i32, i32) {
    %c0_i32 = arith.constant 0 : i32
    %c0_i32_0 = arith.constant 0 : i32
    %c0_i32_1 = arith.constant 0 : i32
    return %c0_i32, %arg0, %c0_i32_0 : i32, i32, i32
  }
  func.func @transform_1(%arg0: i32) -> (i32, i32) {
    %c0_i32 = arith.constant 0 : i32
    %c0_i32_0 = arith.constant 0 : i32
    %c0_i32_1 = arith.constant 0 : i32
    return %c0_i32, %c0_i32_0 : i32, i32
  }
  func.func @transform_2(%arg0: i32) -> (i32, i32) {
    %c0_i32 = arith.constant 0 : i32
    %c0_i32_0 = arith.constant 0 : i32
    %c0_i32_1 = arith.constant 0 : i32
    return %c0_i32, %c0_i32_0 : i32, i32
  }
  func.func @transform_3(%arg0: i32) -> (i32, i32) {
    %c0_i32 = arith.constant 0 : i32
    %c0_i32_0 = arith.constant 0 : i32
    return %arg0, %c0_i32 : i32, i32
  }
}

module attributes {stable_mosaic.version = 11 : i64} {
  func.func @_conv_relu_pool_kernel(%arg0: i32, %arg1: memref<4x16x72xbf16, #tpu.memory_space<vmem>>, %arg2: memref<72x32xbf16, #tpu.memory_space<vmem>>, %arg3: memref<1x32xf32, #tpu.memory_space<vmem>>, %arg4: memref<16x32xbf16, #tpu.memory_space<vmem>>) attributes {dimension_semantics = [#tpu.dimension_semantics<parallel>], iteration_bounds = array<i64: 2>, scalar_prefetch = 0 : i64, scratch_operands = 0 : i64, tpu.core_type = #tpu.core_type<tc>, window_params = [{transform_indices = @transform_0, window_bounds = array<i64: 4, 16, 72>}, {pipeline_mode = #tpu.pipeline_mode<synchronous>, transform_indices = @transform_1, window_bounds = array<i64: 72, 32>}, {pipeline_mode = #tpu.pipeline_mode<synchronous>, transform_indices = @transform_2, window_bounds = array<i64: 1, 32>}, {transform_indices = @transform_3, window_bounds = array<i64: 16, 32>}]} {
    %c0 = arith.constant 0 : index
    %c0_0 = arith.constant 0 : index
    %0 = vector.load %arg2[%c0, %c0_0] : memref<72x32xbf16, #tpu.memory_space<vmem>>, vector<72x32xbf16>
    %c0_1 = arith.constant 0 : index
    %c0_2 = arith.constant 0 : index
    %c0_3 = arith.constant 0 : index
    %1 = vector.load %arg1[%c0_1, %c0_2, %c0_3] : memref<4x16x72xbf16, #tpu.memory_space<vmem>>, vector<1x16x72xbf16>
    %2 = vector.shape_cast %1 : vector<1x16x72xbf16> to vector<16x72xbf16>
    %c1 = arith.constant 1 : index
    %c0_4 = arith.constant 0 : index
    %c0_5 = arith.constant 0 : index
    %3 = vector.load %arg1[%c1, %c0_4, %c0_5] : memref<4x16x72xbf16, #tpu.memory_space<vmem>>, vector<1x16x72xbf16>
    %4 = vector.shape_cast %3 : vector<1x16x72xbf16> to vector<16x72xbf16>
    %c2 = arith.constant 2 : index
    %c0_6 = arith.constant 0 : index
    %c0_7 = arith.constant 0 : index
    %5 = vector.load %arg1[%c2, %c0_6, %c0_7] : memref<4x16x72xbf16, #tpu.memory_space<vmem>>, vector<1x16x72xbf16>
    %6 = vector.shape_cast %5 : vector<1x16x72xbf16> to vector<16x72xbf16>
    %c3 = arith.constant 3 : index
    %c0_8 = arith.constant 0 : index
    %c0_9 = arith.constant 0 : index
    %7 = vector.load %arg1[%c3, %c0_8, %c0_9] : memref<4x16x72xbf16, #tpu.memory_space<vmem>>, vector<1x16x72xbf16>
    %8 = vector.shape_cast %7 : vector<1x16x72xbf16> to vector<16x72xbf16>
    %9 = tpu.concatenate %2, %4, %6, %8 in 0 : vector<16x72xbf16>, vector<16x72xbf16>, vector<16x72xbf16>, vector<16x72xbf16> -> vector<64x72xbf16>
    %cst = arith.constant dense<0.000000e+00> : vector<64x32xf32>
    %10 = tpu.matmul %9, %0, %cst {dimension_numbers = #tpu.dot_dimension_numbers<[1], [0], [0], [1], [0, 0, 1, 1], [], []>} : vector<64x72xbf16>, vector<72x32xbf16>, vector<64x32xf32> -> vector<64x32xf32>
    %11 = vector.extract_strided_slice %10 {offsets = [0, 0], sizes = [16, 32], strides = [1, 1]} : vector<64x32xf32> to vector<16x32xf32>
    %12 = vector.extract_strided_slice %10 {offsets = [16, 0], sizes = [16, 32], strides = [1, 1]} : vector<64x32xf32> to vector<16x32xf32>
    %13 = arith.maximumf %11, %12 : vector<16x32xf32>
    %14 = vector.extract_strided_slice %10 {offsets = [32, 0], sizes = [16, 32], strides = [1, 1]} : vector<64x32xf32> to vector<16x32xf32>
    %15 = vector.extract_strided_slice %10 {offsets = [48, 0], sizes = [16, 32], strides = [1, 1]} : vector<64x32xf32> to vector<16x32xf32>
    %16 = arith.maximumf %14, %15 : vector<16x32xf32>
    %17 = arith.maximumf %13, %16 : vector<16x32xf32>
    %c0_10 = arith.constant 0 : index
    %c0_11 = arith.constant 0 : index
    %18 = vector.load %arg3[%c0_10, %c0_11] : memref<1x32xf32, #tpu.memory_space<vmem>>, vector<1x32xf32>
    %19 = vector.broadcast %18 : vector<1x32xf32> to vector<16x32xf32>
    %20 = arith.addf %17, %19 : vector<16x32xf32>
    %cst_12 = arith.constant 0.000000e+00 : f32
    %21 = vector.broadcast %cst_12 : f32 to vector<16x32xf32>
    %22 = arith.maximumf %20, %21 : vector<16x32xf32>
    %23 = arith.truncf %22 : vector<16x32xf32> to vector<16x32xbf16>
    %c0_13 = arith.constant 0 : index
    %c0_14 = arith.constant 0 : index
    %24 = vector.load %arg4[%c0_13, %c0_14] : memref<16x32xbf16, #tpu.memory_space<vmem>>, vector<16x32xbf16>
    tpu.vector_store %arg4[%c0_13, %c0_14], %23 {strides = array<i32>} : memref<16x32xbf16, #tpu.memory_space<vmem>>, vector<16x32xbf16>,
    return
  }
  func.func @transform_0(%arg0: i32) -> (i32, i32, i32) {
    %c0_i32 = arith.constant 0 : i32
    %c0_i32_0 = arith.constant 0 : i32
    %c0_i32_1 = arith.constant 0 : i32
    return %c0_i32, %arg0, %c0_i32_0 : i32, i32, i32
  }
  func.func @transform_1(%arg0: i32) -> (i32, i32) {
    %c0_i32 = arith.constant 0 : i32
    %c0_i32_0 = arith.constant 0 : i32
    %c0_i32_1 = arith.constant 0 : i32
    return %c0_i32, %c0_i32_0 : i32, i32
  }
  func.func @transform_2(%arg0: i32) -> (i32, i32) {
    %c0_i32 = arith.constant 0 : i32
    %c0_i32_0 = arith.constant 0 : i32
    %c0_i32_1 = arith.constant 0 : i32
    return %c0_i32, %c0_i32_0 : i32, i32
  }
  func.func @transform_3(%arg0: i32) -> (i32, i32) {
    %c0_i32 = arith.constant 0 : i32
    %c0_i32_0 = arith.constant 0 : i32
    return %arg0, %c0_i32 : i32, i32
  }
}

module attributes {stable_mosaic.version = 11 : i64} {
  func.func @_mlp_kernel(%arg0: i32, %arg1: memref<2x288xbf16, #tpu.memory_space<vmem>>, %arg2: memref<288x256xbf16, #tpu.memory_space<vmem>>, %arg3: memref<1x256xf32, #tpu.memory_space<vmem>>, %arg4: memref<256x4xbf16, #tpu.memory_space<vmem>>, %arg5: memref<1x4xf32, #tpu.memory_space<vmem>>, %arg6: memref<2x4xf32, #tpu.memory_space<vmem>>) attributes {dimension_semantics = [#tpu.dimension_semantics<parallel>], iteration_bounds = array<i64: 1>, scalar_prefetch = 0 : i64, scratch_operands = 0 : i64, tpu.core_type = #tpu.core_type<tc>, window_params = [{transform_indices = @transform_0, window_bounds = array<i64: 2, 288>}, {pipeline_mode = #tpu.pipeline_mode<synchronous>, transform_indices = @transform_1, window_bounds = array<i64: 288, 256>}, {pipeline_mode = #tpu.pipeline_mode<synchronous>, transform_indices = @transform_2, window_bounds = array<i64: 1, 256>}, {pipeline_mode = #tpu.pipeline_mode<synchronous>, transform_indices = @transform_3, window_bounds = array<i64: 256, 4>}, {pipeline_mode = #tpu.pipeline_mode<synchronous>, transform_indices = @transform_4, window_bounds = array<i64: 1, 4>}, {transform_indices = @transform_5, window_bounds = array<i64: 2, 4>}]} {
    %c0 = arith.constant 0 : index
    %c0_0 = arith.constant 0 : index
    %0 = vector.load %arg1[%c0, %c0_0] : memref<2x288xbf16, #tpu.memory_space<vmem>>, vector<2x288xbf16>
    %c0_1 = arith.constant 0 : index
    %c0_2 = arith.constant 0 : index
    %1 = vector.load %arg2[%c0_1, %c0_2] : memref<288x256xbf16, #tpu.memory_space<vmem>>, vector<288x256xbf16>
    %cst = arith.constant dense<0.000000e+00> : vector<2x256xf32>
    %2 = tpu.matmul %0, %1, %cst {dimension_numbers = #tpu.dot_dimension_numbers<[1], [0], [0], [1], [0, 0, 1, 1], [], []>} : vector<2x288xbf16>, vector<288x256xbf16>, vector<2x256xf32> -> vector<2x256xf32>
    %c0_3 = arith.constant 0 : index
    %c0_4 = arith.constant 0 : index
    %3 = vector.load %arg3[%c0_3, %c0_4] : memref<1x256xf32, #tpu.memory_space<vmem>>, vector<1x256xf32>
    %4 = vector.broadcast %3 : vector<1x256xf32> to vector<2x256xf32>
    %5 = arith.addf %2, %4 : vector<2x256xf32>
    %cst_5 = arith.constant 0.000000e+00 : f32
    %6 = vector.broadcast %cst_5 : f32 to vector<2x256xf32>
    %7 = arith.maximumf %5, %6 : vector<2x256xf32>
    %8 = arith.truncf %7 : vector<2x256xf32> to vector<2x256xbf16>
    %c0_6 = arith.constant 0 : index
    %c0_7 = arith.constant 0 : index
    %9 = vector.load %arg4[%c0_6, %c0_7] : memref<256x4xbf16, #tpu.memory_space<vmem>>, vector<256x4xbf16>
    %cst_8 = arith.constant dense<0.000000e+00> : vector<2x4xf32>
    %10 = tpu.matmul %8, %9, %cst_8 {dimension_numbers = #tpu.dot_dimension_numbers<[1], [0], [0], [1], [0, 0, 1, 1], [], []>} : vector<2x256xbf16>, vector<256x4xbf16>, vector<2x4xf32> -> vector<2x4xf32>
    %c0_9 = arith.constant 0 : index
    %c0_10 = arith.constant 0 : index
    %11 = vector.load %arg5[%c0_9, %c0_10] : memref<1x4xf32, #tpu.memory_space<vmem>>, vector<1x4xf32>
    %12 = vector.broadcast %11 : vector<1x4xf32> to vector<2x4xf32>
    %13 = arith.addf %10, %12 : vector<2x4xf32>
    %c0_11 = arith.constant 0 : index
    %c0_12 = arith.constant 0 : index
    %14 = vector.load %arg6[%c0_11, %c0_12] : memref<2x4xf32, #tpu.memory_space<vmem>>, vector<2x4xf32>
    tpu.vector_store %arg6[%c0_11, %c0_12], %13 {strides = array<i32>} : memref<2x4xf32, #tpu.memory_space<vmem>>, vector<2x4xf32>,
    return
  }
  func.func @transform_0(%arg0: i32) -> (i32, i32) {
    %c0_i32 = arith.constant 0 : i32
    %c0_i32_0 = arith.constant 0 : i32
    return %arg0, %c0_i32 : i32, i32
  }
  func.func @transform_1(%arg0: i32) -> (i32, i32) {
    %c0_i32 = arith.constant 0 : i32
    %c0_i32_0 = arith.constant 0 : i32
    %c0_i32_1 = arith.constant 0 : i32
    return %c0_i32, %c0_i32_0 : i32, i32
  }
  func.func @transform_2(%arg0: i32) -> (i32, i32) {
    %c0_i32 = arith.constant 0 : i32
    %c0_i32_0 = arith.constant 0 : i32
    %c0_i32_1 = arith.constant 0 : i32
    return %c0_i32, %c0_i32_0 : i32, i32
  }
  func.func @transform_3(%arg0: i32) -> (i32, i32) {
    %c0_i32 = arith.constant 0 : i32
    %c0_i32_0 = arith.constant 0 : i32
    %c0_i32_1 = arith.constant 0 : i32
    return %c0_i32, %c0_i32_0 : i32, i32
  }
  func.func @transform_4(%arg0: i32) -> (i32, i32) {
    %c0_i32 = arith.constant 0 : i32
    %c0_i32_0 = arith.constant 0 : i32
    %c0_i32_1 = arith.constant 0 : i32
    return %c0_i32, %c0_i32_0 : i32, i32
  }
  func.func @transform_5(%arg0: i32) -> (i32, i32) {
    %c0_i32 = arith.constant 0 : i32
    %c0_i32_0 = arith.constant 0 : i32
    return %arg0, %c0_i32 : i32, i32
  }
}

</mosaic_0001>

<llo_original>
// kernel: forward.4
$region0: #{forward.4}
  #allocation0 [shape = 'u32[]', space=smem, size = 0x4, offset = 0x4, fixed_abs, tag = 'smem constant byte address 0x4 - core index']
  #allocation1 [shape = 'u32[144,128]{1,0:T(1,128)}', space=vmem, size = 0x12000, scoped, tag = 'internal scratch']
  %s0 = inlined_call_operand.vmem [shape: bf16[4,450,12], index: 0, kind: input, shape index: {}]
  %s1 = inlined_call_operand.vmem [shape: bf16[12,6], index: 1, kind: input, shape index: {}]
  %s2 = inlined_call_operand.vmem [shape: f32[1,6], index: 2, kind: input, shape index: {}]
  %s3 = inlined_call_operand.vmem [shape: bf16[450,6], index: 3, kind: output, shape index: {}]
  %s4 = sld [smem:[#allocation0]]
  $region151: #{forward.4} parent=0
    _
  %s6 = ssub.s32 1, %s4
  %s7 = scalar_select 0, %s6, %s4
  $region1: #{forward.4} parent=0
    #allocation2 [shape = 'u8[491520]{0}', space=vmem, size = 0x78000, scoped, tag = 'input window, operand 0']
    #allocation3 [shape = 'u8[122880]{0}', space=vmem, size = 0x1e000, scoped, tag = 'output window, operand 0']
    loop: start=0, step=1, limit=4
    $region2: #{forward.4} parent=1 // loop_pre_header
      _
    $region3: #{forward.4} parent=1 // loop_header
      %s9 = sphi 0, %s13
      %p10 = scmp.ge.s32.totalorder %s9, 4
      %s19 = sphi 0, %s21
      %s22 = sphi 0, %s19
      %s23 = sphi 0, %s22
      %s39 = sphi 0, %s23
      %s43 = sphi 0, %s43
      %s45 = sphi 0, %s43
      %s46 = sphi 0, %s45
      %s60 = sphi 0, %s46
      %s64 = sphi 0, %s64
      %s66 = sphi 0, %s64
      %s67 = sphi 0, %s66
      %s81 = sphi 0, %s67
      %s87 = sphi 0, %s89
      %s90 = sphi 0, %s87
      %s91 = sphi 0, %s90
      %s107 = sphi 0, %s91
    $region4: #{forward.4} parent=1 // loop_header_branch
      %12 = sbr.rel (%p10) target = $region8
    $region5: #{forward.4} parent=1 // loop_body
      %s14 = ssub.s32 %s9, 1
      %s15 = ssub.s32 %s9, 2
      %s16 = sadd.s32 %s9, 1
      %s17 = ssub.s32 %s9, %s16
      %p18 = scmp.eq.s32.totalorder %s17, 0
      %s20 = sadd.s32 %s19, 1
      %s21 = scalar_select %p18, %s19, %s20
      %p24 = pneg %p18
      %p25 = scmp.eq.s32.totalorder %s9, 1
      %p26 = por %p24, %p25
      %p27 = scmp.ne.s32.totalorder %s19, %s22
      %p28 = scmp.eq.s32.totalorder %s9, 0
      %p29 = por %p27, %p28
      %p30 = scmp.ne.s32.totalorder %s19, %s22
      %p31 = scmp.eq.s32.totalorder %s14, 1
      %p32 = por %p30, %p31
      %p33 = scmp.ne.s32.totalorder %s22, %s23
      %p34 = scmp.eq.s32.totalorder %s14, 0
      %p35 = por %p33, %p34
      %p36 = scmp.ne.s32.totalorder %s22, %s23
      %p37 = scmp.eq.s32.totalorder %s15, 1
      %p38 = por %p36, %p37
      %p40 = scmp.ne.s32.totalorder %s23, %s39
      %p41 = scmp.eq.s32.totalorder %s15, 0
      %p42 = por %p40, %p41
      %s44 = sadd.s32 %s43, 1
      %p47 = scmp.eq.s32.totalorder %s9, 1
      %p48 = scmp.ne.s32.totalorder %s43, %s45
      %p49 = scmp.eq.s32.totalorder %s9, 0
      %p50 = por %p48, %p49
      %p51 = scmp.ne.s32.totalorder %s43, %s45
      %p52 = scmp.eq.s32.totalorder %s14, 1
      %p53 = por %p51, %p52
      %p54 = scmp.ne.s32.totalorder %s45, %s46
      %p55 = scmp.eq.s32.totalorder %s14, 0
      %p56 = por %p54, %p55
      %p57 = scmp.ne.s32.totalorder %s45, %s46
      %p58 = scmp.eq.s32.totalorder %s15, 1
      %p59 = por %p57, %p58
      %p61 = scmp.ne.s32.totalorder %s46, %s60
      %p62 = scmp.eq.s32.totalorder %s15, 0
      %p63 = por %p61, %p62
      %s65 = sadd.s32 %s64, 1
      %p68 = scmp.eq.s32.totalorder %s9, 1
      %p69 = scmp.ne.s32.totalorder %s64, %s66
      %p70 = scmp.eq.s32.totalorder %s9, 0
      %p71 = por %p69, %p70
      %p72 = scmp.ne.s32.totalorder %s64, %s66
      %p73 = scmp.eq.s32.totalorder %s14, 1
      %p74 = por %p72, %p73
      %p75 = scmp.ne.s32.totalorder %s66, %s67
      %p76 = scmp.eq.s32.totalorder %s14, 0
      %p77 = por %p75, %p76
      %p78 = scmp.ne.s32.totalorder %s66, %s67
      %p79 = scmp.eq.s32.totalorder %s15, 1
      %p80 = por %p78, %p79
      %p82 = scmp.ne.s32.totalorder %s67, %s81
      %p83 = scmp.eq.s32.totalorder %s15, 0
      %p84 = por %p82, %p83
      %s85 = ssub.s32 %s9, %s16
      %p86 = scmp.eq.s32.totalorder %s85, 0
      %s88 = sadd.s32 %s87, 1
      %s89 = scalar_select %p86, %s87, %s88
      %p92 = pneg %p86
      %p93 = scmp.eq.s32.totalorder %s9, 1
      %p94 = por %p92, %p93
      %p95 = scmp.ne.s32.totalorder %s87, %s90
      %p96 = scmp.eq.s32.totalorder %s9, 0
      %p97 = por %p95, %p96
      %p98 = scmp.ne.s32.totalorder %s87, %s90
      %p99 = scmp.eq.s32.totalorder %s14, 1
      %p100 = por %p98, %p99
      %p101 = scmp.ne.s32.totalorder %s90, %s91
      %p102 = scmp.eq.s32.totalorder %s14, 0
      %p103 = por %p101, %p102
      %p104 = scmp.ne.s32.totalorder %s90, %s91
      %p105 = scmp.eq.s32.totalorder %s15, 1
      %p106 = por %p104, %p105
      %p108 = scmp.ne.s32.totalorder %s91, %s107
      %p109 = scmp.eq.s32.totalorder %s15, 0
      %p110 = por %p108, %p109
      %p111 = scmp.le.s32.totalorder 1, %s9
      %p112 = scmp.lt.s32.totalorder %s9, 3
      %p113 = pnand %p111, %p112
      %p114 = pneg %p113
      // Predicated region
      $region9: #{forward.4} parent=5 // pred_check
        _
      $region10: #{forward.4} parent=5 // pred_check_branch
        %116 = sbr.rel (%p113) target = $region12
      $region11: #{forward.4} parent=5 // pred_region
        %s117 = ssub.s32 %s9, 1
        // Predicated region
        $region13: #{forward.4} parent=11 // pred_check
          %p118 = pneg %p56
        $region14: #{forward.4} parent=11 // pred_check_branch
          %120 = sbr.rel (%p118) target = $region16
        $region15: #{forward.4} parent=11 // pred_region
          _
        $region16: #{forward.4} parent=11 // pred_fallthru
          _
        // Predicated region
        $region17: #{forward.4} parent=11 // pred_check
          %p121 = pneg %p77
        $region18: #{forward.4} parent=11 // pred_check_branch
          %123 = sbr.rel (%p121) target = $region20
        $region19: #{forward.4} parent=11 // pred_region
          _
        $region20: #{forward.4} parent=11 // pred_fallthru
          _
      $region12: #{forward.4} parent=5 // pred_fallthru
        _
      %p124 = scmp.lt.s32.totalorder %s9, 2
      // Predicated region
      $region21: #{forward.4} parent=5 // pred_check
        %p125 = pneg %p124
      $region22: #{forward.4} parent=5 // pred_check_branch
        %127 = sbr.rel (%p125) target = $region24
      $region23: #{forward.4} parent=5 // pred_region
        // Predicated region
        $region25: #{forward.4} parent=23 // pred_check
          %p128 = pneg %p29
        $region26: #{forward.4} parent=23 // pred_check_branch
          %130 = sbr.rel (%p128) target = $region28
        $region27: #{forward.4} parent=23 // pred_region
          %s131 = sand.u32 %s19, 1
          %s132 = sand.u32 %s19, 1
          %s133 = smul.addr %s132, 480
          %s134 = scalar_lea.vmem [#allocation2], %s133
          %s135 = smul.u32 30, %s9
          %s136 = ssub.s32 57, %s135
          %p137 = scmp.lt.s32.totalorder %s136, 30
          %s138 = scalar_select %p137, %s136, 30
          %s139 = smul.u32 256, %s138
          %p140 = scmp.ne.s32.totalorder 0, %s139
          %s141 = smul.addr %s135, 4
          %s142 = scalar_lea.vmem %s0, %s141
          // Predicated region
          $region29: #{forward.4} parent=27 // pred_check
            %p143 = pneg %p140
          $region30: #{forward.4} parent=27 // pred_check_branch
            %145 = sbr.rel (%p143) target = $region32
          $region31: #{forward.4} parent=27 // pred_region
            // Predicated region
            $region33: #{forward.4} parent=31 // pred_check
              _
            $region34: #{forward.4} parent=31 // pred_check_branch
              %147 = sbr.rel target = $region36
            $region35: #{forward.4} parent=31 // pred_region
              // Predicated region
              $region55: #{forward.4} parent=35 // pred_check
                _
              $region56: #{forward.4} parent=35 // pred_check_branch
                %328 = sbr.rel (0) target = $region58
              $region57: #{forward.4} parent=35 // pred_region
                %s329 = sdiv.u32.pop %s138, 30
                %s330 = srem.u32.pop %s138, 30
                // While loop
                $region59: #{forward.4} parent=57 // loop_pre_header
                  _
                $region60: #{forward.4} parent=57 // loop_header
                  %s332 = sphi 0, %s334
                  %p333 = scmp.ge.s32.totalorder %s332, %s329
                  %s337 = sphi 0, %s342
                  %s338 = sphi %s142, %s345
                  %s339 = sphi %s134, %s346
                $region61: #{forward.4} parent=57 // loop_header_branch
                  %336 = sbr.rel (%p333) target = $region65
                $region62: #{forward.4} parent=57 // loop_body
                  %s340 = sadd.s32 1, %s337
                  %p341 = scmp.ge.s32.totalorder %s340, %s329
                  %s342 = scalar_select %p341, 0, %s340
                  %s343 = smul.u32 %s342, 120
                  %s344 = smul.u32 %s342, 120
                  %s345 = scalar_lea.vmem %s142, %s343
                  %s346 = scalar_lea.vmem %s134, %s344 [#allocation2]
                $region63: #{forward.4} parent=57 // loop_footer
                  %s334 = sadd.s32 %s332, 1
                $region64: #{forward.4} parent=57 // loop_footer_branch
                  %331 = sbr.rel target = $region60
                $region65: #{forward.4} parent=57 // loop_exit
                  _
                %s347 = sdiv.u32.pop %s138, 30
                %s348 = srem.u32.pop %s138, 30
                %s349 = smul.u32 %s347, 30
                %s350 = smul.u32 4, %s349
                %s351 = scalar_lea.vmem %s142, %s350
                %s352 = smul.u32 4, %s349
                %s353 = scalar_lea.vmem %s134, %s352 [#allocation2]
                // While loop
                $region66: #{forward.4} parent=57 // loop_pre_header
                  _
                $region67: #{forward.4} parent=57 // loop_header
                  %s355 = sphi 0, %s357
                  %p356 = scmp.ge.s32.totalorder %s355, %s348
                  %s360 = sphi 0, %s365
                  %s361 = sphi %s351, %s368
                  %s362 = sphi %s353, %s369
                $region68: #{forward.4} parent=57 // loop_header_branch
                  %359 = sbr.rel (%p356) target = $region72
                $region69: #{forward.4} parent=57 // loop_body
                  %s363 = sadd.s32 1, %s360
                  %p364 = scmp.ge.s32.totalorder %s363, %s348
                  %s365 = scalar_select %p364, 0, %s363
                  %s366 = smul.u32 %s365, 4
                  %s367 = smul.u32 %s365, 4
                  %s368 = scalar_lea.vmem %s351, %s366
                  %s369 = scalar_lea.vmem %s353, %s367 [#allocation2]
                $region70: #{forward.4} parent=57 // loop_footer
                  %s357 = sadd.s32 %s355, 1
                $region71: #{forward.4} parent=57 // loop_footer_branch
                  %354 = sbr.rel target = $region67
                $region72: #{forward.4} parent=57 // loop_exit
                  _
                %s371 = sshrl.u32 %s138, 4
                // While loop
                $region73: #{forward.4} parent=57 // loop_pre_header
                  _
                $region74: #{forward.4} parent=57 // loop_header
                  %s373 = sphi 0, %s375
                  %p374 = scmp.ge.s32.totalorder %s373, %s371
                  %s378 = sphi 0, %s511
                  %s379 = sphi %s142, %s514
                  %s380 = sphi %s134, %s515
                $region75: #{forward.4} parent=57 // loop_header_branch
                  %377 = sbr.rel (%p374) target = $region79
                $region76: #{forward.4} parent=57 // loop_body
                  %v381 = vld [vmem:[%s379] sm:$0xf]
                  %382 = vst [vmem:[%s380] sm:$0xf] %v381
                  %v383 = vld [vmem:[%s379 + $0x4] sm:$0xf]
                  %384 = vst [vmem:[%s380 + $0x4] sm:$0xf] %v383
                  %v385 = vld [vmem:[%s379 + $0x8] sm:$0xf]
                  %386 = vst [vmem:[%s380 + $0x8] sm:$0xf] %v385
                  %v387 = vld [vmem:[%s379 + $0xc] sm:$0xf]
                  %388 = vst [vmem:[%s380 + $0xc] sm:$0xf] %v387
                  %v389 = vld [vmem:[%s379 + $0x10] sm:$0xf]
                  %390 = vst [vmem:[%s380 + $0x10] sm:$0xf] %v389
                  %v391 = vld [vmem:[%s379 + $0x14] sm:$0xf]
                  %392 = vst [vmem:[%s380 + $0x14] sm:$0xf] %v391
                  %v393 = vld [vmem:[%s379 + $0x18] sm:$0xf]
                  %394 = vst [vmem:[%s380 + $0x18] sm:$0xf] %v393
                  %v395 = vld [vmem:[%s379 + $0x1c] sm:$0xf]
                  %396 = vst [vmem:[%s380 + $0x1c] sm:$0xf] %v395
                  %v397 = vld [vmem:[%s379 + $0x20] sm:$0xf]
                  %398 = vst [vmem:[%s380 + $0x20] sm:$0xf] %v397
                  %v399 = vld [vmem:[%s379 + $0x24] sm:$0xf]
                  %400 = vst [vmem:[%s380 + $0x24] sm:$0xf] %v399
                  %v401 = vld [vmem:[%s379 + $0x28] sm:$0xf]
                  %402 = vst [vmem:[%s380 + $0x28] sm:$0xf] %v401
                  %v403 = vld [vmem:[%s379 + $0x2c] sm:$0xf]
                  %404 = vst [vmem:[%s380 + $0x2c] sm:$0xf] %v403
                  %v405 = vld [vmem:[%s379 + $0x30] sm:$0xf]
                  %406 = vst [vmem:[%s380 + $0x30] sm:$0xf] %v405
                  %v407 = vld [vmem:[%s379 + $0x34] sm:$0xf]
                  %408 = vst [vmem:[%s380 + $0x34] sm:$0xf] %v407
                  %v409 = vld [vmem:[%s379 + $0x38] sm:$0xf]
                  %410 = vst [vmem:[%s380 + $0x38] sm:$0xf] %v409
                  %v411 = vld [vmem:[%s379 + $0x3c] sm:$0xf]
                  %412 = vst [vmem:[%s380 + $0x3c] sm:$0xf] %v411
                  %v413 = vld [vmem:[%s379 + $0xe4] sm:$0xf]
                  %414 = vst [vmem:[%s380 + $0x78] sm:$0xf] %v413
                  %v415 = vld [vmem:[%s379 + $0xe8] sm:$0xf]
                  %416 = vst [vmem:[%s380 + $0x7c] sm:$0xf] %v415
                  %v417 = vld [vmem:[%s379 + $0xec] sm:$0xf]
                  %418 = vst [vmem:[%s380 + $0x80] sm:$0xf] %v417
                  %v419 = vld [vmem:[%s379 + $0xf0] sm:$0xf]
                  %420 = vst [vmem:[%s380 + $0x84] sm:$0xf] %v419
                  %v421 = vld [vmem:[%s379 + $0xf4] sm:$0xf]
                  %422 = vst [vmem:[%s380 + $0x88] sm:$0xf] %v421
                  %v423 = vld [vmem:[%s379 + $0xf8] sm:$0xf]
                  %424 = vst [vmem:[%s380 + $0x8c] sm:$0xf] %v423
                  %v425 = vld [vmem:[%s379 + $0xfc] sm:$0xf]
                  %426 = vst [vmem:[%s380 + $0x90] sm:$0xf] %v425
                  %v427 = vld [vmem:[%s379 + $0x100] sm:$0xf]
                  %428 = vst [vmem:[%s380 + $0x94] sm:$0xf] %v427
                  %v429 = vld [vmem:[%s379 + $0x104] sm:$0xf]
                  %430 = vst [vmem:[%s380 + $0x98] sm:$0xf] %v429
                  %v431 = vld [vmem:[%s379 + $0x108] sm:$0xf]
                  %432 = vst [vmem:[%s380 + $0x9c] sm:$0xf] %v431
                  %v433 = vld [vmem:[%s379 + $0x10c] sm:$0xf]
                  %434 = vst [vmem:[%s380 + $0xa0] sm:$0xf] %v433
                  %v435 = vld [vmem:[%s379 + $0x110] sm:$0xf]
                  %436 = vst [vmem:[%s380 + $0xa4] sm:$0xf] %v435
                  %v437 = vld [vmem:[%s379 + $0x114] sm:$0xf]
                  %438 = vst [vmem:[%s380 + $0xa8] sm:$0xf] %v437
                  %v439 = vld [vmem:[%s379 + $0x118] sm:$0xf]
                  %440 = vst [vmem:[%s380 + $0xac] sm:$0xf] %v439
                  %v441 = vld [vmem:[%s379 + $0x11c] sm:$0xf]
                  %442 = vst [vmem:[%s380 + $0xb0] sm:$0xf] %v441
                  %v443 = vld [vmem:[%s379 + $0x120] sm:$0xf]
                  %444 = vst [vmem:[%s380 + $0xb4] sm:$0xf] %v443
                  %v445 = vld [vmem:[%s379 + $0x1c8] sm:$0xf]
                  %446 = vst [vmem:[%s380 + $0xf0] sm:$0xf] %v445
                  %v447 = vld [vmem:[%s379 + $0x1cc] sm:$0xf]
                  %448 = vst [vmem:[%s380 + $0xf4] sm:$0xf] %v447
                  %v449 = vld [vmem:[%s379 + $0x1d0] sm:$0xf]
                  %450 = vst [vmem:[%s380 + $0xf8] sm:$0xf] %v449
                  %v451 = vld [vmem:[%s379 + $0x1d4] sm:$0xf]
                  %452 = vst [vmem:[%s380 + $0xfc] sm:$0xf] %v451
                  %v453 = vld [vmem:[%s379 + $0x1d8] sm:$0xf]
                  %454 = vst [vmem:[%s380 + $0x100] sm:$0xf] %v453
                  %v455 = vld [vmem:[%s379 + $0x1dc] sm:$0xf]
                  %456 = vst [vmem:[%s380 + $0x104] sm:$0xf] %v455
                  %v457 = vld [vmem:[%s379 + $0x1e0] sm:$0xf]
                  %458 = vst [vmem:[%s380 + $0x108] sm:$0xf] %v457
                  %v459 = vld [vmem:[%s379 + $0x1e4] sm:$0xf]
                  %460 = vst [vmem:[%s380 + $0x10c] sm:$0xf] %v459
                  %v461 = vld [vmem:[%s379 + $0x1e8] sm:$0xf]
                  %462 = vst [vmem:[%s380 + $0x110] sm:$0xf] %v461
                  %v463 = vld [vmem:[%s379 + $0x1ec] sm:$0xf]
                  %464 = vst [vmem:[%s380 + $0x114] sm:$0xf] %v463
                  %v465 = vld [vmem:[%s379 + $0x1f0] sm:$0xf]
                  %466 = vst [vmem:[%s380 + $0x118] sm:$0xf] %v465
                  %v467 = vld [vmem:[%s379 + $0x1f4] sm:$0xf]
                  %468 = vst [vmem:[%s380 + $0x11c] sm:$0xf] %v467
                  %v469 = vld [vmem:[%s379 + $0x1f8] sm:$0xf]
                  %470 = vst [vmem:[%s380 + $0x120] sm:$0xf] %v469
                  %v471 = vld [vmem:[%s379 + $0x1fc] sm:$0xf]
                  %472 = vst [vmem:[%s380 + $0x124] sm:$0xf] %v471
                  %v473 = vld [vmem:[%s379 + $0x200] sm:$0xf]
                  %474 = vst [vmem:[%s380 + $0x128] sm:$0xf] %v473
                  %v475 = vld [vmem:[%s379 + $0x204] sm:$0xf]
                  %476 = vst [vmem:[%s380 + $0x12c] sm:$0xf] %v475
                  %v477 = vld [vmem:[%s379 + $0x2ac] sm:$0xf]
                  %478 = vst [vmem:[%s380 + $0x168] sm:$0xf] %v477
                  %v479 = vld [vmem:[%s379 + $0x2b0] sm:$0xf]
                  %480 = vst [vmem:[%s380 + $0x16c] sm:$0xf] %v479
                  %v481 = vld [vmem:[%s379 + $0x2b4] sm:$0xf]
                  %482 = vst [vmem:[%s380 + $0x170] sm:$0xf] %v481
                  %v483 = vld [vmem:[%s379 + $0x2b8] sm:$0xf]
                  %484 = vst [vmem:[%s380 + $0x174] sm:$0xf] %v483
                  %v485 = vld [vmem:[%s379 + $0x2bc] sm:$0xf]
                  %486 = vst [vmem:[%s380 + $0x178] sm:$0xf] %v485
                  %v487 = vld [vmem:[%s379 + $0x2c0] sm:$0xf]
                  %488 = vst [vmem:[%s380 + $0x17c] sm:$0xf] %v487
                  %v489 = vld [vmem:[%s379 + $0x2c4] sm:$0xf]
                  %490 = vst [vmem:[%s380 + $0x180] sm:$0xf] %v489
                  %v491 = vld [vmem:[%s379 + $0x2c8] sm:$0xf]
                  %492 = vst [vmem:[%s380 + $0x184] sm:$0xf] %v491
                  %v493 = vld [vmem:[%s379 + $0x2cc] sm:$0xf]
                  %494 = vst [vmem:[%s380 + $0x188] sm:$0xf] %v493
                  %v495 = vld [vmem:[%s379 + $0x2d0] sm:$0xf]
                  %496 = vst [vmem:[%s380 + $0x18c] sm:$0xf] %v495
                  %v497 = vld [vmem:[%s379 + $0x2d4] sm:$0xf]
                  %498 = vst [vmem:[%s380 + $0x190] sm:$0xf] %v497
                  %v499 = vld [vmem:[%s379 + $0x2d8] sm:$0xf]
                  %500 = vst [vmem:[%s380 + $0x194] sm:$0xf] %v499
                  %v501 = vld [vmem:[%s379 + $0x2dc] sm:$0xf]
                  %502 = vst [vmem:[%s380 + $0x198] sm:$0xf] %v501
                  %v503 = vld [vmem:[%s379 + $0x2e0] sm:$0xf]
                  %504 = vst [vmem:[%s380 + $0x19c] sm:$0xf] %v503
                  %v505 = vld [vmem:[%s379 + $0x2e4] sm:$0xf]
                  %506 = vst [vmem:[%s380 + $0x1a0] sm:$0xf] %v505
                  %v507 = vld [vmem:[%s379 + $0x2e8] sm:$0xf]
                  %508 = vst [vmem:[%s380 + $0x1a4] sm:$0xf] %v507
                  %s509 = sadd.s32 1, %s378
                  %p510 = scmp.ge.s32.totalorder %s509, %s371
                  %s511 = scalar_select %p510, 0, %s509
                  %s512 = smul.u32 %s511, 64
                  %s513 = smul.u32 %s511, 64
                  %s514 = scalar_lea.vmem %s142, %s512
                  %s515 = scalar_lea.vmem %s134, %s513 [#allocation2]
                $region77: #{forward.4} parent=57 // loop_footer
                  %s375 = sadd.s32 %s373, 1
                $region78: #{forward.4} parent=57 // loop_footer_branch
                  %372 = sbr.rel target = $region74
                $region79: #{forward.4} parent=57 // loop_exit
                  _
                %s516 = sshrl.u32 %s138, 4
                %s517 = sand.u32 %s138, 15
                %s518 = smul.u32 %s516, 16
                %s519 = smul.u32 4, %s518
                %s520 = scalar_lea.vmem %s142, %s519
                %s521 = smul.u32 4, %s518
                %s522 = scalar_lea.vmem %s134, %s521 [#allocation2]
                // While loop
                $region80: #{forward.4} parent=57 // loop_pre_header
                  _
                $region81: #{forward.4} parent=57 // loop_header
                  %s524 = sphi 0, %s526
                  %p525 = scmp.ge.s32.totalorder %s524, %s517
                  %s529 = sphi 0, %s542
                  %s530 = sphi %s520, %s545
                  %s531 = sphi %s522, %s546
                $region82: #{forward.4} parent=57 // loop_header_branch
                  %528 = sbr.rel (%p525) target = $region86
                $region83: #{forward.4} parent=57 // loop_body
                  %v532 = vld [vmem:[%s530] sm:$0xf]
                  %533 = vst [vmem:[%s531] sm:$0xf] %v532
                  %v534 = vld [vmem:[%s530 + $0xe4] sm:$0xf]
                  %535 = vst [vmem:[%s531 + $0x78] sm:$0xf] %v534
                  %v536 = vld [vmem:[%s530 + $0x1c8] sm:$0xf]
                  %537 = vst [vmem:[%s531 + $0xf0] sm:$0xf] %v536
                  %v538 = vld [vmem:[%s530 + $0x2ac] sm:$0xf]
                  %539 = vst [vmem:[%s531 + $0x168] sm:$0xf] %v538
                  %s540 = sadd.s32 1, %s529
                  %p541 = scmp.ge.s32.totalorder %s540, %s517
                  %s542 = scalar_select %p541, 0, %s540
                  %s543 = smul.u32 %s542, 4
                  %s544 = smul.u32 %s542, 4
                  %s545 = scalar_lea.vmem %s520, %s543
                  %s546 = scalar_lea.vmem %s522, %s544 [#allocation2]
                $region84: #{forward.4} parent=57 // loop_footer
                  %s526 = sadd.s32 %s524, 1
                $region85: #{forward.4} parent=57 // loop_footer_branch
                  %523 = sbr.rel target = $region81
                $region86: #{forward.4} parent=57 // loop_exit
                  _
              $region58: #{forward.4} parent=35 // pred_fallthru
                _
            $region36: #{forward.4} parent=31 // pred_fallthru
              _
            // Predicated region
            $region37: #{forward.4} parent=31 // pred_check
              _
            $region38: #{forward.4} parent=31 // pred_check_branch
              %149 = sbr.rel (0) target = $region40
            $region39: #{forward.4} parent=31 // pred_region
              %s151 = sshrl.u32 %s138, 4
              // While loop
              $region41: #{forward.4} parent=39 // loop_pre_header
                _
              $region42: #{forward.4} parent=39 // loop_header
                %s153 = sphi 0, %s155
                %p154 = scmp.ge.s32.totalorder %s153, %s151
                %s158 = sphi 0, %s291
                %s159 = sphi %s142, %s294
                %s160 = sphi %s134, %s295
              $region43: #{forward.4} parent=39 // loop_header_branch
                %157 = sbr.rel (%p154) target = $region47
              $region44: #{forward.4} parent=39 // loop_body
                %v161 = vld [vmem:[%s159] sm:$0xf]
                %162 = vst [vmem:[%s160] sm:$0xf] %v161
                %v163 = vld [vmem:[%s159 + $0x4] sm:$0xf]
                %164 = vst [vmem:[%s160 + $0x4] sm:$0xf] %v163
                %v165 = vld [vmem:[%s159 + $0x8] sm:$0xf]
                %166 = vst [vmem:[%s160 + $0x8] sm:$0xf] %v165
                %v167 = vld [vmem:[%s159 + $0xc] sm:$0xf]
                %168 = vst [vmem:[%s160 + $0xc] sm:$0xf] %v167
                %v169 = vld [vmem:[%s159 + $0x10] sm:$0xf]
                %170 = vst [vmem:[%s160 + $0x10] sm:$0xf] %v169
                %v171 = vld [vmem:[%s159 + $0x14] sm:$0xf]
                %172 = vst [vmem:[%s160 + $0x14] sm:$0xf] %v171
                %v173 = vld [vmem:[%s159 + $0x18] sm:$0xf]
                %174 = vst [vmem:[%s160 + $0x18] sm:$0xf] %v173
                %v175 = vld [vmem:[%s159 + $0x1c] sm:$0xf]
                %176 = vst [vmem:[%s160 + $0x1c] sm:$0xf] %v175
                %v177 = vld [vmem:[%s159 + $0x20] sm:$0xf]
                %178 = vst [vmem:[%s160 + $0x20] sm:$0xf] %v177
                %v179 = vld [vmem:[%s159 + $0x24] sm:$0xf]
                %180 = vst [vmem:[%s160 + $0x24] sm:$0xf] %v179
                %v181 = vld [vmem:[%s159 + $0x28] sm:$0xf]
                %182 = vst [vmem:[%s160 + $0x28] sm:$0xf] %v181
                %v183 = vld [vmem:[%s159 + $0x2c] sm:$0xf]
                %184 = vst [vmem:[%s160 + $0x2c] sm:$0xf] %v183
                %v185 = vld [vmem:[%s159 + $0x30] sm:$0xf]
                %186 = vst [vmem:[%s160 + $0x30] sm:$0xf] %v185
                %v187 = vld [vmem:[%s159 + $0x34] sm:$0xf]
                %188 = vst [vmem:[%s160 + $0x34] sm:$0xf] %v187
                %v189 = vld [vmem:[%s159 + $0x38] sm:$0xf]
                %190 = vst [vmem:[%s160 + $0x38] sm:$0xf] %v189
                %v191 = vld [vmem:[%s159 + $0x3c] sm:$0xf]
                %192 = vst [vmem:[%s160 + $0x3c] sm:$0xf] %v191
                %v193 = vld [vmem:[%s159 + $0xe4] sm:$0xf]
                %194 = vst [vmem:[%s160 + $0x78] sm:$0xf] %v193
                %v195 = vld [vmem:[%s159 + $0xe8] sm:$0xf]
                %196 = vst [vmem:[%s160 + $0x7c] sm:$0xf] %v195
                %v197 = vld [vmem:[%s159 + $0xec] sm:$0xf]
                %198 = vst [vmem:[%s160 + $0x80] sm:$0xf] %v197
                %v199 = vld [vmem:[%s159 + $0xf0] sm:$0xf]
                %200 = vst [vmem:[%s160 + $0x84] sm:$0xf] %v199
                %v201 = vld [vmem:[%s159 + $0xf4] sm:$0xf]
                %202 = vst [vmem:[%s160 + $0x88] sm:$0xf] %v201
                %v203 = vld [vmem:[%s159 + $0xf8] sm:$0xf]
                %204 = vst [vmem:[%s160 + $0x8c] sm:$0xf] %v203
                %v205 = vld [vmem:[%s159 + $0xfc] sm:$0xf]
                %206 = vst [vmem:[%s160 + $0x90] sm:$0xf] %v205
                %v207 = vld [vmem:[%s159 + $0x100] sm:$0xf]
                %208 = vst [vmem:[%s160 + $0x94] sm:$0xf] %v207
                %v209 = vld [vmem:[%s159 + $0x104] sm:$0xf]
                %210 = vst [vmem:[%s160 + $0x98] sm:$0xf] %v209
                %v211 = vld [vmem:[%s159 + $0x108] sm:$0xf]
                %212 = vst [vmem:[%s160 + $0x9c] sm:$0xf] %v211
                %v213 = vld [vmem:[%s159 + $0x10c] sm:$0xf]
                %214 = vst [vmem:[%s160 + $0xa0] sm:$0xf] %v213
                %v215 = vld [vmem:[%s159 + $0x110] sm:$0xf]
                %216 = vst [vmem:[%s160 + $0xa4] sm:$0xf] %v215
                %v217 = vld [vmem:[%s159 + $0x114] sm:$0xf]
                %218 = vst [vmem:[%s160 + $0xa8] sm:$0xf] %v217
                %v219 = vld [vmem:[%s159 + $0x118] sm:$0xf]
                %220 = vst [vmem:[%s160 + $0xac] sm:$0xf] %v219
                %v221 = vld [vmem:[%s159 + $0x11c] sm:$0xf]
                %222 = vst [vmem:[%s160 + $0xb0] sm:$0xf] %v221
                %v223 = vld [vmem:[%s159 + $0x120] sm:$0xf]
                %224 = vst [vmem:[%s160 + $0xb4] sm:$0xf] %v223
                %v225 = vld [vmem:[%s159 + $0x1c8] sm:$0xf]
                %226 = vst [vmem:[%s160 + $0xf0] sm:$0xf] %v225
                %v227 = vld [vmem:[%s159 + $0x1cc] sm:$0xf]
                %228 = vst [vmem:[%s160 + $0xf4] sm:$0xf] %v227
                %v229 = vld [vmem:[%s159 + $0x1d0] sm:$0xf]
                %230 = vst [vmem:[%s160 + $0xf8] sm:$0xf] %v229
                %v231 = vld [vmem:[%s159 + $0x1d4] sm:$0xf]
                %232 = vst [vmem:[%s160 + $0xfc] sm:$0xf] %v231
                %v233 = vld [vmem:[%s159 + $0x1d8] sm:$0xf]
                %234 = vst [vmem:[%s160 + $0x100] sm:$0xf] %v233
                %v235 = vld [vmem:[%s159 + $0x1dc] sm:$0xf]
                %236 = vst [vmem:[%s160 + $0x104] sm:$0xf] %v235
                %v237 = vld [vmem:[%s159 + $0x1e0] sm:$0xf]
                %238 = vst [vmem:[%s160 + $0x108] sm:$0xf] %v237
                %v239 = vld [vmem:[%s159 + $0x1e4] sm:$0xf]
                %240 = vst [vmem:[%s160 + $0x10c] sm:$0xf] %v239
                %v241 = vld [vmem:[%s159 + $0x1e8] sm:$0xf]
                %242 = vst [vmem:[%s160 + $0x110] sm:$0xf] %v241
                %v243 = vld [vmem:[%s159 + $0x1ec] sm:$0xf]
                %244 = vst [vmem:[%s160 + $0x114] sm:$0xf] %v243
                %v245 = vld [vmem:[%s159 + $0x1f0] sm:$0xf]
                %246 = vst [vmem:[%s160 + $0x118] sm:$0xf] %v245
                %v247 = vld [vmem:[%s159 + $0x1f4] sm:$0xf]
                %248 = vst [vmem:[%s160 + $0x11c] sm:$0xf] %v247
                %v249 = vld [vmem:[%s159 + $0x1f8] sm:$0xf]
                %250 = vst [vmem:[%s160 + $0x120] sm:$0xf] %v249
                %v251 = vld [vmem:[%s159 + $0x1fc] sm:$0xf]
                %252 = vst [vmem:[%s160 + $0x124] sm:$0xf] %v251
                %v253 = vld [vmem:[%s159 + $0x200] sm:$0xf]
                %254 = vst [vmem:[%s160 + $0x128] sm:$0xf] %v253
                %v255 = vld [vmem:[%s159 + $0x204] sm:$0xf]
                %256 = vst [vmem:[%s160 + $0x12c] sm:$0xf] %v255
                %v257 = vld [vmem:[%s159 + $0x2ac] sm:$0xf]
                %258 = vst [vmem:[%s160 + $0x168] sm:$0xf] %v257
                %v259 = vld [vmem:[%s159 + $0x2b0] sm:$0xf]
                %260 = vst [vmem:[%s160 + $0x16c] sm:$0xf] %v259
                %v261 = vld [vmem:[%s159 + $0x2b4] sm:$0xf]
                %262 = vst [vmem:[%s160 + $0x170] sm:$0xf] %v261
                %v263 = vld [vmem:[%s159 + $0x2b8] sm:$0xf]
                %264 = vst [vmem:[%s160 + $0x174] sm:$0xf] %v263
                %v265 = vld [vmem:[%s159 + $0x2bc] sm:$0xf]
                %266 = vst [vmem:[%s160 + $0x178] sm:$0xf] %v265
                %v267 = vld [vmem:[%s159 + $0x2c0] sm:$0xf]
                %268 = vst [vmem:[%s160 + $0x17c] sm:$0xf] %v267
                %v269 = vld [vmem:[%s159 + $0x2c4] sm:$0xf]
                %270 = vst [vmem:[%s160 + $0x180] sm:$0xf] %v269
                %v271 = vld [vmem:[%s159 + $0x2c8] sm:$0xf]
                %272 = vst [vmem:[%s160 + $0x184] sm:$0xf] %v271
                %v273 = vld [vmem:[%s159 + $0x2cc] sm:$0xf]
                %274 = vst [vmem:[%s160 + $0x188] sm:$0xf] %v273
                %v275 = vld [vmem:[%s159 + $0x2d0] sm:$0xf]
                %276 = vst [vmem:[%s160 + $0x18c] sm:$0xf] %v275
                %v277 = vld [vmem:[%s159 + $0x2d4] sm:$0xf]
                %278 = vst [vmem:[%s160 + $0x190] sm:$0xf] %v277
                %v279 = vld [vmem:[%s159 + $0x2d8] sm:$0xf]
                %280 = vst [vmem:[%s160 + $0x194] sm:$0xf] %v279
                %v281 = vld [vmem:[%s159 + $0x2dc] sm:$0xf]
                %282 = vst [vmem:[%s160 + $0x198] sm:$0xf] %v281
                %v283 = vld [vmem:[%s159 + $0x2e0] sm:$0xf]
                %284 = vst [vmem:[%s160 + $0x19c] sm:$0xf] %v283
                %v285 = vld [vmem:[%s159 + $0x2e4] sm:$0xf]
                %286 = vst [vmem:[%s160 + $0x1a0] sm:$0xf] %v285
                %v287 = vld [vmem:[%s159 + $0x2e8] sm:$0xf]
                %288 = vst [vmem:[%s160 + $0x1a4] sm:$0xf] %v287
                %s289 = sadd.s32 1, %s158
                %p290 = scmp.ge.s32.totalorder %s289, %s151
                %s291 = scalar_select %p290, 0, %s289
                %s292 = smul.u32 %s291, 64
                %s293 = smul.u32 %s291, 64
                %s294 = scalar_lea.vmem %s142, %s292
                %s295 = scalar_lea.vmem %s134, %s293 [#allocation2]
              $region45: #{forward.4} parent=39 // loop_footer
                %s155 = sadd.s32 %s153, 1
              $region46: #{forward.4} parent=39 // loop_footer_branch
                %152 = sbr.rel target = $region42
              $region47: #{forward.4} parent=39 // loop_exit
                _
              %s296 = sshrl.u32 %s138, 4
              %s297 = sand.u32 %s138, 15
              %s298 = smul.u32 %s296, 16
              %s299 = smul.u32 4, %s298
              %s300 = scalar_lea.vmem %s142, %s299
              %s301 = smul.u32 4, %s298
              %s302 = scalar_lea.vmem %s134, %s301 [#allocation2]
              // While loop
              $region48: #{forward.4} parent=39 // loop_pre_header
                _
              $region49: #{forward.4} parent=39 // loop_header
                %s304 = sphi 0, %s306
                %p305 = scmp.ge.s32.totalorder %s304, %s297
                %s309 = sphi 0, %s322
                %s310 = sphi %s300, %s325
                %s311 = sphi %s302, %s326
              $region50: #{forward.4} parent=39 // loop_header_branch
                %308 = sbr.rel (%p305) target = $region54
              $region51: #{forward.4} parent=39 // loop_body
                %v312 = vld [vmem:[%s310] sm:$0xf]
                %313 = vst [vmem:[%s311] sm:$0xf] %v312
                %v314 = vld [vmem:[%s310 + $0xe4] sm:$0xf]
                %315 = vst [vmem:[%s311 + $0x78] sm:$0xf] %v314
                %v316 = vld [vmem:[%s310 + $0x1c8] sm:$0xf]
                %317 = vst [vmem:[%s311 + $0xf0] sm:$0xf] %v316
                %v318 = vld [vmem:[%s310 + $0x2ac] sm:$0xf]
                %319 = vst [vmem:[%s311 + $0x168] sm:$0xf] %v318
                %s320 = sadd.s32 1, %s309
                %p321 = scmp.ge.s32.totalorder %s320, %s297
                %s322 = scalar_select %p321, 0, %s320
                %s323 = smul.u32 %s322, 4
                %s324 = smul.u32 %s322, 4
                %s325 = scalar_lea.vmem %s300, %s323
                %s326 = scalar_lea.vmem %s302, %s324 [#allocation2]
              $region52: #{forward.4} parent=39 // loop_footer
                %s306 = sadd.s32 %s304, 1
              $region53: #{forward.4} parent=39 // loop_footer_branch
                %303 = sbr.rel target = $region49
              $region54: #{forward.4} parent=39 // loop_exit
                _
            $region40: #{forward.4} parent=31 // pred_fallthru
              _
          $region32: #{forward.4} parent=27 // pred_fallthru
            _
          %547 = vnop
        $region28: #{forward.4} parent=23 // pred_fallthru
          _
      $region24: #{forward.4} parent=5 // pred_fallthru
        _
      %p548 = scmp.le.s32.totalorder 1, %s9
      %p549 = scmp.lt.s32.totalorder %s9, 3
      %p550 = pnand %p548, %p549
      %p551 = pneg %p550
      // Predicated region
      $region87: #{forward.4} parent=5 // pred_check
        _
      $region88: #{forward.4} parent=5 // pred_check_branch
        %553 = sbr.rel (%p550) target = $region90
      $region89: #{forward.4} parent=5 // pred_region
        %s554 = ssub.s32 %s9, 1
        %s555 = sand.u32 %s22, 1
        %s556 = sand.u32 %s22, 1
        %s557 = smul.addr %s556, 480
        %s558 = scalar_lea.vmem [#allocation2], %s557
        // Predicated region
        $region91: #{forward.4} parent=89 // pred_check
          %p559 = pneg %p35
        $region92: #{forward.4} parent=89 // pred_check_branch
          %561 = sbr.rel (%p559) target = $region94
        $region93: #{forward.4} parent=89 // pred_region
          _
        $region94: #{forward.4} parent=89 // pred_fallthru
          _
        %s562 = sand.u32 %s22, 1
        %s563 = sand.u32 %s22, 1
        %s564 = smul.addr %s563, 480
        %s565 = scalar_lea.vmem [#allocation2], %s564
        %p566 = pneg %p35
        %p567 = pneg %p32
        %p568 = pneg %p56
        %p569 = pneg %p53
        %p570 = pneg %p77
        %p571 = pneg %p74
        %p572 = pneg %p103
        %p573 = pneg %p100
        %s574 = sand.u32 %s90, 1
        %s575 = sand.u32 %s90, 1
        %s576 = smul.addr %s575, 120
        %s577 = scalar_lea.vmem [#allocation3], %s576
        %s578 = smul.u32 30, %s14
        %s579 = ssub.s32 57, %s578
        %p580 = scmp.lt.s32.totalorder %s579, 30
        %s581 = scalar_select %p580, %s579, 30
        %s582 = smul.u32 256, %s581
        %s583 = smul.u32 30, %s14
        %s584 = ssub.s32 57, %s583
        %p585 = scmp.lt.s32.totalorder %s584, 30
        %s586 = scalar_select %p585, %s584, 30
        %s587 = smul.u32 64, %s586
        %v589 = vld [vmem:[%s1] sm:$0xf]
        %v590 = vld [vmem:[%s1 + $0x4] sm:$0x3]
        %v591 = vld [vmem:[%s558] sm:$0xf]
        %v592 = vld [vmem:[%s558 + $0x4] sm:$0xf]
        %v593 = vld [vmem:[%s558 + $0x8] sm:$0xf]
        %v594 = vld [vmem:[%s558 + $0xc] sm:$0xf]
        %v595 = vld [vmem:[%s558 + $0x10] sm:$0xf]
        %v596 = vld [vmem:[%s558 + $0x14] sm:$0xf]
        %v597 = vld [vmem:[%s558 + $0x18] sm:$0xf]
        %v598 = vld [vmem:[%s558 + $0x1c] sm:$0xf]
        %v599 = vld [vmem:[%s558 + $0x20] sm:$0xf]
        %v600 = vld [vmem:[%s558 + $0x24] sm:$0xf]
        %v601 = vld [vmem:[%s558 + $0x28] sm:$0xf]
        %v602 = vld [vmem:[%s558 + $0x2c] sm:$0xf]
        %v603 = vld [vmem:[%s558 + $0x30] sm:$0xf]
        %v604 = vld [vmem:[%s558 + $0x34] sm:$0xf]
        %v605 = vld [vmem:[%s558 + $0x38] sm:$0xf]
        %v606 = vld [vmem:[%s558 + $0x3c] sm:$0xf]
        %v607 = vld [vmem:[%s558 + $0x40] sm:$0xf]
        %v608 = vld [vmem:[%s558 + $0x44] sm:$0xf]
        %v609 = vld [vmem:[%s558 + $0x48] sm:$0xf]
        %v610 = vld [vmem:[%s558 + $0x4c] sm:$0xf]
        %v611 = vld [vmem:[%s558 + $0x50] sm:$0xf]
        %v612 = vld [vmem:[%s558 + $0x54] sm:$0xf]
        %v613 = vld [vmem:[%s558 + $0x58] sm:$0xf]
        %v614 = vld [vmem:[%s558 + $0x5c] sm:$0xf]
        %v615 = vld [vmem:[%s558 + $0x60] sm:$0xf]
        %v616 = vld [vmem:[%s558 + $0x64] sm:$0xf]
        %v617 = vld [vmem:[%s558 + $0x68] sm:$0xf]
        %v618 = vld [vmem:[%s558 + $0x6c] sm:$0xf]
        %v619 = vld [vmem:[%s558 + $0x70] sm:$0xf]
        %v620 = vld [vmem:[%s558 + $0x74] sm:$0xf]
        %s621 = scalar_lea.vmem %s558, 120 [#allocation2]
        %v622 = vld [vmem:[%s621] sm:$0xf]
        %v623 = vld [vmem:[%s621 + $0x4] sm:$0xf]
        %v624 = vld [vmem:[%s621 + $0x8] sm:$0xf]
        %v625 = vld [vmem:[%s621 + $0xc] sm:$0xf]
        %v626 = vld [vmem:[%s621 + $0x10] sm:$0xf]
        %v627 = vld [vmem:[%s621 + $0x14] sm:$0xf]
        %v628 = vld [vmem:[%s621 + $0x18] sm:$0xf]
        %v629 = vld [vmem:[%s621 + $0x1c] sm:$0xf]
        %v630 = vld [vmem:[%s621 + $0x20] sm:$0xf]
        %v631 = vld [vmem:[%s621 + $0x24] sm:$0xf]
        %v632 = vld [vmem:[%s621 + $0x28] sm:$0xf]
        %v633 = vld [vmem:[%s621 + $0x2c] sm:$0xf]
        %v634 = vld [vmem:[%s621 + $0x30] sm:$0xf]
        %v635 = vld [vmem:[%s621 + $0x34] sm:$0xf]
        %v636 = vld [vmem:[%s621 + $0x38] sm:$0xf]
        %v637 = vld [vmem:[%s621 + $0x3c] sm:$0xf]
        %v638 = vld [vmem:[%s621 + $0x40] sm:$0xf]
        %v639 = vld [vmem:[%s621 + $0x44] sm:$0xf]
        %v640 = vld [vmem:[%s621 + $0x48] sm:$0xf]
        %v641 = vld [vmem:[%s621 + $0x4c] sm:$0xf]
        %v642 = vld [vmem:[%s621 + $0x50] sm:$0xf]
        %v643 = vld [vmem:[%s621 + $0x54] sm:$0xf]
        %v644 = vld [vmem:[%s621 + $0x58] sm:$0xf]
        %v645 = vld [vmem:[%s621 + $0x5c] sm:$0xf]
        %v646 = vld [vmem:[%s621 + $0x60] sm:$0xf]
        %v647 = vld [vmem:[%s621 + $0x64] sm:$0xf]
        %v648 = vld [vmem:[%s621 + $0x68] sm:$0xf]
        %v649 = vld [vmem:[%s621 + $0x6c] sm:$0xf]
        %v650 = vld [vmem:[%s621 + $0x70] sm:$0xf]
        %v651 = vld [vmem:[%s621 + $0x74] sm:$0xf]
        %s652 = scalar_lea.vmem %s558, 240 [#allocation2]
        %v653 = vld [vmem:[%s652] sm:$0xf]
        %v654 = vld [vmem:[%s652 + $0x4] sm:$0xf]
        %v655 = vld [vmem:[%s652 + $0x8] sm:$0xf]
        %v656 = vld [vmem:[%s652 + $0xc] sm:$0xf]
        %v657 = vld [vmem:[%s652 + $0x10] sm:$0xf]
        %v658 = vld [vmem:[%s652 + $0x14] sm:$0xf]
        %v659 = vld [vmem:[%s652 + $0x18] sm:$0xf]
        %v660 = vld [vmem:[%s652 + $0x1c] sm:$0xf]
        %v661 = vld [vmem:[%s652 + $0x20] sm:$0xf]
        %v662 = vld [vmem:[%s652 + $0x24] sm:$0xf]
        %v663 = vld [vmem:[%s652 + $0x28] sm:$0xf]
        %v664 = vld [vmem:[%s652 + $0x2c] sm:$0xf]
        %v665 = vld [vmem:[%s652 + $0x30] sm:$0xf]
        %v666 = vld [vmem:[%s652 + $0x34] sm:$0xf]
        %v667 = vld [vmem:[%s652 + $0x38] sm:$0xf]
        %v668 = vld [vmem:[%s652 + $0x3c] sm:$0xf]
        %v669 = vld [vmem:[%s652 + $0x40] sm:$0xf]
        %v670 = vld [vmem:[%s652 + $0x44] sm:$0xf]
        %v671 = vld [vmem:[%s652 + $0x48] sm:$0xf]
        %v672 = vld [vmem:[%s652 + $0x4c] sm:$0xf]
        %v673 = vld [vmem:[%s652 + $0x50] sm:$0xf]
        %v674 = vld [vmem:[%s652 + $0x54] sm:$0xf]
        %v675 = vld [vmem:[%s652 + $0x58] sm:$0xf]
        %v676 = vld [vmem:[%s652 + $0x5c] sm:$0xf]
        %v677 = vld [vmem:[%s652 + $0x60] sm:$0xf]
        %v678 = vld [vmem:[%s652 + $0x64] sm:$0xf]
        %v679 = vld [vmem:[%s652 + $0x68] sm:$0xf]
        %v680 = vld [vmem:[%s652 + $0x6c] sm:$0xf]
        %v681 = vld [vmem:[%s652 + $0x70] sm:$0xf]
        %v682 = vld [vmem:[%s652 + $0x74] sm:$0xf]
        %s683 = scalar_lea.vmem %s558, 360 [#allocation2]
        %v684 = vld [vmem:[%s683] sm:$0xf]
        %v685 = vld [vmem:[%s683 + $0x4] sm:$0xf]
        %v686 = vld [vmem:[%s683 + $0x8] sm:$0xf]
        %v687 = vld [vmem:[%s683 + $0xc] sm:$0xf]
        %v688 = vld [vmem:[%s683 + $0x10] sm:$0xf]
        %v689 = vld [vmem:[%s683 + $0x14] sm:$0xf]
        %v690 = vld [vmem:[%s683 + $0x18] sm:$0xf]
        %v691 = vld [vmem:[%s683 + $0x1c] sm:$0xf]
        %v692 = vld [vmem:[%s683 + $0x20] sm:$0xf]
        %v693 = vld [vmem:[%s683 + $0x24] sm:$0xf]
        %v694 = vld [vmem:[%s683 + $0x28] sm:$0xf]
        %v695 = vld [vmem:[%s683 + $0x2c] sm:$0xf]
        %v696 = vld [vmem:[%s683 + $0x30] sm:$0xf]
        %v697 = vld [vmem:[%s683 + $0x34] sm:$0xf]
        %v698 = vld [vmem:[%s683 + $0x38] sm:$0xf]
        %v699 = vld [vmem:[%s683 + $0x3c] sm:$0xf]
        %v700 = vld [vmem:[%s683 + $0x40] sm:$0xf]
        %v701 = vld [vmem:[%s683 + $0x44] sm:$0xf]
        %v702 = vld [vmem:[%s683 + $0x48] sm:$0xf]
        %v703 = vld [vmem:[%s683 + $0x4c] sm:$0xf]
        %v704 = vld [vmem:[%s683 + $0x50] sm:$0xf]
        %v705 = vld [vmem:[%s683 + $0x54] sm:$0xf]
        %v706 = vld [vmem:[%s683 + $0x58] sm:$0xf]
        %v707 = vld [vmem:[%s683 + $0x5c] sm:$0xf]
        %v708 = vld [vmem:[%s683 + $0x60] sm:$0xf]
        %v709 = vld [vmem:[%s683 + $0x64] sm:$0xf]
        %v710 = vld [vmem:[%s683 + $0x68] sm:$0xf]
        %v711 = vld [vmem:[%s683 + $0x6c] sm:$0xf]
        %v712 = vld [vmem:[%s683 + $0x70] sm:$0xf]
        %v713 = vld [vmem:[%s683 + $0x74] sm:$0xf]
        %v744 = vunpack.c.l.b16 %v591
        %v745 = vunpack.c.l.b16 %v592
        %v746 = vunpack.c.l.b16 %v593
        %v747 = vunpack.c.l.b16 %v594
        %v748 = vunpack.c.l.b16 %v595
        %v749 = vunpack.c.l.b16 %v596
        %v750 = vunpack.c.l.b16 %v597
        %v751 = vunpack.c.l.b16 %v598
        %v752 = vunpack.c.l.b16 %v599
        %v753 = vunpack.c.l.b16 %v600
        %v754 = vunpack.c.l.b16 %v601
        %v755 = vunpack.c.l.b16 %v602
        %v756 = vunpack.c.l.b16 %v603
        %v757 = vunpack.c.l.b16 %v604
        %v758 = vunpack.c.l.b16 %v605
        %v759 = vunpack.c.l.b16 %v606
        %v760 = vunpack.c.l.b16 %v607
        %v761 = vunpack.c.l.b16 %v608
        %v762 = vunpack.c.l.b16 %v609
        %v763 = vunpack.c.l.b16 %v610
        %v764 = vunpack.c.l.b16 %v611
        %v765 = vunpack.c.l.b16 %v612
        %v766 = vunpack.c.l.b16 %v613
        %v767 = vunpack.c.l.b16 %v614
        %v768 = vunpack.c.l.b16 %v615
        %v769 = vunpack.c.l.b16 %v616
        %v770 = vunpack.c.l.b16 %v617
        %v771 = vunpack.c.l.b16 %v618
        %v772 = vunpack.c.l.b16 %v619
        %v773 = vunpack.c.l.b16 %v620
        %v774 = vpack.c.b16 %v745, %v744
        %v775 = vpack.c.b16 %v747, %v746
        %v776 = vpack.c.b16 %v749, %v748
        %v777 = vpack.c.b16 %v751, %v750
        %v778 = vpack.c.b16 %v753, %v752
        %v779 = vpack.c.b16 %v755, %v754
        %v780 = vpack.c.b16 %v757, %v756
        %v781 = vpack.c.b16 %v759, %v758
        %v782 = vpack.c.b16 %v761, %v760
        %v783 = vpack.c.b16 %v763, %v762
        %v784 = vpack.c.b16 %v765, %v764
        %v785 = vpack.c.b16 %v767, %v766
        %v786 = vpack.c.b16 %v769, %v768
        %v787 = vpack.c.b16 %v771, %v770
        %v788 = vpack.c.b16 %v773, %v772
        %v819 = vunpack.c.l.b16 %v622
        %v820 = vunpack.c.l.b16 %v623
        %v821 = vunpack.c.l.b16 %v624
        %v822 = vunpack.c.l.b16 %v625
        %v823 = vunpack.c.l.b16 %v626
        %v824 = vunpack.c.l.b16 %v627
        %v825 = vunpack.c.l.b16 %v628
        %v826 = vunpack.c.l.b16 %v629
        %v827 = vunpack.c.l.b16 %v630
        %v828 = vunpack.c.l.b16 %v631
        %v829 = vunpack.c.l.b16 %v632
        %v830 = vunpack.c.l.b16 %v633
        %v831 = vunpack.c.l.b16 %v634
        %v832 = vunpack.c.l.b16 %v635
        %v833 = vunpack.c.l.b16 %v636
        %v834 = vunpack.c.l.b16 %v637
        %v835 = vunpack.c.l.b16 %v638
        %v836 = vunpack.c.l.b16 %v639
        %v837 = vunpack.c.l.b16 %v640
        %v838 = vunpack.c.l.b16 %v641
        %v839 = vunpack.c.l.b16 %v642
        %v840 = vunpack.c.l.b16 %v643
        %v841 = vunpack.c.l.b16 %v644
        %v842 = vunpack.c.l.b16 %v645
        %v843 = vunpack.c.l.b16 %v646
        %v844 = vunpack.c.l.b16 %v647
        %v845 = vunpack.c.l.b16 %v648
        %v846 = vunpack.c.l.b16 %v649
        %v847 = vunpack.c.l.b16 %v650
        %v848 = vunpack.c.l.b16 %v651
        %v849 = vpack.c.b16 %v820, %v819
        %v850 = vpack.c.b16 %v822, %v821
        %v851 = vpack.c.b16 %v824, %v823
        %v852 = vpack.c.b16 %v826, %v825
        %v853 = vpack.c.b16 %v828, %v827
        %v854 = vpack.c.b16 %v830, %v829
        %v855 = vpack.c.b16 %v832, %v831
        %v856 = vpack.c.b16 %v834, %v833
        %v857 = vpack.c.b16 %v836, %v835
        %v858 = vpack.c.b16 %v838, %v837
        %v859 = vpack.c.b16 %v840, %v839
        %v860 = vpack.c.b16 %v842, %v841
        %v861 = vpack.c.b16 %v844, %v843
        %v862 = vpack.c.b16 %v846, %v845
        %v863 = vpack.c.b16 %v848, %v847
        %v894 = vunpack.c.l.b16 %v653
        %v895 = vunpack.c.l.b16 %v654
        %v896 = vunpack.c.l.b16 %v655
        %v897 = vunpack.c.l.b16 %v656
        %v898 = vunpack.c.l.b16 %v657
        %v899 = vunpack.c.l.b16 %v658
        %v900 = vunpack.c.l.b16 %v659
        %v901 = vunpack.c.l.b16 %v660
        %v902 = vunpack.c.l.b16 %v661
        %v903 = vunpack.c.l.b16 %v662
        %v904 = vunpack.c.l.b16 %v663
        %v905 = vunpack.c.l.b16 %v664
        %v906 = vunpack.c.l.b16 %v665
        %v907 = vunpack.c.l.b16 %v666
        %v908 = vunpack.c.l.b16 %v667
        %v909 = vunpack.c.l.b16 %v668
        %v910 = vunpack.c.l.b16 %v669
        %v911 = vunpack.c.l.b16 %v670
        %v912 = vunpack.c.l.b16 %v671
        %v913 = vunpack.c.l.b16 %v672
        %v914 = vunpack.c.l.b16 %v673
        %v915 = vunpack.c.l.b16 %v674
        %v916 = vunpack.c.l.b16 %v675
        %v917 = vunpack.c.l.b16 %v676
        %v918 = vunpack.c.l.b16 %v677
        %v919 = vunpack.c.l.b16 %v678
        %v920 = vunpack.c.l.b16 %v679
        %v921 = vunpack.c.l.b16 %v680
        %v922 = vunpack.c.l.b16 %v681
        %v923 = vunpack.c.l.b16 %v682
        %v924 = vpack.c.b16 %v895, %v894
        %v925 = vpack.c.b16 %v897, %v896
        %v926 = vpack.c.b16 %v899, %v898
        %v927 = vpack.c.b16 %v901, %v900
        %v928 = vpack.c.b16 %v903, %v902
        %v929 = vpack.c.b16 %v905, %v904
        %v930 = vpack.c.b16 %v907, %v906
        %v931 = vpack.c.b16 %v909, %v908
        %v932 = vpack.c.b16 %v911, %v910
        %v933 = vpack.c.b16 %v913, %v912
        %v934 = vpack.c.b16 %v915, %v914
        %v935 = vpack.c.b16 %v917, %v916
        %v936 = vpack.c.b16 %v919, %v918
        %v937 = vpack.c.b16 %v921, %v920
        %v938 = vpack.c.b16 %v923, %v922
        %v969 = vunpack.c.l.b16 %v684
        %v970 = vunpack.c.l.b16 %v685
        %v971 = vunpack.c.l.b16 %v686
        %v972 = vunpack.c.l.b16 %v687
        %v973 = vunpack.c.l.b16 %v688
        %v974 = vunpack.c.l.b16 %v689
        %v975 = vunpack.c.l.b16 %v690
        %v976 = vunpack.c.l.b16 %v691
        %v977 = vunpack.c.l.b16 %v692
        %v978 = vunpack.c.l.b16 %v693
        %v979 = vunpack.c.l.b16 %v694
        %v980 = vunpack.c.l.b16 %v695
        %v981 = vunpack.c.l.b16 %v696
        %v982 = vunpack.c.l.b16 %v697
        %v983 = vunpack.c.l.b16 %v698
        %v984 = vunpack.c.l.b16 %v699
        %v985 = vunpack.c.l.b16 %v700
        %v986 = vunpack.c.l.b16 %v701
        %v987 = vunpack.c.l.b16 %v702
        %v988 = vunpack.c.l.b16 %v703
        %v989 = vunpack.c.l.b16 %v704
        %v990 = vunpack.c.l.b16 %v705
        %v991 = vunpack.c.l.b16 %v706
        %v992 = vunpack.c.l.b16 %v707
        %v993 = vunpack.c.l.b16 %v708
        %v994 = vunpack.c.l.b16 %v709
        %v995 = vunpack.c.l.b16 %v710
        %v996 = vunpack.c.l.b16 %v711
        %v997 = vunpack.c.l.b16 %v712
        %v998 = vunpack.c.l.b16 %v713
        %v999 = vpack.c.b16 %v970, %v969
        %v1000 = vpack.c.b16 %v972, %v971
        %v1001 = vpack.c.b16 %v974, %v973
        %v1002 = vpack.c.b16 %v976, %v975
        %v1003 = vpack.c.b16 %v978, %v977
        %v1004 = vpack.c.b16 %v980, %v979
        %v1005 = vpack.c.b16 %v982, %v981
        %v1006 = vpack.c.b16 %v984, %v983
        %v1007 = vpack.c.b16 %v986, %v985
        %v1008 = vpack.c.b16 %v988, %v987
        %v1009 = vpack.c.b16 %v990, %v989
        %v1010 = vpack.c.b16 %v992, %v991
        %v1011 = vpack.c.b16 %v994, %v993
        %v1012 = vpack.c.b16 %v996, %v995
        %v1013 = vpack.c.b16 %v998, %v997
        %v1016 = vunpack.c.l.b16 %v589
        %v1017 = vunpack.c.l.b16 %v590
        %v1018 = vpack.c.b16 %v1017, %v1016
        %vm1019 = vcmask 97280
        %v1021 = vsel %vm1019, %v774, 0
        %v1024 = vsel %vm1019, %v775, 0
        %v1027 = vsel %vm1019, %v776, 0
        %v1030 = vsel %vm1019, %v777, 0
        %v1033 = vsel %vm1019, %v778, 0
        %v1036 = vsel %vm1019, %v779, 0
        %v1039 = vsel %vm1019, %v780, 0
        %v1042 = vsel %vm1019, %v781, 0
        %v1045 = vsel %vm1019, %v782, 0
        %v1048 = vsel %vm1019, %v783, 0
        %v1051 = vsel %vm1019, %v784, 0
        %v1054 = vsel %vm1019, %v785, 0
        %v1057 = vsel %vm1019, %v786, 0
        %v1060 = vsel %vm1019, %v787, 0
        %v1063 = vsel %vm1019, %v788, 0
        %v1066 = vsel %vm1019, %v849, 0
        %v1069 = vsel %vm1019, %v850, 0
        %v1072 = vsel %vm1019, %v851, 0
        %v1075 = vsel %vm1019, %v852, 0
        %v1078 = vsel %vm1019, %v853, 0
        %v1081 = vsel %vm1019, %v854, 0
        %v1084 = vsel %vm1019, %v855, 0
        %v1087 = vsel %vm1019, %v856, 0
        %v1090 = vsel %vm1019, %v857, 0
        %v1093 = vsel %vm1019, %v858, 0
        %v1096 = vsel %vm1019, %v859, 0
        %v1099 = vsel %vm1019, %v860, 0
        %v1102 = vsel %vm1019, %v861, 0
        %v1105 = vsel %vm1019, %v862, 0
        %v1108 = vsel %vm1019, %v863, 0
        %v1111 = vsel %vm1019, %v924, 0
        %v1114 = vsel %vm1019, %v925, 0
        %v1117 = vsel %vm1019, %v926, 0
        %v1120 = vsel %vm1019, %v927, 0
        %v1123 = vsel %vm1019, %v928, 0
        %v1126 = vsel %vm1019, %v929, 0
        %v1129 = vsel %vm1019, %v930, 0
        %v1132 = vsel %vm1019, %v931, 0
        %v1135 = vsel %vm1019, %v932, 0
        %v1138 = vsel %vm1019, %v933, 0
        %v1141 = vsel %vm1019, %v934, 0
        %v1144 = vsel %vm1019, %v935, 0
        %v1147 = vsel %vm1019, %v936, 0
        %v1150 = vsel %vm1019, %v937, 0
        %v1153 = vsel %vm1019, %v938, 0
        %v1156 = vsel %vm1019, %v999, 0
        %v1159 = vsel %vm1019, %v1000, 0
        %v1162 = vsel %vm1019, %v1001, 0
        %v1165 = vsel %vm1019, %v1002, 0
        %v1168 = vsel %vm1019, %v1003, 0
        %v1171 = vsel %vm1019, %v1004, 0
        %v1174 = vsel %vm1019, %v1005, 0
        %v1177 = vsel %vm1019, %v1006, 0
        %v1180 = vsel %vm1019, %v1007, 0
        %v1183 = vsel %vm1019, %v1008, 0
        %v1186 = vsel %vm1019, %v1009, 0
        %v1189 = vsel %vm1019, %v1010, 0
        %v1192 = vsel %vm1019, %v1011, 0
        %v1195 = vsel %vm1019, %v1012, 0
        %v1198 = vsel %vm1019, %v1013, 0
        %vm1200 = vcmask 1045504
        %v1202 = vsel %vm1200, %v1018, 0
        %1204 = vmatprep.subr.bf16.mxu0 0
        %1205 = vmatpush1.bf16.msra.mxu0 %v1202
        %1206 = vmatprep.subr.bf16.mxu0 0
        %1207 = vmatpush1.bf16.msra.mxu0 0
        %1208 = vmatprep.subr.bf16.mxu0 0
        %1209 = vmatpush1.bf16.msra.mxu0 0
        %1210 = vmatprep.subr.bf16.mxu0 0
        %1211 = vmatpush1.bf16.msra.mxu0 0
        %1212 = vmatprep.subr.bf16.mxu0 0
        %1213 = vmatpush1.bf16.msra.mxu0 0
        %1214 = vmatprep.subr.bf16.mxu0 0
        %1215 = vmatpush1.bf16.msra.mxu0 0
        %1216 = vmatprep.subr.bf16.mxu0 0
        %1217 = vmatpush1.bf16.msra.mxu0 0
        %1218 = vmatprep.subr.bf16.mxu0 0
        %1219 = vmatpush1.bf16.msra.mxu0 0
        %1220 = vmatprep.subr.bf16.mxu0 0
        %1221 = vmatpush1.bf16.msra.mxu0 0
        %1222 = vmatprep.subr.bf16.mxu0 0
        %1223 = vmatpush1.bf16.msra.mxu0 0
        %1224 = vmatprep.subr.bf16.mxu0 0
        %1225 = vmatpush1.bf16.msra.mxu0 0
        %1226 = vmatprep.subr.bf16.mxu0 0
        %1227 = vmatpush1.bf16.msra.mxu0 0
        %1228 = vmatprep.subr.bf16.mxu0 0
        %1229 = vmatpush1.bf16.msra.mxu0 0
        %1230 = vmatprep.subr.bf16.mxu0 0
        %1231 = vmatpush1.bf16.msra.mxu0 0
        %1232 = vmatprep.subr.bf16.mxu0 0
        %1233 = vmatpush1.bf16.msra.mxu0 0
        %1234 = vmatprep.subr.bf16.mxu0 0
        %1235 = vmatpush1.bf16.msra.mxu0 0
        %1236 = vmatprep.mubr.bf16.mxu0 0
        %1237 = vmatmul.mubr.bf16.gmra.mrb[0].mxu0 %v1021
        %v1238 = vpop.f32.mrb[0].mxu0
        %v1239 = vadd.f32 0.0, %v1238
        %v1240 = vpop.f32.mrb[0].mxu0
        %v1241 = vpop.f32.mrb[0].mxu0
        %v1242 = vadd.f32 0.0, %v1241
        %v1243 = vpop.f32.mrb[0].mxu0
        %1244 = vmatprep.mubr.bf16.mxu0 0
        %1245 = vmatmul.mubr.bf16.gmra.mrb[0].mxu0 %v1024
        %v1246 = vpop.f32.mrb[0].mxu0
        %v1247 = vadd.f32 0.0, %v1246
        %v1248 = vpop.f32.mrb[0].mxu0
        %v1249 = vpop.f32.mrb[0].mxu0
        %v1250 = vadd.f32 0.0, %v1249
        %v1251 = vpop.f32.mrb[0].mxu0
        %1252 = vmatprep.mubr.bf16.mxu0 0
        %1253 = vmatmul.mubr.bf16.gmra.mrb[0].mxu0 %v1027
        %v1254 = vpop.f32.mrb[0].mxu0
        %v1255 = vadd.f32 0.0, %v1254
        %v1256 = vpop.f32.mrb[0].mxu0
        %v1257 = vpop.f32.mrb[0].mxu0
        %v1258 = vadd.f32 0.0, %v1257
        %v1259 = vpop.f32.mrb[0].mxu0
        %1260 = vmatprep.mubr.bf16.mxu0 0
        %1261 = vmatmul.mubr.bf16.gmra.mrb[0].mxu0 %v1030
        %v1262 = vpop.f32.mrb[0].mxu0
        %v1263 = vadd.f32 0.0, %v1262
        %v1264 = vpop.f32.mrb[0].mxu0
        %v1265 = vpop.f32.mrb[0].mxu0
        %v1266 = vadd.f32 0.0, %v1265
        %v1267 = vpop.f32.mrb[0].mxu0
        %1268 = vmatprep.mubr.bf16.mxu0 0
        %1269 = vmatmul.mubr.bf16.gmra.mrb[0].mxu0 %v1033
        %v1270 = vpop.f32.mrb[0].mxu0
        %v1271 = vadd.f32 0.0, %v1270
        %v1272 = vpop.f32.mrb[0].mxu0
        %v1273 = vpop.f32.mrb[0].mxu0
        %v1274 = vadd.f32 0.0, %v1273
        %v1275 = vpop.f32.mrb[0].mxu0
        %1276 = vmatprep.mubr.bf16.mxu0 0
        %1277 = vmatmul.mubr.bf16.gmra.mrb[0].mxu0 %v1036
        %v1278 = vpop.f32.mrb[0].mxu0
        %v1279 = vadd.f32 0.0, %v1278
        %v1280 = vpop.f32.mrb[0].mxu0
        %v1281 = vpop.f32.mrb[0].mxu0
        %v1282 = vadd.f32 0.0, %v1281
        %v1283 = vpop.f32.mrb[0].mxu0
        %1284 = vmatprep.mubr.bf16.mxu0 0
        %1285 = vmatmul.mubr.bf16.gmra.mrb[0].mxu0 %v1039
        %v1286 = vpop.f32.mrb[0].mxu0
        %v1287 = vadd.f32 0.0, %v1286
        %v1288 = vpop.f32.mrb[0].mxu0
        %v1289 = vpop.f32.mrb[0].mxu0
        %v1290 = vadd.f32 0.0, %v1289
        %v1291 = vpop.f32.mrb[0].mxu0
        %1292 = vmatprep.mubr.bf16.mxu0 0
        %1293 = vmatmul.mubr.bf16.gmra.mrb[0].mxu0 %v1042
        %v1294 = vpop.f32.mrb[0].mxu0
        %v1295 = vadd.f32 0.0, %v1294
        %v1296 = vpop.f32.mrb[0].mxu0
        %v1297 = vpop.f32.mrb[0].mxu0
        %v1298 = vadd.f32 0.0, %v1297
        %v1299 = vpop.f32.mrb[0].mxu0
        %1300 = vmatprep.mubr.bf16.mxu0 0
        %1301 = vmatmul.mubr.bf16.gmra.mrb[0].mxu0 %v1045
        %v1302 = vpop.f32.mrb[0].mxu0
        %v1303 = vadd.f32 0.0, %v1302
        %v1304 = vpop.f32.mrb[0].mxu0
        %v1305 = vpop.f32.mrb[0].mxu0
        %v1306 = vadd.f32 0.0, %v1305
        %v1307 = vpop.f32.mrb[0].mxu0
        %1308 = vmatprep.mubr.bf16.mxu0 0
        %1309 = vmatmul.mubr.bf16.gmra.mrb[0].mxu0 %v1048
        %v1310 = vpop.f32.mrb[0].mxu0
        %v1311 = vadd.f32 0.0, %v1310
        %v1312 = vpop.f32.mrb[0].mxu0
        %v1313 = vpop.f32.mrb[0].mxu0
        %v1314 = vadd.f32 0.0, %v1313
        %v1315 = vpop.f32.mrb[0].mxu0
        %1316 = vmatprep.mubr.bf16.mxu0 0
        %1317 = vmatmul.mubr.bf16.gmra.mrb[0].mxu0 %v1051
        %v1318 = vpop.f32.mrb[0].mxu0
        %v1319 = vadd.f32 0.0, %v1318
        %v1320 = vpop.f32.mrb[0].mxu0
        %v1321 = vpop.f32.mrb[0].mxu0
        %v1322 = vadd.f32 0.0, %v1321
        %v1323 = vpop.f32.mrb[0].mxu0
        %1324 = vmatprep.mubr.bf16.mxu0 0
        %1325 = vmatmul.mubr.bf16.gmra.mrb[0].mxu0 %v1054
        %v1326 = vpop.f32.mrb[0].mxu0
        %v1327 = vadd.f32 0.0, %v1326
        %v1328 = vpop.f32.mrb[0].mxu0
        %v1329 = vpop.f32.mrb[0].mxu0
        %v1330 = vadd.f32 0.0, %v1329
        %v1331 = vpop.f32.mrb[0].mxu0
        %1332 = vmatprep.mubr.bf16.mxu0 0
        %1333 = vmatmul.mubr.bf16.gmra.mrb[0].mxu0 %v1057
        %v1334 = vpop.f32.mrb[0].mxu0
        %v1335 = vadd.f32 0.0, %v1334
        %v1336 = vpop.f32.mrb[0].mxu0
        %v1337 = vpop.f32.mrb[0].mxu0
        %v1338 = vadd.f32 0.0, %v1337
        %v1339 = vpop.f32.mrb[0].mxu0
        %1340 = vmatprep.mubr.bf16.mxu0 0
        %1341 = vmatmul.mubr.bf16.gmra.mrb[0].mxu0 %v1060
        %v1342 = vpop.f32.mrb[0].mxu0
        %v1343 = vadd.f32 0.0, %v1342
        %v1344 = vpop.f32.mrb[0].mxu0
        %v1345 = vpop.f32.mrb[0].mxu0
        %v1346 = vadd.f32 0.0, %v1345
        %v1347 = vpop.f32.mrb[0].mxu0
        %1348 = vmatprep.mubr.bf16.mxu0 0
        %1349 = vmatmul.mubr.bf16.gmra.mrb[0].mxu0 %v1063
        %v1350 = vpop.f32.mrb[0].mxu0
        %v1351 = vadd.f32 0.0, %v1350
        %v1352 = vpop.f32.mrb[0].mxu0
        %v1353 = vpop.f32.mrb[0].mxu0
        %v1354 = vadd.f32 0.0, %v1353
        %v1355 = vpop.f32.mrb[0].mxu0
        %1356 = vmatprep.mubr.bf16.mxu0 0
        %1357 = vmatmul.mubr.bf16.gmra.mrb[0].mxu0 %v1066
        %v1358 = vpop.f32.mrb[0].mxu0
        %v1359 = vadd.f32 0.0, %v1358
        %v1360 = vpop.f32.mrb[0].mxu0
        %v1361 = vpop.f32.mrb[0].mxu0
        %v1362 = vadd.f32 0.0, %v1361
        %v1363 = vpop.f32.mrb[0].mxu0
        %1364 = vmatprep.mubr.bf16.mxu0 0
        %1365 = vmatmul.mubr.bf16.gmra.mrb[0].mxu0 %v1069
        %v1366 = vpop.f32.mrb[0].mxu0
        %v1367 = vadd.f32 0.0, %v1366
        %v1368 = vpop.f32.mrb[0].mxu0
        %v1369 = vpop.f32.mrb[0].mxu0
        %v1370 = vadd.f32 0.0, %v1369
        %v1371 = vpop.f32.mrb[0].mxu0
        %1372 = vmatprep.mubr.bf16.mxu0 0
        %1373 = vmatmul.mubr.bf16.gmra.mrb[0].mxu0 %v1072
        %v1374 = vpop.f32.mrb[0].mxu0
        %v1375 = vadd.f32 0.0, %v1374
        %v1376 = vpop.f32.mrb[0].mxu0
        %v1377 = vpop.f32.mrb[0].mxu0
        %v1378 = vadd.f32 0.0, %v1377
        %v1379 = vpop.f32.mrb[0].mxu0
        %1380 = vmatprep.mubr.bf16.mxu0 0
        %1381 = vmatmul.mubr.bf16.gmra.mrb[0].mxu0 %v1075
        %v1382 = vpop.f32.mrb[0].mxu0
        %v1383 = vadd.f32 0.0, %v1382
        %v1384 = vpop.f32.mrb[0].mxu0
        %v1385 = vpop.f32.mrb[0].mxu0
        %v1386 = vadd.f32 0.0, %v1385
        %v1387 = vpop.f32.mrb[0].mxu0
        %1388 = vmatprep.mubr.bf16.mxu0 0
        %1389 = vmatmul.mubr.bf16.gmra.mrb[0].mxu0 %v1078
        %v1390 = vpop.f32.mrb[0].mxu0
        %v1391 = vadd.f32 0.0, %v1390
        %v1392 = vpop.f32.mrb[0].mxu0
        %v1393 = vpop.f32.mrb[0].mxu0
        %v1394 = vadd.f32 0.0, %v1393
        %v1395 = vpop.f32.mrb[0].mxu0
        %1396 = vmatprep.mubr.bf16.mxu0 0
        %1397 = vmatmul.mubr.bf16.gmra.mrb[0].mxu0 %v1081
        %v1398 = vpop.f32.mrb[0].mxu0
        %v1399 = vadd.f32 0.0, %v1398
        %v1400 = vpop.f32.mrb[0].mxu0
        %v1401 = vpop.f32.mrb[0].mxu0
        %v1402 = vadd.f32 0.0, %v1401
        %v1403 = vpop.f32.mrb[0].mxu0
        %1404 = vmatprep.mubr.bf16.mxu0 0
        %1405 = vmatmul.mubr.bf16.gmra.mrb[0].mxu0 %v1084
        %v1406 = vpop.f32.mrb[0].mxu0
        %v1407 = vadd.f32 0.0, %v1406
        %v1408 = vpop.f32.mrb[0].mxu0
        %v1409 = vpop.f32.mrb[0].mxu0
        %v1410 = vadd.f32 0.0, %v1409
        %v1411 = vpop.f32.mrb[0].mxu0
        %1412 = vmatprep.mubr.bf16.mxu0 0
        %1413 = vmatmul.mubr.bf16.gmra.mrb[0].mxu0 %v1087
        %v1414 = vpop.f32.mrb[0].mxu0
        %v1415 = vadd.f32 0.0, %v1414
        %v1416 = vpop.f32.mrb[0].mxu0
        %v1417 = vpop.f32.mrb[0].mxu0
        %v1418 = vadd.f32 0.0, %v1417
        %v1419 = vpop.f32.mrb[0].mxu0
        %1420 = vmatprep.mubr.bf16.mxu0 0
        %1421 = vmatmul.mubr.bf16.gmra.mrb[0].mxu0 %v1090
        %v1422 = vpop.f32.mrb[0].mxu0
        %v1423 = vadd.f32 0.0, %v1422
        %v1424 = vpop.f32.mrb[0].mxu0
        %v1425 = vpop.f32.mrb[0].mxu0
        %v1426 = vadd.f32 0.0, %v1425
        %v1427 = vpop.f32.mrb[0].mxu0
        %1428 = vmatprep.mubr.bf16.mxu0 0
        %1429 = vmatmul.mubr.bf16.gmra.mrb[0].mxu0 %v1093
        %v1430 = vpop.f32.mrb[0].mxu0
        %v1431 = vadd.f32 0.0, %v1430
        %v1432 = vpop.f32.mrb[0].mxu0
        %v1433 = vpop.f32.mrb[0].mxu0
        %v1434 = vadd.f32 0.0, %v1433
        %v1435 = vpop.f32.mrb[0].mxu0
        %1436 = vmatprep.mubr.bf16.mxu0 0
        %1437 = vmatmul.mubr.bf16.gmra.mrb[0].mxu0 %v1096
        %v1438 = vpop.f32.mrb[0].mxu0
        %v1439 = vadd.f32 0.0, %v1438
        %v1440 = vpop.f32.mrb[0].mxu0
        %v1441 = vpop.f32.mrb[0].mxu0
        %v1442 = vadd.f32 0.0, %v1441
        %v1443 = vpop.f32.mrb[0].mxu0
        %1444 = vmatprep.mubr.bf16.mxu0 0
        %1445 = vmatmul.mubr.bf16.gmra.mrb[0].mxu0 %v1099
        %v1446 = vpop.f32.mrb[0].mxu0
        %v1447 = vadd.f32 0.0, %v1446
        %v1448 = vpop.f32.mrb[0].mxu0
        %v1449 = vpop.f32.mrb[0].mxu0
        %v1450 = vadd.f32 0.0, %v1449
        %v1451 = vpop.f32.mrb[0].mxu0
        %1452 = vmatprep.mubr.bf16.mxu0 0
        %1453 = vmatmul.mubr.bf16.gmra.mrb[0].mxu0 %v1102
        %v1454 = vpop.f32.mrb[0].mxu0
        %v1455 = vadd.f32 0.0, %v1454
        %v1456 = vpop.f32.mrb[0].mxu0
        %v1457 = vpop.f32.mrb[0].mxu0
        %v1458 = vadd.f32 0.0, %v1457
        %v1459 = vpop.f32.mrb[0].mxu0
        %1460 = vmatprep.mubr.bf16.mxu0 0
        %1461 = vmatmul.mubr.bf16.gmra.mrb[0].mxu0 %v1105
        %v1462 = vpop.f32.mrb[0].mxu0
        %v1463 = vadd.f32 0.0, %v1462
        %v1464 = vpop.f32.mrb[0].mxu0
        %v1465 = vpop.f32.mrb[0].mxu0
        %v1466 = vadd.f32 0.0, %v1465
        %v1467 = vpop.f32.mrb[0].mxu0
        %1468 = vmatprep.mubr.bf16.mxu0 0
        %1469 = vmatmul.mubr.bf16.gmra.mrb[0].mxu0 %v1108
        %v1470 = vpop.f32.mrb[0].mxu0
        %v1471 = vadd.f32 0.0, %v1470
        %v1472 = vpop.f32.mrb[0].mxu0
        %v1473 = vpop.f32.mrb[0].mxu0
        %v1474 = vadd.f32 0.0, %v1473
        %v1475 = vpop.f32.mrb[0].mxu0
        %1476 = vmatprep.mubr.bf16.mxu0 0
        %1477 = vmatmul.mubr.bf16.gmra.mrb[0].mxu0 %v1111
        %v1478 = vpop.f32.mrb[0].mxu0
        %v1479 = vadd.f32 0.0, %v1478
        %v1480 = vpop.f32.mrb[0].mxu0
        %v1481 = vpop.f32.mrb[0].mxu0
        %v1482 = vadd.f32 0.0, %v1481
        %v1483 = vpop.f32.mrb[0].mxu0
        %1484 = vmatprep.mubr.bf16.mxu0 0
        %1485 = vmatmul.mubr.bf16.gmra.mrb[0].mxu0 %v1114
        %v1486 = vpop.f32.mrb[0].mxu0
        %v1487 = vadd.f32 0.0, %v1486
        %v1488 = vpop.f32.mrb[0].mxu0
        %v1489 = vpop.f32.mrb[0].mxu0
        %v1490 = vadd.f32 0.0, %v1489
        %v1491 = vpop.f32.mrb[0].mxu0
        %1492 = vmatprep.mubr.bf16.mxu0 0
        %1493 = vmatmul.mubr.bf16.gmra.mrb[0].mxu0 %v1117
        %v1494 = vpop.f32.mrb[0].mxu0
        %v1495 = vadd.f32 0.0, %v1494
        %v1496 = vpop.f32.mrb[0].mxu0
        %v1497 = vpop.f32.mrb[0].mxu0
        %v1498 = vadd.f32 0.0, %v1497
        %v1499 = vpop.f32.mrb[0].mxu0
        %1500 = vmatprep.mubr.bf16.mxu0 0
        %1501 = vmatmul.mubr.bf16.gmra.mrb[0].mxu0 %v1120
        %v1502 = vpop.f32.mrb[0].mxu0
        %v1503 = vadd.f32 0.0, %v1502
        %v1504 = vpop.f32.mrb[0].mxu0
        %v1505 = vpop.f32.mrb[0].mxu0
        %v1506 = vadd.f32 0.0, %v1505
        %v1507 = vpop.f32.mrb[0].mxu0
        %1508 = vmatprep.mubr.bf16.mxu0 0
        %1509 = vmatmul.mubr.bf16.gmra.mrb[0].mxu0 %v1123
        %v1510 = vpop.f32.mrb[0].mxu0
        %v1511 = vadd.f32 0.0, %v1510
        %v1512 = vpop.f32.mrb[0].mxu0
        %v1513 = vpop.f32.mrb[0].mxu0
        %v1514 = vadd.f32 0.0, %v1513
        %v1515 = vpop.f32.mrb[0].mxu0
        %1516 = vmatprep.mubr.bf16.mxu0 0
        %1517 = vmatmul.mubr.bf16.gmra.mrb[0].mxu0 %v1126
        %v1518 = vpop.f32.mrb[0].mxu0
        %v1519 = vadd.f32 0.0, %v1518
        %v1520 = vpop.f32.mrb[0].mxu0
        %v1521 = vpop.f32.mrb[0].mxu0
        %v1522 = vadd.f32 0.0, %v1521
        %v1523 = vpop.f32.mrb[0].mxu0
        %1524 = vmatprep.mubr.bf16.mxu0 0
        %1525 = vmatmul.mubr.bf16.gmra.mrb[0].mxu0 %v1129
        %v1526 = vpop.f32.mrb[0].mxu0
        %v1527 = vadd.f32 0.0, %v1526
        %v1528 = vpop.f32.mrb[0].mxu0
        %v1529 = vpop.f32.mrb[0].mxu0
        %v1530 = vadd.f32 0.0, %v1529
        %v1531 = vpop.f32.mrb[0].mxu0
        %1532 = vmatprep.mubr.bf16.mxu0 0
        %1533 = vmatmul.mubr.bf16.gmra.mrb[0].mxu0 %v1132
        %v1534 = vpop.f32.mrb[0].mxu0
        %v1535 = vadd.f32 0.0, %v1534
        %v1536 = vpop.f32.mrb[0].mxu0
        %v1537 = vpop.f32.mrb[0].mxu0
        %v1538 = vadd.f32 0.0, %v1537
        %v1539 = vpop.f32.mrb[0].mxu0
        %1540 = vmatprep.mubr.bf16.mxu0 0
        %1541 = vmatmul.mubr.bf16.gmra.mrb[0].mxu0 %v1135
        %v1542 = vpop.f32.mrb[0].mxu0
        %v1543 = vadd.f32 0.0, %v1542
        %v1544 = vpop.f32.mrb[0].mxu0
        %v1545 = vpop.f32.mrb[0].mxu0
        %v1546 = vadd.f32 0.0, %v1545
        %v1547 = vpop.f32.mrb[0].mxu0
        %1548 = vmatprep.mubr.bf16.mxu0 0
        %1549 = vmatmul.mubr.bf16.gmra.mrb[0].mxu0 %v1138
        %v1550 = vpop.f32.mrb[0].mxu0
        %v1551 = vadd.f32 0.0, %v1550
        %v1552 = vpop.f32.mrb[0].mxu0
        %v1553 = vpop.f32.mrb[0].mxu0
        %v1554 = vadd.f32 0.0, %v1553
        %v1555 = vpop.f32.mrb[0].mxu0
        %1556 = vmatprep.mubr.bf16.mxu0 0
        %1557 = vmatmul.mubr.bf16.gmra.mrb[0].mxu0 %v1141
        %v1558 = vpop.f32.mrb[0].mxu0
        %v1559 = vadd.f32 0.0, %v1558
        %v1560 = vpop.f32.mrb[0].mxu0
        %v1561 = vpop.f32.mrb[0].mxu0
        %v1562 = vadd.f32 0.0, %v1561
        %v1563 = vpop.f32.mrb[0].mxu0
        %1564 = vmatprep.mubr.bf16.mxu0 0
        %1565 = vmatmul.mubr.bf16.gmra.mrb[0].mxu0 %v1144
        %v1566 = vpop.f32.mrb[0].mxu0
        %v1567 = vadd.f32 0.0, %v1566
        %v1568 = vpop.f32.mrb[0].mxu0
        %v1569 = vpop.f32.mrb[0].mxu0
        %v1570 = vadd.f32 0.0, %v1569
        %v1571 = vpop.f32.mrb[0].mxu0
        %1572 = vmatprep.mubr.bf16.mxu0 0
        %1573 = vmatmul.mubr.bf16.gmra.mrb[0].mxu0 %v1147
        %v1574 = vpop.f32.mrb[0].mxu0
        %v1575 = vadd.f32 0.0, %v1574
        %v1576 = vpop.f32.mrb[0].mxu0
        %v1577 = vpop.f32.mrb[0].mxu0
        %v1578 = vadd.f32 0.0, %v1577
        %v1579 = vpop.f32.mrb[0].mxu0
        %1580 = vmatprep.mubr.bf16.mxu0 0
        %1581 = vmatmul.mubr.bf16.gmra.mrb[0].mxu0 %v1150
        %v1582 = vpop.f32.mrb[0].mxu0
        %v1583 = vadd.f32 0.0, %v1582
        %v1584 = vpop.f32.mrb[0].mxu0
        %v1585 = vpop.f32.mrb[0].mxu0
        %v1586 = vadd.f32 0.0, %v1585
        %v1587 = vpop.f32.mrb[0].mxu0
        %1588 = vmatprep.mubr.bf16.mxu0 0
        %1589 = vmatmul.mubr.bf16.gmra.mrb[0].mxu0 %v1153
        %v1590 = vpop.f32.mrb[0].mxu0
        %v1591 = vadd.f32 0.0, %v1590
        %v1592 = vpop.f32.mrb[0].mxu0
        %v1593 = vpop.f32.mrb[0].mxu0
        %v1594 = vadd.f32 0.0, %v1593
        %v1595 = vpop.f32.mrb[0].mxu0
        %1596 = vmatprep.mubr.bf16.mxu0 0
        %1597 = vmatmul.mubr.bf16.gmra.mrb[0].mxu0 %v1156
        %v1598 = vpop.f32.mrb[0].mxu0
        %v1599 = vadd.f32 0.0, %v1598
        %v1600 = vpop.f32.mrb[0].mxu0
        %v1601 = vpop.f32.mrb[0].mxu0
        %v1602 = vadd.f32 0.0, %v1601
        %v1603 = vpop.f32.mrb[0].mxu0
        %1604 = vmatprep.mubr.bf16.mxu0 0
        %1605 = vmatmul.mubr.bf16.gmra.mrb[0].mxu0 %v1159
        %v1606 = vpop.f32.mrb[0].mxu0
        %v1607 = vadd.f32 0.0, %v1606
        %v1608 = vpop.f32.mrb[0].mxu0
        %v1609 = vpop.f32.mrb[0].mxu0
        %v1610 = vadd.f32 0.0, %v1609
        %v1611 = vpop.f32.mrb[0].mxu0
        %1612 = vmatprep.mubr.bf16.mxu0 0
        %1613 = vmatmul.mubr.bf16.gmra.mrb[0].mxu0 %v1162
        %v1614 = vpop.f32.mrb[0].mxu0
        %v1615 = vadd.f32 0.0, %v1614
        %v1616 = vpop.f32.mrb[0].mxu0
        %v1617 = vpop.f32.mrb[0].mxu0
        %v1618 = vadd.f32 0.0, %v1617
        %v1619 = vpop.f32.mrb[0].mxu0
        %1620 = vmatprep.mubr.bf16.mxu0 0
        %1621 = vmatmul.mubr.bf16.gmra.mrb[0].mxu0 %v1165
        %v1622 = vpop.f32.mrb[0].mxu0
        %v1623 = vadd.f32 0.0, %v1622
        %v1624 = vpop.f32.mrb[0].mxu0
        %v1625 = vpop.f32.mrb[0].mxu0
        %v1626 = vadd.f32 0.0, %v1625
        %v1627 = vpop.f32.mrb[0].mxu0
        %1628 = vmatprep.mubr.bf16.mxu0 0
        %1629 = vmatmul.mubr.bf16.gmra.mrb[0].mxu0 %v1168
        %v1630 = vpop.f32.mrb[0].mxu0
        %v1631 = vadd.f32 0.0, %v1630
        %v1632 = vpop.f32.mrb[0].mxu0
        %v1633 = vpop.f32.mrb[0].mxu0
        %v1634 = vadd.f32 0.0, %v1633
        %v1635 = vpop.f32.mrb[0].mxu0
        %1636 = vmatprep.mubr.bf16.mxu0 0
        %1637 = vmatmul.mubr.bf16.gmra.mrb[0].mxu0 %v1171
        %v1638 = vpop.f32.mrb[0].mxu0
        %v1639 = vadd.f32 0.0, %v1638
        %v1640 = vpop.f32.mrb[0].mxu0
        %v1641 = vpop.f32.mrb[0].mxu0
        %v1642 = vadd.f32 0.0, %v1641
        %v1643 = vpop.f32.mrb[0].mxu0
        %1644 = vmatprep.mubr.bf16.mxu0 0
        %1645 = vmatmul.mubr.bf16.gmra.mrb[0].mxu0 %v1174
        %v1646 = vpop.f32.mrb[0].mxu0
        %v1647 = vadd.f32 0.0, %v1646
        %v1648 = vpop.f32.mrb[0].mxu0
        %v1649 = vpop.f32.mrb[0].mxu0
        %v1650 = vadd.f32 0.0, %v1649
        %v1651 = vpop.f32.mrb[0].mxu0
        %1652 = vmatprep.mubr.bf16.mxu0 0
        %1653 = vmatmul.mubr.bf16.gmra.mrb[0].mxu0 %v1177
        %v1654 = vpop.f32.mrb[0].mxu0
        %v1655 = vadd.f32 0.0, %v1654
        %v1656 = vpop.f32.mrb[0].mxu0
        %v1657 = vpop.f32.mrb[0].mxu0
        %v1658 = vadd.f32 0.0, %v1657
        %v1659 = vpop.f32.mrb[0].mxu0
        %1660 = vmatprep.mubr.bf16.mxu0 0
        %1661 = vmatmul.mubr.bf16.gmra.mrb[0].mxu0 %v1180
        %v1662 = vpop.f32.mrb[0].mxu0
        %v1663 = vadd.f32 0.0, %v1662
        %v1664 = vpop.f32.mrb[0].mxu0
        %v1665 = vpop.f32.mrb[0].mxu0
        %v1666 = vadd.f32 0.0, %v1665
        %v1667 = vpop.f32.mrb[0].mxu0
        %1668 = vmatprep.mubr.bf16.mxu0 0
        %1669 = vmatmul.mubr.bf16.gmra.mrb[0].mxu0 %v1183
        %v1670 = vpop.f32.mrb[0].mxu0
        %v1671 = vadd.f32 0.0, %v1670
        %v1672 = vpop.f32.mrb[0].mxu0
        %v1673 = vpop.f32.mrb[0].mxu0
        %v1674 = vadd.f32 0.0, %v1673
        %v1675 = vpop.f32.mrb[0].mxu0
        %1676 = vmatprep.mubr.bf16.mxu0 0
        %1677 = vmatmul.mubr.bf16.gmra.mrb[0].mxu0 %v1186
        %v1678 = vpop.f32.mrb[0].mxu0
        %v1679 = vadd.f32 0.0, %v1678
        %v1680 = vpop.f32.mrb[0].mxu0
        %v1681 = vpop.f32.mrb[0].mxu0
        %v1682 = vadd.f32 0.0, %v1681
        %v1683 = vpop.f32.mrb[0].mxu0
        %1684 = vmatprep.mubr.bf16.mxu0 0
        %1685 = vmatmul.mubr.bf16.gmra.mrb[0].mxu0 %v1189
        %v1686 = vpop.f32.mrb[0].mxu0
        %v1687 = vadd.f32 0.0, %v1686
        %v1688 = vpop.f32.mrb[0].mxu0
        %v1689 = vpop.f32.mrb[0].mxu0
        %v1690 = vadd.f32 0.0, %v1689
        %v1691 = vpop.f32.mrb[0].mxu0
        %1692 = vmatprep.mubr.bf16.mxu0 0
        %1693 = vmatmul.mubr.bf16.gmra.mrb[0].mxu0 %v1192
        %v1694 = vpop.f32.mrb[0].mxu0
        %v1695 = vadd.f32 0.0, %v1694
        %v1696 = vpop.f32.mrb[0].mxu0
        %v1697 = vpop.f32.mrb[0].mxu0
        %v1698 = vadd.f32 0.0, %v1697
        %v1699 = vpop.f32.mrb[0].mxu0
        %1700 = vmatprep.mubr.bf16.mxu0 0
        %1701 = vmatmul.mubr.bf16.gmra.mrb[0].mxu0 %v1195
        %v1702 = vpop.f32.mrb[0].mxu0
        %v1703 = vadd.f32 0.0, %v1702
        %v1704 = vpop.f32.mrb[0].mxu0
        %v1705 = vpop.f32.mrb[0].mxu0
        %v1706 = vadd.f32 0.0, %v1705
        %v1707 = vpop.f32.mrb[0].mxu0
        %1708 = vmatprep.mubr.bf16.mxu0 0
        %1709 = vmatmul.mubr.bf16.gmra.mrb[0].mxu0 %v1198
        %v1710 = vpop.f32.mrb[0].mxu0
        %v1711 = vadd.f32 0.0, %v1710
        %v1712 = vpop.f32.mrb[0].mxu0
        %v1713 = vpop.f32.mrb[0].mxu0
        %v1714 = vadd.f32 0.0, %v1713
        %v1715 = vpop.f32.mrb[0].mxu0
        %1716 = vdwg.mxu0
        %v1717 = vmax.f32 %v1239, %v1359
        %v1718 = vmax.f32 %v1242, %v1362
        %v1719 = vmax.f32 %v1247, %v1367
        %v1720 = vmax.f32 %v1250, %v1370
        %v1721 = vmax.f32 %v1255, %v1375
        %v1722 = vmax.f32 %v1258, %v1378
        %v1723 = vmax.f32 %v1263, %v1383
        %v1724 = vmax.f32 %v1266, %v1386
        %v1725 = vmax.f32 %v1271, %v1391
        %v1726 = vmax.f32 %v1274, %v1394
        %v1727 = vmax.f32 %v1279, %v1399
        %v1728 = vmax.f32 %v1282, %v1402
        %v1729 = vmax.f32 %v1287, %v1407
        %v1730 = vmax.f32 %v1290, %v1410
        %v1731 = vmax.f32 %v1295, %v1415
        %v1732 = vmax.f32 %v1298, %v1418
        %v1733 = vmax.f32 %v1303, %v1423
        %v1734 = vmax.f32 %v1306, %v1426
        %v1735 = vmax.f32 %v1311, %v1431
        %v1736 = vmax.f32 %v1314, %v1434
        %v1737 = vmax.f32 %v1319, %v1439
        %v1738 = vmax.f32 %v1322, %v1442
        %v1739 = vmax.f32 %v1327, %v1447
        %v1740 = vmax.f32 %v1330, %v1450
        %v1741 = vmax.f32 %v1335, %v1455
        %v1742 = vmax.f32 %v1338, %v1458
        %v1743 = vmax.f32 %v1343, %v1463
        %v1744 = vmax.f32 %v1346, %v1466
        %v1745 = vmax.f32 %v1351, %v1471
        %v1746 = vmax.f32 %v1354, %v1474
        %v1747 = vmax.f32 %v1479, %v1599
        %v1748 = vmax.f32 %v1482, %v1602
        %v1749 = vmax.f32 %v1487, %v1607
        %v1750 = vmax.f32 %v1490, %v1610
        %v1751 = vmax.f32 %v1495, %v1615
        %v1752 = vmax.f32 %v1498, %v1618
        %v1753 = vmax.f32 %v1503, %v1623
        %v1754 = vmax.f32 %v1506, %v1626
        %v1755 = vmax.f32 %v1511, %v1631
        %v1756 = vmax.f32 %v1514, %v1634
        %v1757 = vmax.f32 %v1519, %v1639
        %v1758 = vmax.f32 %v1522, %v1642
        %v1759 = vmax.f32 %v1527, %v1647
        %v1760 = vmax.f32 %v1530, %v1650
        %v1761 = vmax.f32 %v1535, %v1655
        %v1762 = vmax.f32 %v1538, %v1658
        %v1763 = vmax.f32 %v1543, %v1663
        %v1764 = vmax.f32 %v1546, %v1666
        %v1765 = vmax.f32 %v1551, %v1671
        %v1766 = vmax.f32 %v1554, %v1674
        %v1767 = vmax.f32 %v1559, %v1679
        %v1768 = vmax.f32 %v1562, %v1682
        %v1769 = vmax.f32 %v1567, %v1687
        %v1770 = vmax.f32 %v1570, %v1690
        %v1771 = vmax.f32 %v1575, %v1695
        %v1772 = vmax.f32 %v1578, %v1698
        %v1773 = vmax.f32 %v1583, %v1703
        %v1774 = vmax.f32 %v1586, %v1706
        %v1775 = vmax.f32 %v1591, %v1711
        %v1776 = vmax.f32 %v1594, %v1714
        %v1777 = vmax.f32 %v1717, %v1747
        %v1778 = vmax.f32 %v1718, %v1748
        %v1779 = vmax.f32 %v1719, %v1749
        %v1780 = vmax.f32 %v1720, %v1750
        %v1781 = vmax.f32 %v1721, %v1751
        %v1782 = vmax.f32 %v1722, %v1752
        %v1783 = vmax.f32 %v1723, %v1753
        %v1784 = vmax.f32 %v1724, %v1754
        %v1785 = vmax.f32 %v1725, %v1755
        %v1786 = vmax.f32 %v1726, %v1756
        %v1787 = vmax.f32 %v1727, %v1757
        %v1788 = vmax.f32 %v1728, %v1758
        %v1789 = vmax.f32 %v1729, %v1759
        %v1790 = vmax.f32 %v1730, %v1760
        %v1791 = vmax.f32 %v1731, %v1761
        %v1792 = vmax.f32 %v1732, %v1762
        %v1793 = vmax.f32 %v1733, %v1763
        %v1794 = vmax.f32 %v1734, %v1764
        %v1795 = vmax.f32 %v1735, %v1765
        %v1796 = vmax.f32 %v1736, %v1766
        %v1797 = vmax.f32 %v1737, %v1767
        %v1798 = vmax.f32 %v1738, %v1768
        %v1799 = vmax.f32 %v1739, %v1769
        %v1800 = vmax.f32 %v1740, %v1770
        %v1801 = vmax.f32 %v1741, %v1771
        %v1802 = vmax.f32 %v1742, %v1772
        %v1803 = vmax.f32 %v1743, %v1773
        %v1804 = vmax.f32 %v1744, %v1774
        %v1805 = vmax.f32 %v1745, %v1775
        %v1806 = vmax.f32 %v1746, %v1776
        %v1807 = vld [vmem:[%s2] sm:$0x1]
        %v1809 = vlaneseq
        %v1810 = vshrl.u32 %v1809, 7
        %v1811 = vsub.s32 0, %v1810
        %v1812 = vrot.slane %v1807, %v1811
        %v1814 = vadd.f32 %v1777, %v1812
        %v1815 = vadd.f32 %v1778, %v1812
        %v1816 = vadd.f32 %v1779, %v1812
        %v1817 = vadd.f32 %v1780, %v1812
        %v1818 = vadd.f32 %v1781, %v1812
        %v1819 = vadd.f32 %v1782, %v1812
        %v1820 = vadd.f32 %v1783, %v1812
        %v1821 = vadd.f32 %v1784, %v1812
        %v1822 = vadd.f32 %v1785, %v1812
        %v1823 = vadd.f32 %v1786, %v1812
        %v1824 = vadd.f32 %v1787, %v1812
        %v1825 = vadd.f32 %v1788, %v1812
        %v1826 = vadd.f32 %v1789, %v1812
        %v1827 = vadd.f32 %v1790, %v1812
        %v1828 = vadd.f32 %v1791, %v1812
        %v1829 = vadd.f32 %v1792, %v1812
        %v1830 = vadd.f32 %v1793, %v1812
        %v1831 = vadd.f32 %v1794, %v1812
        %v1832 = vadd.f32 %v1795, %v1812
        %v1833 = vadd.f32 %v1796, %v1812
        %v1834 = vadd.f32 %v1797, %v1812
        %v1835 = vadd.f32 %v1798, %v1812
        %v1836 = vadd.f32 %v1799, %v1812
        %v1837 = vadd.f32 %v1800, %v1812
        %v1838 = vadd.f32 %v1801, %v1812
        %v1839 = vadd.f32 %v1802, %v1812
        %v1840 = vadd.f32 %v1803, %v1812
        %v1841 = vadd.f32 %v1804, %v1812
        %v1842 = vadd.f32 %v1805, %v1812
        %v1843 = vadd.f32 %v1806, %v1812
        %v1844 = vmax.f32 %v1814, 0.0
        %v1845 = vmax.f32 %v1815, 0.0
        %v1846 = vmax.f32 %v1816, 0.0
        %v1847 = vmax.f32 %v1817, 0.0
        %v1848 = vmax.f32 %v1818, 0.0
        %v1849 = vmax.f32 %v1819, 0.0
        %v1850 = vmax.f32 %v1820, 0.0
        %v1851 = vmax.f32 %v1821, 0.0
        %v1852 = vmax.f32 %v1822, 0.0
        %v1853 = vmax.f32 %v1823, 0.0
        %v1854 = vmax.f32 %v1824, 0.0
        %v1855 = vmax.f32 %v1825, 0.0
        %v1856 = vmax.f32 %v1826, 0.0
        %v1857 = vmax.f32 %v1827, 0.0
        %v1858 = vmax.f32 %v1828, 0.0
        %v1859 = vmax.f32 %v1829, 0.0
        %v1860 = vmax.f32 %v1830, 0.0
        %v1861 = vmax.f32 %v1831, 0.0
        %v1862 = vmax.f32 %v1832, 0.0
        %v1863 = vmax.f32 %v1833, 0.0
        %v1864 = vmax.f32 %v1834, 0.0
        %v1865 = vmax.f32 %v1835, 0.0
        %v1866 = vmax.f32 %v1836, 0.0
        %v1867 = vmax.f32 %v1837, 0.0
        %v1868 = vmax.f32 %v1838, 0.0
        %v1869 = vmax.f32 %v1839, 0.0
        %v1870 = vmax.f32 %v1840, 0.0
        %v1871 = vmax.f32 %v1841, 0.0
        %v1872 = vmax.f32 %v1842, 0.0
        %v1873 = vmax.f32 %v1843, 0.0
        %v1874 = vpack.c.bf16 %v1845, %v1844
        %v1875 = vpack.c.bf16 %v1847, %v1846
        %v1876 = vpack.c.bf16 %v1849, %v1848
        %v1877 = vpack.c.bf16 %v1851, %v1850
        %v1878 = vpack.c.bf16 %v1853, %v1852
        %v1879 = vpack.c.bf16 %v1855, %v1854
        %v1880 = vpack.c.bf16 %v1857, %v1856
        %v1881 = vpack.c.bf16 %v1859, %v1858
        %v1882 = vpack.c.bf16 %v1861, %v1860
        %v1883 = vpack.c.bf16 %v1863, %v1862
        %v1884 = vpack.c.bf16 %v1865, %v1864
        %v1885 = vpack.c.bf16 %v1867, %v1866
        %v1886 = vpack.c.bf16 %v1869, %v1868
        %v1887 = vpack.c.bf16 %v1871, %v1870
        %v1888 = vpack.c.bf16 %v1873, %v1872
        %v1904 = vunpack.c.l.b16 %v1874
        %v1905 = vunpack.c.h.b16 %v1874
        %v1906 = vunpack.c.l.b16 %v1875
        %v1907 = vunpack.c.h.b16 %v1875
        %v1908 = vunpack.c.l.b16 %v1876
        %v1909 = vunpack.c.h.b16 %v1876
        %v1910 = vunpack.c.l.b16 %v1877
        %v1911 = vunpack.c.h.b16 %v1877
        %v1912 = vunpack.c.l.b16 %v1878
        %v1913 = vunpack.c.h.b16 %v1878
        %v1914 = vunpack.c.l.b16 %v1879
        %v1915 = vunpack.c.h.b16 %v1879
        %v1916 = vunpack.c.l.b16 %v1880
        %v1917 = vunpack.c.h.b16 %v1880
        %v1918 = vunpack.c.l.b16 %v1881
        %v1919 = vunpack.c.h.b16 %v1881
        %v1920 = vunpack.c.l.b16 %v1882
        %v1921 = vunpack.c.h.b16 %v1882
        %v1922 = vunpack.c.l.b16 %v1883
        %v1923 = vunpack.c.h.b16 %v1883
        %v1924 = vunpack.c.l.b16 %v1884
        %v1925 = vunpack.c.h.b16 %v1884
        %v1926 = vunpack.c.l.b16 %v1885
        %v1927 = vunpack.c.h.b16 %v1885
        %v1928 = vunpack.c.l.b16 %v1886
        %v1929 = vunpack.c.h.b16 %v1886
        %v1930 = vunpack.c.l.b16 %v1887
        %v1931 = vunpack.c.h.b16 %v1887
        %v1932 = vunpack.c.l.b16 %v1888
        %v1933 = vunpack.c.h.b16 %v1888
        %v1934 = vpack.c.b16 %v1904, %v1904
        %v1935 = vpack.c.b16 %v1905, %v1905
        %v1936 = vpack.c.b16 %v1906, %v1906
        %v1937 = vpack.c.b16 %v1907, %v1907
        %v1938 = vpack.c.b16 %v1908, %v1908
        %v1939 = vpack.c.b16 %v1909, %v1909
        %v1940 = vpack.c.b16 %v1910, %v1910
        %v1941 = vpack.c.b16 %v1911, %v1911
        %v1942 = vpack.c.b16 %v1912, %v1912
        %v1943 = vpack.c.b16 %v1913, %v1913
        %v1944 = vpack.c.b16 %v1914, %v1914
        %v1945 = vpack.c.b16 %v1915, %v1915
        %v1946 = vpack.c.b16 %v1916, %v1916
        %v1947 = vpack.c.b16 %v1917, %v1917
        %v1948 = vpack.c.b16 %v1918, %v1918
        %v1949 = vpack.c.b16 %v1919, %v1919
        %v1950 = vpack.c.b16 %v1920, %v1920
        %v1951 = vpack.c.b16 %v1921, %v1921
        %v1952 = vpack.c.b16 %v1922, %v1922
        %v1953 = vpack.c.b16 %v1923, %v1923
        %v1954 = vpack.c.b16 %v1924, %v1924
        %v1955 = vpack.c.b16 %v1925, %v1925
        %v1956 = vpack.c.b16 %v1926, %v1926
        %v1957 = vpack.c.b16 %v1927, %v1927
        %v1958 = vpack.c.b16 %v1928, %v1928
        %v1959 = vpack.c.b16 %v1929, %v1929
        %v1960 = vpack.c.b16 %v1930, %v1930
        %v1961 = vpack.c.b16 %v1931, %v1931
        %v1962 = vpack.c.b16 %v1932, %v1932
        %v1963 = vpack.c.b16 %v1933, %v1933
        %vm1994 = vcmask 44032
        %1995 = vst.msk [vmem:[%s577] sm:$0xf] %vm1994, %v1934
        %1996 = vst.msk [vmem:[%s577 + $0x4] sm:$0xf] %vm1994, %v1935
        %1997 = vst.msk [vmem:[%s577 + $0x8] sm:$0xf] %vm1994, %v1936
        %1998 = vst.msk [vmem:[%s577 + $0xc] sm:$0xf] %vm1994, %v1937
        %1999 = vst.msk [vmem:[%s577 + $0x10] sm:$0xf] %vm1994, %v1938
        %2000 = vst.msk [vmem:[%s577 + $0x14] sm:$0xf] %vm1994, %v1939
        %2001 = vst.msk [vmem:[%s577 + $0x18] sm:$0xf] %vm1994, %v1940
        %2002 = vst.msk [vmem:[%s577 + $0x1c] sm:$0xf] %vm1994, %v1941
        %2003 = vst.msk [vmem:[%s577 + $0x20] sm:$0xf] %vm1994, %v1942
        %2004 = vst.msk [vmem:[%s577 + $0x24] sm:$0xf] %vm1994, %v1943
        %2005 = vst.msk [vmem:[%s577 + $0x28] sm:$0xf] %vm1994, %v1944
        %2006 = vst.msk [vmem:[%s577 + $0x2c] sm:$0xf] %vm1994, %v1945
        %2007 = vst.msk [vmem:[%s577 + $0x30] sm:$0xf] %vm1994, %v1946
        %2008 = vst.msk [vmem:[%s577 + $0x34] sm:$0xf] %vm1994, %v1947
        %2009 = vst.msk [vmem:[%s577 + $0x38] sm:$0xf] %vm1994, %v1948
        %2010 = vst.msk [vmem:[%s577 + $0x3c] sm:$0xf] %vm1994, %v1949
        %2011 = vst.msk [vmem:[%s577 + $0x40] sm:$0xf] %vm1994, %v1950
        %2012 = vst.msk [vmem:[%s577 + $0x44] sm:$0xf] %vm1994, %v1951
        %2013 = vst.msk [vmem:[%s577 + $0x48] sm:$0xf] %vm1994, %v1952
        %2014 = vst.msk [vmem:[%s577 + $0x4c] sm:$0xf] %vm1994, %v1953
        %2015 = vst.msk [vmem:[%s577 + $0x50] sm:$0xf] %vm1994, %v1954
        %2016 = vst.msk [vmem:[%s577 + $0x54] sm:$0xf] %vm1994, %v1955
        %2017 = vst.msk [vmem:[%s577 + $0x58] sm:$0xf] %vm1994, %v1956
        %2018 = vst.msk [vmem:[%s577 + $0x5c] sm:$0xf] %vm1994, %v1957
        %2019 = vst.msk [vmem:[%s577 + $0x60] sm:$0xf] %vm1994, %v1958
        %2020 = vst.msk [vmem:[%s577 + $0x64] sm:$0xf] %vm1994, %v1959
        %2021 = vst.msk [vmem:[%s577 + $0x68] sm:$0xf] %vm1994, %v1960
        %2022 = vst.msk [vmem:[%s577 + $0x6c] sm:$0xf] %vm1994, %v1961
        %2023 = vst.msk [vmem:[%s577 + $0x70] sm:$0xf] %vm1994, %v1962
        %2024 = vst.msk [vmem:[%s577 + $0x74] sm:$0xf] %vm1994, %v1963
        %s2025 = sand.u32 %s90, 1
        %s2026 = sand.u32 %s90, 1
        %s2027 = smul.addr %s2026, 120
        %s2028 = scalar_lea.vmem [#allocation3], %s2027
        // Predicated region
        $region95: #{forward.4} parent=89 // pred_check
          %p2029 = pneg %p100
        $region96: #{forward.4} parent=89 // pred_check_branch
          %2031 = sbr.rel (%p2029) target = $region98
        $region97: #{forward.4} parent=89 // pred_region
          %s2032 = smul.u32 30, %s14
          %s2033 = ssub.s32 57, %s2032
          %p2034 = scmp.lt.s32.totalorder %s2033, 30
          %s2035 = scalar_select %p2034, %s2033, 30
          %s2036 = smul.u32 64, %s2035
          %p2037 = scmp.ne.s32.totalorder 0, %s2036
          %s2038 = smul.addr %s2032, 4
          %s2039 = scalar_lea.vmem %s3, %s2038
          // Predicated region
          $region99: #{forward.4} parent=97 // pred_check
            %p2040 = pneg %p2037
          $region100: #{forward.4} parent=97 // pred_check_branch
            %2042 = sbr.rel (%p2040) target = $region102
          $region101: #{forward.4} parent=97 // pred_region
            // Predicated region
            $region103: #{forward.4} parent=101 // pred_check
              _
            $region104: #{forward.4} parent=101 // pred_check_branch
              %2044 = sbr.rel target = $region106
            $region105: #{forward.4} parent=101 // pred_region
              // Predicated region
              $region125: #{forward.4} parent=105 // pred_check
                _
              $region126: #{forward.4} parent=105 // pred_check_branch
                %2152 = sbr.rel (0) target = $region128
              $region127: #{forward.4} parent=105 // pred_region
                %s2154 = sdiv.u32.pop %s2035, 30
                %s2155 = srem.u32.pop %s2035, 30
                // While loop
                $region129: #{forward.4} parent=127 // loop_pre_header
                  _
                $region130: #{forward.4} parent=127 // loop_header
                  %s2157 = sphi 0, %s2159
                  %p2158 = scmp.ge.s32.totalorder %s2157, %s2154
                  %s2162 = sphi 0, %s2227
                  %s2163 = sphi %s2028, %s2230
                  %s2164 = sphi %s2039, %s2231
                $region131: #{forward.4} parent=127 // loop_header_branch
                  %2161 = sbr.rel (%p2158) target = $region135
                $region132: #{forward.4} parent=127 // loop_body
                  %v2165 = vld [vmem:[%s2163] sm:$0xf]
                  %2166 = vst [vmem:[%s2164] sm:$0xf] %v2165
                  %v2167 = vld [vmem:[%s2163 + $0x4] sm:$0xf]
                  %2168 = vst [vmem:[%s2164 + $0x4] sm:$0xf] %v2167
                  %v2169 = vld [vmem:[%s2163 + $0x8] sm:$0xf]
                  %2170 = vst [vmem:[%s2164 + $0x8] sm:$0xf] %v2169
                  %v2171 = vld [vmem:[%s2163 + $0xc] sm:$0xf]
                  %2172 = vst [vmem:[%s2164 + $0xc] sm:$0xf] %v2171
                  %v2173 = vld [vmem:[%s2163 + $0x10] sm:$0xf]
                  %2174 = vst [vmem:[%s2164 + $0x10] sm:$0xf] %v2173
                  %v2175 = vld [vmem:[%s2163 + $0x14] sm:$0xf]
                  %2176 = vst [vmem:[%s2164 + $0x14] sm:$0xf] %v2175
                  %v2177 = vld [vmem:[%s2163 + $0x18] sm:$0xf]
                  %2178 = vst [vmem:[%s2164 + $0x18] sm:$0xf] %v2177
                  %v2179 = vld [vmem:[%s2163 + $0x1c] sm:$0xf]
                  %2180 = vst [vmem:[%s2164 + $0x1c] sm:$0xf] %v2179
                  %v2181 = vld [vmem:[%s2163 + $0x20] sm:$0xf]
                  %2182 = vst [vmem:[%s2164 + $0x20] sm:$0xf] %v2181
                  %v2183 = vld [vmem:[%s2163 + $0x24] sm:$0xf]
                  %2184 = vst [vmem:[%s2164 + $0x24] sm:$0xf] %v2183
                  %v2185 = vld [vmem:[%s2163 + $0x28] sm:$0xf]
                  %2186 = vst [vmem:[%s2164 + $0x28] sm:$0xf] %v2185
                  %v2187 = vld [vmem:[%s2163 + $0x2c] sm:$0xf]
                  %2188 = vst [vmem:[%s2164 + $0x2c] sm:$0xf] %v2187
                  %v2189 = vld [vmem:[%s2163 + $0x30] sm:$0xf]
                  %2190 = vst [vmem:[%s2164 + $0x30] sm:$0xf] %v2189
                  %v2191 = vld [vmem:[%s2163 + $0x34] sm:$0xf]
                  %2192 = vst [vmem:[%s2164 + $0x34] sm:$0xf] %v2191
                  %v2193 = vld [vmem:[%s2163 + $0x38] sm:$0xf]
                  %2194 = vst [vmem:[%s2164 + $0x38] sm:$0xf] %v2193
                  %v2195 = vld [vmem:[%s2163 + $0x3c] sm:$0xf]
                  %2196 = vst [vmem:[%s2164 + $0x3c] sm:$0xf] %v2195
                  %v2197 = vld [vmem:[%s2163 + $0x40] sm:$0xf]
                  %2198 = vst [vmem:[%s2164 + $0x40] sm:$0xf] %v2197
                  %v2199 = vld [vmem:[%s2163 + $0x44] sm:$0xf]
                  %2200 = vst [vmem:[%s2164 + $0x44] sm:$0xf] %v2199
                  %v2201 = vld [vmem:[%s2163 + $0x48] sm:$0xf]
                  %2202 = vst [vmem:[%s2164 + $0x48] sm:$0xf] %v2201
                  %v2203 = vld [vmem:[%s2163 + $0x4c] sm:$0xf]
                  %2204 = vst [vmem:[%s2164 + $0x4c] sm:$0xf] %v2203
                  %v2205 = vld [vmem:[%s2163 + $0x50] sm:$0xf]
                  %2206 = vst [vmem:[%s2164 + $0x50] sm:$0xf] %v2205
                  %v2207 = vld [vmem:[%s2163 + $0x54] sm:$0xf]
                  %2208 = vst [vmem:[%s2164 + $0x54] sm:$0xf] %v2207
                  %v2209 = vld [vmem:[%s2163 + $0x58] sm:$0xf]
                  %2210 = vst [vmem:[%s2164 + $0x58] sm:$0xf] %v2209
                  %v2211 = vld [vmem:[%s2163 + $0x5c] sm:$0xf]
                  %2212 = vst [vmem:[%s2164 + $0x5c] sm:$0xf] %v2211
                  %v2213 = vld [vmem:[%s2163 + $0x60] sm:$0xf]
                  %2214 = vst [vmem:[%s2164 + $0x60] sm:$0xf] %v2213
                  %v2215 = vld [vmem:[%s2163 + $0x64] sm:$0xf]
                  %2216 = vst [vmem:[%s2164 + $0x64] sm:$0xf] %v2215
                  %v2217 = vld [vmem:[%s2163 + $0x68] sm:$0xf]
                  %2218 = vst [vmem:[%s2164 + $0x68] sm:$0xf] %v2217
                  %v2219 = vld [vmem:[%s2163 + $0x6c] sm:$0xf]
                  %2220 = vst [vmem:[%s2164 + $0x6c] sm:$0xf] %v2219
                  %v2221 = vld [vmem:[%s2163 + $0x70] sm:$0xf]
                  %2222 = vst [vmem:[%s2164 + $0x70] sm:$0xf] %v2221
                  %v2223 = vld [vmem:[%s2163 + $0x74] sm:$0xf]
                  %2224 = vst [vmem:[%s2164 + $0x74] sm:$0xf] %v2223
                  %s2225 = sadd.s32 1, %s2162
                  %p2226 = scmp.ge.s32.totalorder %s2225, %s2154
                  %s2227 = scalar_select %p2226, 0, %s2225
                  %s2228 = smul.u32 %s2227, 120
                  %s2229 = smul.u32 %s2227, 120
                  %s2230 = scalar_lea.vmem %s2028, %s2228 [#allocation3]
                  %s2231 = scalar_lea.vmem %s2039, %s2229
                $region133: #{forward.4} parent=127 // loop_footer
                  %s2159 = sadd.s32 %s2157, 1
                $region134: #{forward.4} parent=127 // loop_footer_branch
                  %2156 = sbr.rel target = $region130
                $region135: #{forward.4} parent=127 // loop_exit
                  _
                %s2232 = sdiv.u32.pop %s2035, 30
                %s2233 = srem.u32.pop %s2035, 30
                %s2234 = smul.u32 %s2232, 30
                %s2235 = smul.u32 4, %s2234
                %s2236 = scalar_lea.vmem %s2028, %s2235 [#allocation3]
                %s2237 = smul.u32 4, %s2234
                %s2238 = scalar_lea.vmem %s2039, %s2237
                // While loop
                $region136: #{forward.4} parent=127 // loop_pre_header
                  _
                $region137: #{forward.4} parent=127 // loop_header
                  %s2240 = sphi 0, %s2242
                  %p2241 = scmp.ge.s32.totalorder %s2240, %s2233
                  %s2245 = sphi 0, %s2252
                  %s2246 = sphi %s2236, %s2255
                  %s2247 = sphi %s2238, %s2256
                $region138: #{forward.4} parent=127 // loop_header_branch
                  %2244 = sbr.rel (%p2241) target = $region142
                $region139: #{forward.4} parent=127 // loop_body
                  %v2248 = vld [vmem:[%s2246] sm:$0xf]
                  %2249 = vst [vmem:[%s2247] sm:$0xf] %v2248
                  %s2250 = sadd.s32 1, %s2245
                  %p2251 = scmp.ge.s32.totalorder %s2250, %s2233
                  %s2252 = scalar_select %p2251, 0, %s2250
                  %s2253 = smul.u32 %s2252, 4
                  %s2254 = smul.u32 %s2252, 4
                  %s2255 = scalar_lea.vmem %s2236, %s2253 [#allocation3]
                  %s2256 = scalar_lea.vmem %s2238, %s2254
                $region140: #{forward.4} parent=127 // loop_footer
                  %s2242 = sadd.s32 %s2240, 1
                $region141: #{forward.4} parent=127 // loop_footer_branch
                  %2239 = sbr.rel target = $region137
                $region142: #{forward.4} parent=127 // loop_exit
                  _
              $region128: #{forward.4} parent=105 // pred_fallthru
                _
            $region106: #{forward.4} parent=101 // pred_fallthru
              _
            // Predicated region
            $region107: #{forward.4} parent=101 // pred_check
              _
            $region108: #{forward.4} parent=101 // pred_check_branch
              %2046 = sbr.rel (0) target = $region110
            $region109: #{forward.4} parent=101 // pred_region
              %s2048 = sdiv.u32.pop %s2035, 30
              %s2049 = srem.u32.pop %s2035, 30
              // While loop
              $region111: #{forward.4} parent=109 // loop_pre_header
                _
              $region112: #{forward.4} parent=109 // loop_header
                %s2051 = sphi 0, %s2053
                %p2052 = scmp.ge.s32.totalorder %s2051, %s2048
                %s2056 = sphi 0, %s2121
                %s2057 = sphi %s2028, %s2124
                %s2058 = sphi %s2039, %s2125
              $region113: #{forward.4} parent=109 // loop_header_branch
                %2055 = sbr.rel (%p2052) target = $region117
              $region114: #{forward.4} parent=109 // loop_body
                %v2059 = vld [vmem:[%s2057] sm:$0xf]
                %2060 = vst [vmem:[%s2058] sm:$0xf] %v2059
                %v2061 = vld [vmem:[%s2057 + $0x4] sm:$0xf]
                %2062 = vst [vmem:[%s2058 + $0x4] sm:$0xf] %v2061
                %v2063 = vld [vmem:[%s2057 + $0x8] sm:$0xf]
                %2064 = vst [vmem:[%s2058 + $0x8] sm:$0xf] %v2063
                %v2065 = vld [vmem:[%s2057 + $0xc] sm:$0xf]
                %2066 = vst [vmem:[%s2058 + $0xc] sm:$0xf] %v2065
                %v2067 = vld [vmem:[%s2057 + $0x10] sm:$0xf]
                %2068 = vst [vmem:[%s2058 + $0x10] sm:$0xf] %v2067
                %v2069 = vld [vmem:[%s2057 + $0x14] sm:$0xf]
                %2070 = vst [vmem:[%s2058 + $0x14] sm:$0xf] %v2069
                %v2071 = vld [vmem:[%s2057 + $0x18] sm:$0xf]
                %2072 = vst [vmem:[%s2058 + $0x18] sm:$0xf] %v2071
                %v2073 = vld [vmem:[%s2057 + $0x1c] sm:$0xf]
                %2074 = vst [vmem:[%s2058 + $0x1c] sm:$0xf] %v2073
                %v2075 = vld [vmem:[%s2057 + $0x20] sm:$0xf]
                %2076 = vst [vmem:[%s2058 + $0x20] sm:$0xf] %v2075
                %v2077 = vld [vmem:[%s2057 + $0x24] sm:$0xf]
                %2078 = vst [vmem:[%s2058 + $0x24] sm:$0xf] %v2077
                %v2079 = vld [vmem:[%s2057 + $0x28] sm:$0xf]
                %2080 = vst [vmem:[%s2058 + $0x28] sm:$0xf] %v2079
                %v2081 = vld [vmem:[%s2057 + $0x2c] sm:$0xf]
                %2082 = vst [vmem:[%s2058 + $0x2c] sm:$0xf] %v2081
                %v2083 = vld [vmem:[%s2057 + $0x30] sm:$0xf]
                %2084 = vst [vmem:[%s2058 + $0x30] sm:$0xf] %v2083
                %v2085 = vld [vmem:[%s2057 + $0x34] sm:$0xf]
                %2086 = vst [vmem:[%s2058 + $0x34] sm:$0xf] %v2085
                %v2087 = vld [vmem:[%s2057 + $0x38] sm:$0xf]
                %2088 = vst [vmem:[%s2058 + $0x38] sm:$0xf] %v2087
                %v2089 = vld [vmem:[%s2057 + $0x3c] sm:$0xf]
                %2090 = vst [vmem:[%s2058 + $0x3c] sm:$0xf] %v2089
                %v2091 = vld [vmem:[%s2057 + $0x40] sm:$0xf]
                %2092 = vst [vmem:[%s2058 + $0x40] sm:$0xf] %v2091
                %v2093 = vld [vmem:[%s2057 + $0x44] sm:$0xf]
                %2094 = vst [vmem:[%s2058 + $0x44] sm:$0xf] %v2093
                %v2095 = vld [vmem:[%s2057 + $0x48] sm:$0xf]
                %2096 = vst [vmem:[%s2058 + $0x48] sm:$0xf] %v2095
                %v2097 = vld [vmem:[%s2057 + $0x4c] sm:$0xf]
                %2098 = vst [vmem:[%s2058 + $0x4c] sm:$0xf] %v2097
                %v2099 = vld [vmem:[%s2057 + $0x50] sm:$0xf]
                %2100 = vst [vmem:[%s2058 + $0x50] sm:$0xf] %v2099
                %v2101 = vld [vmem:[%s2057 + $0x54] sm:$0xf]
                %2102 = vst [vmem:[%s2058 + $0x54] sm:$0xf] %v2101
                %v2103 = vld [vmem:[%s2057 + $0x58] sm:$0xf]
                %2104 = vst [vmem:[%s2058 + $0x58] sm:$0xf] %v2103
                %v2105 = vld [vmem:[%s2057 + $0x5c] sm:$0xf]
                %2106 = vst [vmem:[%s2058 + $0x5c] sm:$0xf] %v2105
                %v2107 = vld [vmem:[%s2057 + $0x60] sm:$0xf]
                %2108 = vst [vmem:[%s2058 + $0x60] sm:$0xf] %v2107
                %v2109 = vld [vmem:[%s2057 + $0x64] sm:$0xf]
                %2110 = vst [vmem:[%s2058 + $0x64] sm:$0xf] %v2109
                %v2111 = vld [vmem:[%s2057 + $0x68] sm:$0xf]
                %2112 = vst [vmem:[%s2058 + $0x68] sm:$0xf] %v2111
                %v2113 = vld [vmem:[%s2057 + $0x6c] sm:$0xf]
                %2114 = vst [vmem:[%s2058 + $0x6c] sm:$0xf] %v2113
                %v2115 = vld [vmem:[%s2057 + $0x70] sm:$0xf]
                %2116 = vst [vmem:[%s2058 + $0x70] sm:$0xf] %v2115
                %v2117 = vld [vmem:[%s2057 + $0x74] sm:$0xf]
                %2118 = vst [vmem:[%s2058 + $0x74] sm:$0xf] %v2117
                %s2119 = sadd.s32 1, %s2056
                %p2120 = scmp.ge.s32.totalorder %s2119, %s2048
                %s2121 = scalar_select %p2120, 0, %s2119
                %s2122 = smul.u32 %s2121, 120
                %s2123 = smul.u32 %s2121, 120
                %s2124 = scalar_lea.vmem %s2028, %s2122 [#allocation3]
                %s2125 = scalar_lea.vmem %s2039, %s2123
              $region115: #{forward.4} parent=109 // loop_footer
                %s2053 = sadd.s32 %s2051, 1
              $region116: #{forward.4} parent=109 // loop_footer_branch
                %2050 = sbr.rel target = $region112
              $region117: #{forward.4} parent=109 // loop_exit
                _
              %s2126 = sdiv.u32.pop %s2035, 30
              %s2127 = srem.u32.pop %s2035, 30
              %s2128 = smul.u32 %s2126, 30
              %s2129 = smul.u32 4, %s2128
              %s2130 = scalar_lea.vmem %s2028, %s2129 [#allocation3]
              %s2131 = smul.u32 4, %s2128
              %s2132 = scalar_lea.vmem %s2039, %s2131
              // While loop
              $region118: #{forward.4} parent=109 // loop_pre_header
                _
              $region119: #{forward.4} parent=109 // loop_header
                %s2134 = sphi 0, %s2136
                %p2135 = scmp.ge.s32.totalorder %s2134, %s2127
                %s2139 = sphi 0, %s2146
                %s2140 = sphi %s2130, %s2149
                %s2141 = sphi %s2132, %s2150
              $region120: #{forward.4} parent=109 // loop_header_branch
                %2138 = sbr.rel (%p2135) target = $region124
              $region121: #{forward.4} parent=109 // loop_body
                %v2142 = vld [vmem:[%s2140] sm:$0xf]
                %2143 = vst [vmem:[%s2141] sm:$0xf] %v2142
                %s2144 = sadd.s32 1, %s2139
                %p2145 = scmp.ge.s32.totalorder %s2144, %s2127
                %s2146 = scalar_select %p2145, 0, %s2144
                %s2147 = smul.u32 %s2146, 4
                %s2148 = smul.u32 %s2146, 4
                %s2149 = scalar_lea.vmem %s2130, %s2147 [#allocation3]
                %s2150 = scalar_lea.vmem %s2132, %s2148
              $region122: #{forward.4} parent=109 // loop_footer
                %s2136 = sadd.s32 %s2134, 1
              $region123: #{forward.4} parent=109 // loop_footer_branch
                %2133 = sbr.rel target = $region119
              $region124: #{forward.4} parent=109 // loop_exit
                _
            $region110: #{forward.4} parent=101 // pred_fallthru
              _
          $region102: #{forward.4} parent=97 // pred_fallthru
            _
          %2257 = vnop
        $region98: #{forward.4} parent=89 // pred_fallthru
          _
      $region90: #{forward.4} parent=5 // pred_fallthru
        _
      %p2258 = scmp.le.s32.totalorder 2, %s9
      // Predicated region
      $region143: #{forward.4} parent=5 // pred_check
        %p2259 = pneg %p2258
      $region144: #{forward.4} parent=5 // pred_check_branch
        %2261 = sbr.rel (%p2259) target = $region146
      $region145: #{forward.4} parent=5 // pred_region
        %s2262 = ssub.s32 %s9, 2
        // Predicated region
        $region147: #{forward.4} parent=145 // pred_check
          %p2263 = pneg %p106
        $region148: #{forward.4} parent=145 // pred_check_branch
          %2265 = sbr.rel (%p2263) target = $region150
        $region149: #{forward.4} parent=145 // pred_region
          %s2266 = sand.u32 %s91, 1
          %s2267 = sand.u32 %s91, 1
          %s2268 = smul.addr %s2267, 120
          %s2269 = scalar_lea.vmem [#allocation3], %s2268
        $region150: #{forward.4} parent=145 // pred_fallthru
          _
      $region146: #{forward.4} parent=5 // pred_fallthru
        _
    $region6: #{forward.4} parent=1 // loop_footer
      %s13 = sadd.s32 1, %s9
    $region7: #{forward.4} parent=1 // loop_footer_branch
      %8 = sbr.rel target = $region3
    $region8: #{forward.4} parent=1 // loop_exit
      _

// kernel: forward.5
$region0: #{forward.5}
  #allocation0 [shape = 'u32[]', space=smem, size = 0x4, offset = 0x4, fixed_abs, tag = 'smem constant byte address 0x4 - core index']
  #allocation1 [shape = 'u32[144,128]{1,0:T(1,128)}', space=vmem, size = 0x12000, scoped, tag = 'internal scratch']
  %s0 = inlined_call_operand.vmem [shape: bf16[4,98,24], index: 0, kind: input, shape index: {}]
  %s1 = inlined_call_operand.vmem [shape: bf16[24,18], index: 1, kind: input, shape index: {}]
  %s2 = inlined_call_operand.vmem [shape: f32[1,18], index: 2, kind: input, shape index: {}]
  %s3 = inlined_call_operand.vmem [shape: bf16[98,18], index: 3, kind: output, shape index: {}]
  %s4 = sld [smem:[#allocation0]]
  $region151: #{forward.5} parent=0
    _
  %s6 = ssub.s32 1, %s4
  %s7 = scalar_select 0, %s6, %s4
  $region1: #{forward.5} parent=0
    #allocation2 [shape = 'u8[131072]{0}', space=vmem, size = 0x20000, scoped, tag = 'input window, operand 0']
    #allocation3 [shape = 'u8[32768]{0}', space=vmem, size = 0x8000, scoped, tag = 'output window, operand 0']
    loop: start=0, step=1, limit=4
    $region2: #{forward.5} parent=1 // loop_pre_header
      _
    $region3: #{forward.5} parent=1 // loop_header
      %s9 = sphi 0, %s13
      %p10 = scmp.ge.s32.totalorder %s9, 4
      %s19 = sphi 0, %s21
      %s22 = sphi 0, %s19
      %s23 = sphi 0, %s22
      %s39 = sphi 0, %s23
      %s43 = sphi 0, %s43
      %s45 = sphi 0, %s43
      %s46 = sphi 0, %s45
      %s60 = sphi 0, %s46
      %s64 = sphi 0, %s64
      %s66 = sphi 0, %s64
      %s67 = sphi 0, %s66
      %s81 = sphi 0, %s67
      %s87 = sphi 0, %s89
      %s90 = sphi 0, %s87
      %s91 = sphi 0, %s90
      %s107 = sphi 0, %s91
    $region4: #{forward.5} parent=1 // loop_header_branch
      %12 = sbr.rel (%p10) target = $region8
    $region5: #{forward.5} parent=1 // loop_body
      %s14 = ssub.s32 %s9, 1
      %s15 = ssub.s32 %s9, 2
      %s16 = sadd.s32 %s9, 1
      %s17 = ssub.s32 %s9, %s16
      %p18 = scmp.eq.s32.totalorder %s17, 0
      %s20 = sadd.s32 %s19, 1
      %s21 = scalar_select %p18, %s19, %s20
      %p24 = pneg %p18
      %p25 = scmp.eq.s32.totalorder %s9, 1
      %p26 = por %p24, %p25
      %p27 = scmp.ne.s32.totalorder %s19, %s22
      %p28 = scmp.eq.s32.totalorder %s9, 0
      %p29 = por %p27, %p28
      %p30 = scmp.ne.s32.totalorder %s19, %s22
      %p31 = scmp.eq.s32.totalorder %s14, 1
      %p32 = por %p30, %p31
      %p33 = scmp.ne.s32.totalorder %s22, %s23
      %p34 = scmp.eq.s32.totalorder %s14, 0
      %p35 = por %p33, %p34
      %p36 = scmp.ne.s32.totalorder %s22, %s23
      %p37 = scmp.eq.s32.totalorder %s15, 1
      %p38 = por %p36, %p37
      %p40 = scmp.ne.s32.totalorder %s23, %s39
      %p41 = scmp.eq.s32.totalorder %s15, 0
      %p42 = por %p40, %p41
      %s44 = sadd.s32 %s43, 1
      %p47 = scmp.eq.s32.totalorder %s9, 1
      %p48 = scmp.ne.s32.totalorder %s43, %s45
      %p49 = scmp.eq.s32.totalorder %s9, 0
      %p50 = por %p48, %p49
      %p51 = scmp.ne.s32.totalorder %s43, %s45
      %p52 = scmp.eq.s32.totalorder %s14, 1
      %p53 = por %p51, %p52
      %p54 = scmp.ne.s32.totalorder %s45, %s46
      %p55 = scmp.eq.s32.totalorder %s14, 0
      %p56 = por %p54, %p55
      %p57 = scmp.ne.s32.totalorder %s45, %s46
      %p58 = scmp.eq.s32.totalorder %s15, 1
      %p59 = por %p57, %p58
      %p61 = scmp.ne.s32.totalorder %s46, %s60
      %p62 = scmp.eq.s32.totalorder %s15, 0
      %p63 = por %p61, %p62
      %s65 = sadd.s32 %s64, 1
      %p68 = scmp.eq.s32.totalorder %s9, 1
      %p69 = scmp.ne.s32.totalorder %s64, %s66
      %p70 = scmp.eq.s32.totalorder %s9, 0
      %p71 = por %p69, %p70
      %p72 = scmp.ne.s32.totalorder %s64, %s66
      %p73 = scmp.eq.s32.totalorder %s14, 1
      %p74 = por %p72, %p73
      %p75 = scmp.ne.s32.totalorder %s66, %s67
      %p76 = scmp.eq.s32.totalorder %s14, 0
      %p77 = por %p75, %p76
      %p78 = scmp.ne.s32.totalorder %s66, %s67
      %p79 = scmp.eq.s32.totalorder %s15, 1
      %p80 = por %p78, %p79
      %p82 = scmp.ne.s32.totalorder %s67, %s81
      %p83 = scmp.eq.s32.totalorder %s15, 0
      %p84 = por %p82, %p83
      %s85 = ssub.s32 %s9, %s16
      %p86 = scmp.eq.s32.totalorder %s85, 0
      %s88 = sadd.s32 %s87, 1
      %s89 = scalar_select %p86, %s87, %s88
      %p92 = pneg %p86
      %p93 = scmp.eq.s32.totalorder %s9, 1
      %p94 = por %p92, %p93
      %p95 = scmp.ne.s32.totalorder %s87, %s90
      %p96 = scmp.eq.s32.totalorder %s9, 0
      %p97 = por %p95, %p96
      %p98 = scmp.ne.s32.totalorder %s87, %s90
      %p99 = scmp.eq.s32.totalorder %s14, 1
      %p100 = por %p98, %p99
      %p101 = scmp.ne.s32.totalorder %s90, %s91
      %p102 = scmp.eq.s32.totalorder %s14, 0
      %p103 = por %p101, %p102
      %p104 = scmp.ne.s32.totalorder %s90, %s91
      %p105 = scmp.eq.s32.totalorder %s15, 1
      %p106 = por %p104, %p105
      %p108 = scmp.ne.s32.totalorder %s91, %s107
      %p109 = scmp.eq.s32.totalorder %s15, 0
      %p110 = por %p108, %p109
      %p111 = scmp.le.s32.totalorder 1, %s9
      %p112 = scmp.lt.s32.totalorder %s9, 3
      %p113 = pnand %p111, %p112
      %p114 = pneg %p113
      // Predicated region
      $region9: #{forward.5} parent=5 // pred_check
        _
      $region10: #{forward.5} parent=5 // pred_check_branch
        %116 = sbr.rel (%p113) target = $region12
      $region11: #{forward.5} parent=5 // pred_region
        %s117 = ssub.s32 %s9, 1
        // Predicated region
        $region13: #{forward.5} parent=11 // pred_check
          %p118 = pneg %p56
        $region14: #{forward.5} parent=11 // pred_check_branch
          %120 = sbr.rel (%p118) target = $region16
        $region15: #{forward.5} parent=11 // pred_region
          _
        $region16: #{forward.5} parent=11 // pred_fallthru
          _
        // Predicated region
        $region17: #{forward.5} parent=11 // pred_check
          %p121 = pneg %p77
        $region18: #{forward.5} parent=11 // pred_check_branch
          %123 = sbr.rel (%p121) target = $region20
        $region19: #{forward.5} parent=11 // pred_region
          _
        $region20: #{forward.5} parent=11 // pred_fallthru
          _
      $region12: #{forward.5} parent=5 // pred_fallthru
        _
      %p124 = scmp.lt.s32.totalorder %s9, 2
      // Predicated region
      $region21: #{forward.5} parent=5 // pred_check
        %p125 = pneg %p124
      $region22: #{forward.5} parent=5 // pred_check_branch
        %127 = sbr.rel (%p125) target = $region24
      $region23: #{forward.5} parent=5 // pred_region
        // Predicated region
        $region25: #{forward.5} parent=23 // pred_check
          %p128 = pneg %p29
        $region26: #{forward.5} parent=23 // pred_check_branch
          %130 = sbr.rel (%p128) target = $region28
        $region27: #{forward.5} parent=23 // pred_region
          %s131 = sand.u32 %s19, 1
          %s132 = sand.u32 %s19, 1
          %s133 = smul.addr %s132, 128
          %s134 = scalar_lea.vmem [#allocation2], %s133
          %s135 = smul.u32 8, %s9
          %s136 = ssub.s32 13, %s135
          %p137 = scmp.lt.s32.totalorder %s136, 8
          %s138 = scalar_select %p137, %s136, 8
          %s139 = smul.u32 256, %s138
          %p140 = scmp.ne.s32.totalorder 0, %s139
          %s141 = smul.addr %s135, 4
          %s142 = scalar_lea.vmem %s0, %s141
          // Predicated region
          $region29: #{forward.5} parent=27 // pred_check
            %p143 = pneg %p140
          $region30: #{forward.5} parent=27 // pred_check_branch
            %145 = sbr.rel (%p143) target = $region32
          $region31: #{forward.5} parent=27 // pred_region
            // Predicated region
            $region33: #{forward.5} parent=31 // pred_check
              _
            $region34: #{forward.5} parent=31 // pred_check_branch
              %147 = sbr.rel target = $region36
            $region35: #{forward.5} parent=31 // pred_region
              // Predicated region
              $region55: #{forward.5} parent=35 // pred_check
                _
              $region56: #{forward.5} parent=35 // pred_check_branch
                %264 = sbr.rel (0) target = $region58
              $region57: #{forward.5} parent=35 // pred_region
                %s265 = sshrl.u32 %s138, 3
                // While loop
                $region59: #{forward.5} parent=57 // loop_pre_header
                  _
                $region60: #{forward.5} parent=57 // loop_header
                  %s267 = sphi 0, %s269
                  %p268 = scmp.ge.s32.totalorder %s267, %s265
                  %s272 = sphi 0, %s277
                  %s273 = sphi %s142, %s280
                  %s274 = sphi %s134, %s281
                $region61: #{forward.5} parent=57 // loop_header_branch
                  %271 = sbr.rel (%p268) target = $region65
                $region62: #{forward.5} parent=57 // loop_body
                  %s275 = sadd.s32 1, %s272
                  %p276 = scmp.ge.s32.totalorder %s275, %s265
                  %s277 = scalar_select %p276, 0, %s275
                  %s278 = smul.u32 %s277, 32
                  %s279 = smul.u32 %s277, 32
                  %s280 = scalar_lea.vmem %s142, %s278
                  %s281 = scalar_lea.vmem %s134, %s279 [#allocation2]
                $region63: #{forward.5} parent=57 // loop_footer
                  %s269 = sadd.s32 %s267, 1
                $region64: #{forward.5} parent=57 // loop_footer_branch
                  %266 = sbr.rel target = $region60
                $region65: #{forward.5} parent=57 // loop_exit
                  _
                %s282 = sshrl.u32 %s138, 3
                %s283 = sand.u32 %s138, 7
                %s284 = smul.u32 %s282, 8
                %s285 = smul.u32 4, %s284
                %s286 = scalar_lea.vmem %s142, %s285
                %s287 = smul.u32 4, %s284
                %s288 = scalar_lea.vmem %s134, %s287 [#allocation2]
                // While loop
                $region66: #{forward.5} parent=57 // loop_pre_header
                  _
                $region67: #{forward.5} parent=57 // loop_header
                  %s290 = sphi 0, %s292
                  %p291 = scmp.ge.s32.totalorder %s290, %s283
                  %s295 = sphi 0, %s300
                  %s296 = sphi %s286, %s303
                  %s297 = sphi %s288, %s304
                $region68: #{forward.5} parent=57 // loop_header_branch
                  %294 = sbr.rel (%p291) target = $region72
                $region69: #{forward.5} parent=57 // loop_body
                  %s298 = sadd.s32 1, %s295
                  %p299 = scmp.ge.s32.totalorder %s298, %s283
                  %s300 = scalar_select %p299, 0, %s298
                  %s301 = smul.u32 %s300, 4
                  %s302 = smul.u32 %s300, 4
                  %s303 = scalar_lea.vmem %s286, %s301
                  %s304 = scalar_lea.vmem %s288, %s302 [#allocation2]
                $region70: #{forward.5} parent=57 // loop_footer
                  %s292 = sadd.s32 %s290, 1
                $region71: #{forward.5} parent=57 // loop_footer_branch
                  %289 = sbr.rel target = $region67
                $region72: #{forward.5} parent=57 // loop_exit
                  _
                %s306 = sshrl.u32 %s138, 3
                // While loop
                $region73: #{forward.5} parent=57 // loop_pre_header
                  _
                $region74: #{forward.5} parent=57 // loop_header
                  %s308 = sphi 0, %s310
                  %p309 = scmp.ge.s32.totalorder %s308, %s306
                  %s313 = sphi 0, %s382
                  %s314 = sphi %s142, %s385
                  %s315 = sphi %s134, %s386
                $region75: #{forward.5} parent=57 // loop_header_branch
                  %312 = sbr.rel (%p309) target = $region79
                $region76: #{forward.5} parent=57 // loop_body
                  %v316 = vld [vmem:[%s314] sm:$0xf]
                  %317 = vst [vmem:[%s315] sm:$0xf] %v316
                  %v318 = vld [vmem:[%s314 + $0x4] sm:$0xf]
                  %319 = vst [vmem:[%s315 + $0x4] sm:$0xf] %v318
                  %v320 = vld [vmem:[%s314 + $0x8] sm:$0xf]
                  %321 = vst [vmem:[%s315 + $0x8] sm:$0xf] %v320
                  %v322 = vld [vmem:[%s314 + $0xc] sm:$0xf]
                  %323 = vst [vmem:[%s315 + $0xc] sm:$0xf] %v322
                  %v324 = vld [vmem:[%s314 + $0x10] sm:$0xf]
                  %325 = vst [vmem:[%s315 + $0x10] sm:$0xf] %v324
                  %v326 = vld [vmem:[%s314 + $0x14] sm:$0xf]
                  %327 = vst [vmem:[%s315 + $0x14] sm:$0xf] %v326
                  %v328 = vld [vmem:[%s314 + $0x18] sm:$0xf]
                  %329 = vst [vmem:[%s315 + $0x18] sm:$0xf] %v328
                  %v330 = vld [vmem:[%s314 + $0x1c] sm:$0xf]
                  %331 = vst [vmem:[%s315 + $0x1c] sm:$0xf] %v330
                  %v332 = vld [vmem:[%s314 + $0x34] sm:$0xf]
                  %333 = vst [vmem:[%s315 + $0x20] sm:$0xf] %v332
                  %v334 = vld [vmem:[%s314 + $0x38] sm:$0xf]
                  %335 = vst [vmem:[%s315 + $0x24] sm:$0xf] %v334
                  %v336 = vld [vmem:[%s314 + $0x3c] sm:$0xf]
                  %337 = vst [vmem:[%s315 + $0x28] sm:$0xf] %v336
                  %v338 = vld [vmem:[%s314 + $0x40] sm:$0xf]
                  %339 = vst [vmem:[%s315 + $0x2c] sm:$0xf] %v338
                  %v340 = vld [vmem:[%s314 + $0x44] sm:$0xf]
                  %341 = vst [vmem:[%s315 + $0x30] sm:$0xf] %v340
                  %v342 = vld [vmem:[%s314 + $0x48] sm:$0xf]
                  %343 = vst [vmem:[%s315 + $0x34] sm:$0xf] %v342
                  %v344 = vld [vmem:[%s314 + $0x4c] sm:$0xf]
                  %345 = vst [vmem:[%s315 + $0x38] sm:$0xf] %v344
                  %v346 = vld [vmem:[%s314 + $0x50] sm:$0xf]
                  %347 = vst [vmem:[%s315 + $0x3c] sm:$0xf] %v346
                  %v348 = vld [vmem:[%s314 + $0x68] sm:$0xf]
                  %349 = vst [vmem:[%s315 + $0x40] sm:$0xf] %v348
                  %v350 = vld [vmem:[%s314 + $0x6c] sm:$0xf]
                  %351 = vst [vmem:[%s315 + $0x44] sm:$0xf] %v350
                  %v352 = vld [vmem:[%s314 + $0x70] sm:$0xf]
                  %353 = vst [vmem:[%s315 + $0x48] sm:$0xf] %v352
                  %v354 = vld [vmem:[%s314 + $0x74] sm:$0xf]
                  %355 = vst [vmem:[%s315 + $0x4c] sm:$0xf] %v354
                  %v356 = vld [vmem:[%s314 + $0x78] sm:$0xf]
                  %357 = vst [vmem:[%s315 + $0x50] sm:$0xf] %v356
                  %v358 = vld [vmem:[%s314 + $0x7c] sm:$0xf]
                  %359 = vst [vmem:[%s315 + $0x54] sm:$0xf] %v358
                  %v360 = vld [vmem:[%s314 + $0x80] sm:$0xf]
                  %361 = vst [vmem:[%s315 + $0x58] sm:$0xf] %v360
                  %v362 = vld [vmem:[%s314 + $0x84] sm:$0xf]
                  %363 = vst [vmem:[%s315 + $0x5c] sm:$0xf] %v362
                  %v364 = vld [vmem:[%s314 + $0x9c] sm:$0xf]
                  %365 = vst [vmem:[%s315 + $0x60] sm:$0xf] %v364
                  %v366 = vld [vmem:[%s314 + $0xa0] sm:$0xf]
                  %367 = vst [vmem:[%s315 + $0x64] sm:$0xf] %v366
                  %v368 = vld [vmem:[%s314 + $0xa4] sm:$0xf]
                  %369 = vst [vmem:[%s315 + $0x68] sm:$0xf] %v368
                  %v370 = vld [vmem:[%s314 + $0xa8] sm:$0xf]
                  %371 = vst [vmem:[%s315 + $0x6c] sm:$0xf] %v370
                  %v372 = vld [vmem:[%s314 + $0xac] sm:$0xf]
                  %373 = vst [vmem:[%s315 + $0x70] sm:$0xf] %v372
                  %v374 = vld [vmem:[%s314 + $0xb0] sm:$0xf]
                  %375 = vst [vmem:[%s315 + $0x74] sm:$0xf] %v374
                  %v376 = vld [vmem:[%s314 + $0xb4] sm:$0xf]
                  %377 = vst [vmem:[%s315 + $0x78] sm:$0xf] %v376
                  %v378 = vld [vmem:[%s314 + $0xb8] sm:$0xf]
                  %379 = vst [vmem:[%s315 + $0x7c] sm:$0xf] %v378
                  %s380 = sadd.s32 1, %s313
                  %p381 = scmp.ge.s32.totalorder %s380, %s306
                  %s382 = scalar_select %p381, 0, %s380
                  %s383 = smul.u32 %s382, 32
                  %s384 = smul.u32 %s382, 32
                  %s385 = scalar_lea.vmem %s142, %s383
                  %s386 = scalar_lea.vmem %s134, %s384 [#allocation2]
                $region77: #{forward.5} parent=57 // loop_footer
                  %s310 = sadd.s32 %s308, 1
                $region78: #{forward.5} parent=57 // loop_footer_branch
                  %307 = sbr.rel target = $region74
                $region79: #{forward.5} parent=57 // loop_exit
                  _
                %s387 = sshrl.u32 %s138, 3
                %s388 = sand.u32 %s138, 7
                %s389 = smul.u32 %s387, 8
                %s390 = smul.u32 4, %s389
                %s391 = scalar_lea.vmem %s142, %s390
                %s392 = smul.u32 4, %s389
                %s393 = scalar_lea.vmem %s134, %s392 [#allocation2]
                // While loop
                $region80: #{forward.5} parent=57 // loop_pre_header
                  _
                $region81: #{forward.5} parent=57 // loop_header
                  %s395 = sphi 0, %s397
                  %p396 = scmp.ge.s32.totalorder %s395, %s388
                  %s400 = sphi 0, %s413
                  %s401 = sphi %s391, %s416
                  %s402 = sphi %s393, %s417
                $region82: #{forward.5} parent=57 // loop_header_branch
                  %399 = sbr.rel (%p396) target = $region86
                $region83: #{forward.5} parent=57 // loop_body
                  %v403 = vld [vmem:[%s401] sm:$0xf]
                  %404 = vst [vmem:[%s402] sm:$0xf] %v403
                  %v405 = vld [vmem:[%s401 + $0x34] sm:$0xf]
                  %406 = vst [vmem:[%s402 + $0x20] sm:$0xf] %v405
                  %v407 = vld [vmem:[%s401 + $0x68] sm:$0xf]
                  %408 = vst [vmem:[%s402 + $0x40] sm:$0xf] %v407
                  %v409 = vld [vmem:[%s401 + $0x9c] sm:$0xf]
                  %410 = vst [vmem:[%s402 + $0x60] sm:$0xf] %v409
                  %s411 = sadd.s32 1, %s400
                  %p412 = scmp.ge.s32.totalorder %s411, %s388
                  %s413 = scalar_select %p412, 0, %s411
                  %s414 = smul.u32 %s413, 4
                  %s415 = smul.u32 %s413, 4
                  %s416 = scalar_lea.vmem %s391, %s414
                  %s417 = scalar_lea.vmem %s393, %s415 [#allocation2]
                $region84: #{forward.5} parent=57 // loop_footer
                  %s397 = sadd.s32 %s395, 1
                $region85: #{forward.5} parent=57 // loop_footer_branch
                  %394 = sbr.rel target = $region81
                $region86: #{forward.5} parent=57 // loop_exit
                  _
              $region58: #{forward.5} parent=35 // pred_fallthru
                _
            $region36: #{forward.5} parent=31 // pred_fallthru
              _
            // Predicated region
            $region37: #{forward.5} parent=31 // pred_check
              _
            $region38: #{forward.5} parent=31 // pred_check_branch
              %149 = sbr.rel (0) target = $region40
            $region39: #{forward.5} parent=31 // pred_region
              %s151 = sshrl.u32 %s138, 3
              // While loop
              $region41: #{forward.5} parent=39 // loop_pre_header
                _
              $region42: #{forward.5} parent=39 // loop_header
                %s153 = sphi 0, %s155
                %p154 = scmp.ge.s32.totalorder %s153, %s151
                %s158 = sphi 0, %s227
                %s159 = sphi %s142, %s230
                %s160 = sphi %s134, %s231
              $region43: #{forward.5} parent=39 // loop_header_branch
                %157 = sbr.rel (%p154) target = $region47
              $region44: #{forward.5} parent=39 // loop_body
                %v161 = vld [vmem:[%s159] sm:$0xf]
                %162 = vst [vmem:[%s160] sm:$0xf] %v161
                %v163 = vld [vmem:[%s159 + $0x4] sm:$0xf]
                %164 = vst [vmem:[%s160 + $0x4] sm:$0xf] %v163
                %v165 = vld [vmem:[%s159 + $0x8] sm:$0xf]
                %166 = vst [vmem:[%s160 + $0x8] sm:$0xf] %v165
                %v167 = vld [vmem:[%s159 + $0xc] sm:$0xf]
                %168 = vst [vmem:[%s160 + $0xc] sm:$0xf] %v167
                %v169 = vld [vmem:[%s159 + $0x10] sm:$0xf]
                %170 = vst [vmem:[%s160 + $0x10] sm:$0xf] %v169
                %v171 = vld [vmem:[%s159 + $0x14] sm:$0xf]
                %172 = vst [vmem:[%s160 + $0x14] sm:$0xf] %v171
                %v173 = vld [vmem:[%s159 + $0x18] sm:$0xf]
                %174 = vst [vmem:[%s160 + $0x18] sm:$0xf] %v173
                %v175 = vld [vmem:[%s159 + $0x1c] sm:$0xf]
                %176 = vst [vmem:[%s160 + $0x1c] sm:$0xf] %v175
                %v177 = vld [vmem:[%s159 + $0x34] sm:$0xf]
                %178 = vst [vmem:[%s160 + $0x20] sm:$0xf] %v177
                %v179 = vld [vmem:[%s159 + $0x38] sm:$0xf]
                %180 = vst [vmem:[%s160 + $0x24] sm:$0xf] %v179
                %v181 = vld [vmem:[%s159 + $0x3c] sm:$0xf]
                %182 = vst [vmem:[%s160 + $0x28] sm:$0xf] %v181
                %v183 = vld [vmem:[%s159 + $0x40] sm:$0xf]
                %184 = vst [vmem:[%s160 + $0x2c] sm:$0xf] %v183
                %v185 = vld [vmem:[%s159 + $0x44] sm:$0xf]
                %186 = vst [vmem:[%s160 + $0x30] sm:$0xf] %v185
                %v187 = vld [vmem:[%s159 + $0x48] sm:$0xf]
                %188 = vst [vmem:[%s160 + $0x34] sm:$0xf] %v187
                %v189 = vld [vmem:[%s159 + $0x4c] sm:$0xf]
                %190 = vst [vmem:[%s160 + $0x38] sm:$0xf] %v189
                %v191 = vld [vmem:[%s159 + $0x50] sm:$0xf]
                %192 = vst [vmem:[%s160 + $0x3c] sm:$0xf] %v191
                %v193 = vld [vmem:[%s159 + $0x68] sm:$0xf]
                %194 = vst [vmem:[%s160 + $0x40] sm:$0xf] %v193
                %v195 = vld [vmem:[%s159 + $0x6c] sm:$0xf]
                %196 = vst [vmem:[%s160 + $0x44] sm:$0xf] %v195
                %v197 = vld [vmem:[%s159 + $0x70] sm:$0xf]
                %198 = vst [vmem:[%s160 + $0x48] sm:$0xf] %v197
                %v199 = vld [vmem:[%s159 + $0x74] sm:$0xf]
                %200 = vst [vmem:[%s160 + $0x4c] sm:$0xf] %v199
                %v201 = vld [vmem:[%s159 + $0x78] sm:$0xf]
                %202 = vst [vmem:[%s160 + $0x50] sm:$0xf] %v201
                %v203 = vld [vmem:[%s159 + $0x7c] sm:$0xf]
                %204 = vst [vmem:[%s160 + $0x54] sm:$0xf] %v203
                %v205 = vld [vmem:[%s159 + $0x80] sm:$0xf]
                %206 = vst [vmem:[%s160 + $0x58] sm:$0xf] %v205
                %v207 = vld [vmem:[%s159 + $0x84] sm:$0xf]
                %208 = vst [vmem:[%s160 + $0x5c] sm:$0xf] %v207
                %v209 = vld [vmem:[%s159 + $0x9c] sm:$0xf]
                %210 = vst [vmem:[%s160 + $0x60] sm:$0xf] %v209
                %v211 = vld [vmem:[%s159 + $0xa0] sm:$0xf]
                %212 = vst [vmem:[%s160 + $0x64] sm:$0xf] %v211
                %v213 = vld [vmem:[%s159 + $0xa4] sm:$0xf]
                %214 = vst [vmem:[%s160 + $0x68] sm:$0xf] %v213
                %v215 = vld [vmem:[%s159 + $0xa8] sm:$0xf]
                %216 = vst [vmem:[%s160 + $0x6c] sm:$0xf] %v215
                %v217 = vld [vmem:[%s159 + $0xac] sm:$0xf]
                %218 = vst [vmem:[%s160 + $0x70] sm:$0xf] %v217
                %v219 = vld [vmem:[%s159 + $0xb0] sm:$0xf]
                %220 = vst [vmem:[%s160 + $0x74] sm:$0xf] %v219
                %v221 = vld [vmem:[%s159 + $0xb4] sm:$0xf]
                %222 = vst [vmem:[%s160 + $0x78] sm:$0xf] %v221
                %v223 = vld [vmem:[%s159 + $0xb8] sm:$0xf]
                %224 = vst [vmem:[%s160 + $0x7c] sm:$0xf] %v223
                %s225 = sadd.s32 1, %s158
                %p226 = scmp.ge.s32.totalorder %s225, %s151
                %s227 = scalar_select %p226, 0, %s225
                %s228 = smul.u32 %s227, 32
                %s229 = smul.u32 %s227, 32
                %s230 = scalar_lea.vmem %s142, %s228
                %s231 = scalar_lea.vmem %s134, %s229 [#allocation2]
              $region45: #{forward.5} parent=39 // loop_footer
                %s155 = sadd.s32 %s153, 1
              $region46: #{forward.5} parent=39 // loop_footer_branch
                %152 = sbr.rel target = $region42
              $region47: #{forward.5} parent=39 // loop_exit
                _
              %s232 = sshrl.u32 %s138, 3
              %s233 = sand.u32 %s138, 7
              %s234 = smul.u32 %s232, 8
              %s235 = smul.u32 4, %s234
              %s236 = scalar_lea.vmem %s142, %s235
              %s237 = smul.u32 4, %s234
              %s238 = scalar_lea.vmem %s134, %s237 [#allocation2]
              // While loop
              $region48: #{forward.5} parent=39 // loop_pre_header
                _
              $region49: #{forward.5} parent=39 // loop_header
                %s240 = sphi 0, %s242
                %p241 = scmp.ge.s32.totalorder %s240, %s233
                %s245 = sphi 0, %s258
                %s246 = sphi %s236, %s261
                %s247 = sphi %s238, %s262
              $region50: #{forward.5} parent=39 // loop_header_branch
                %244 = sbr.rel (%p241) target = $region54
              $region51: #{forward.5} parent=39 // loop_body
                %v248 = vld [vmem:[%s246] sm:$0xf]
                %249 = vst [vmem:[%s247] sm:$0xf] %v248
                %v250 = vld [vmem:[%s246 + $0x34] sm:$0xf]
                %251 = vst [vmem:[%s247 + $0x20] sm:$0xf] %v250
                %v252 = vld [vmem:[%s246 + $0x68] sm:$0xf]
                %253 = vst [vmem:[%s247 + $0x40] sm:$0xf] %v252
                %v254 = vld [vmem:[%s246 + $0x9c] sm:$0xf]
                %255 = vst [vmem:[%s247 + $0x60] sm:$0xf] %v254
                %s256 = sadd.s32 1, %s245
                %p257 = scmp.ge.s32.totalorder %s256, %s233
                %s258 = scalar_select %p257, 0, %s256
                %s259 = smul.u32 %s258, 4
                %s260 = smul.u32 %s258, 4
                %s261 = scalar_lea.vmem %s236, %s259
                %s262 = scalar_lea.vmem %s238, %s260 [#allocation2]
              $region52: #{forward.5} parent=39 // loop_footer
                %s242 = sadd.s32 %s240, 1
              $region53: #{forward.5} parent=39 // loop_footer_branch
                %239 = sbr.rel target = $region49
              $region54: #{forward.5} parent=39 // loop_exit
                _
            $region40: #{forward.5} parent=31 // pred_fallthru
              _
          $region32: #{forward.5} parent=27 // pred_fallthru
            _
          %418 = vnop
        $region28: #{forward.5} parent=23 // pred_fallthru
          _
      $region24: #{forward.5} parent=5 // pred_fallthru
        _
      %p419 = scmp.le.s32.totalorder 1, %s9
      %p420 = scmp.lt.s32.totalorder %s9, 3
      %p421 = pnand %p419, %p420
      %p422 = pneg %p421
      // Predicated region
      $region87: #{forward.5} parent=5 // pred_check
        _
      $region88: #{forward.5} parent=5 // pred_check_branch
        %424 = sbr.rel (%p421) target = $region90
      $region89: #{forward.5} parent=5 // pred_region
        %s425 = ssub.s32 %s9, 1
        %s426 = sand.u32 %s22, 1
        %s427 = sand.u32 %s22, 1
        %s428 = smul.addr %s427, 128
        %s429 = scalar_lea.vmem [#allocation2], %s428
        // Predicated region
        $region91: #{forward.5} parent=89 // pred_check
          %p430 = pneg %p35
        $region92: #{forward.5} parent=89 // pred_check_branch
          %432 = sbr.rel (%p430) target = $region94
        $region93: #{forward.5} parent=89 // pred_region
          _
        $region94: #{forward.5} parent=89 // pred_fallthru
          _
        %s433 = sand.u32 %s22, 1
        %s434 = sand.u32 %s22, 1
        %s435 = smul.addr %s434, 128
        %s436 = scalar_lea.vmem [#allocation2], %s435
        %p437 = pneg %p35
        %p438 = pneg %p32
        %p439 = pneg %p56
        %p440 = pneg %p53
        %p441 = pneg %p77
        %p442 = pneg %p74
        %p443 = pneg %p103
        %p444 = pneg %p100
        %s445 = sand.u32 %s90, 1
        %s446 = sand.u32 %s90, 1
        %s447 = smul.addr %s446, 32
        %s448 = scalar_lea.vmem [#allocation3], %s447
        %s449 = smul.u32 8, %s14
        %s450 = ssub.s32 13, %s449
        %p451 = scmp.lt.s32.totalorder %s450, 8
        %s452 = scalar_select %p451, %s450, 8
        %s453 = smul.u32 256, %s452
        %s454 = smul.u32 8, %s14
        %s455 = ssub.s32 13, %s454
        %p456 = scmp.lt.s32.totalorder %s455, 8
        %s457 = scalar_select %p456, %s455, 8
        %s458 = smul.u32 64, %s457
        %v460 = vld [vmem:[%s1] sm:$0xf]
        %v461 = vld [vmem:[%s1 + $0x4] sm:$0xf]
        %v462 = vld [vmem:[%s1 + $0x8] sm:$0xf]
        %v463 = vld [vmem:[%s429] sm:$0xf]
        %v464 = vld [vmem:[%s429 + $0x4] sm:$0xf]
        %v465 = vld [vmem:[%s429 + $0x8] sm:$0xf]
        %v466 = vld [vmem:[%s429 + $0xc] sm:$0xf]
        %v467 = vld [vmem:[%s429 + $0x10] sm:$0xf]
        %v468 = vld [vmem:[%s429 + $0x14] sm:$0xf]
        %v469 = vld [vmem:[%s429 + $0x18] sm:$0xf]
        %v470 = vld [vmem:[%s429 + $0x1c] sm:$0xf]
        %s471 = scalar_lea.vmem %s429, 32 [#allocation2]
        %v472 = vld [vmem:[%s471] sm:$0xf]
        %v473 = vld [vmem:[%s471 + $0x4] sm:$0xf]
        %v474 = vld [vmem:[%s471 + $0x8] sm:$0xf]
        %v475 = vld [vmem:[%s471 + $0xc] sm:$0xf]
        %v476 = vld [vmem:[%s471 + $0x10] sm:$0xf]
        %v477 = vld [vmem:[%s471 + $0x14] sm:$0xf]
        %v478 = vld [vmem:[%s471 + $0x18] sm:$0xf]
        %v479 = vld [vmem:[%s471 + $0x1c] sm:$0xf]
        %s480 = scalar_lea.vmem %s429, 64 [#allocation2]
        %v481 = vld [vmem:[%s480] sm:$0xf]
        %v482 = vld [vmem:[%s480 + $0x4] sm:$0xf]
        %v483 = vld [vmem:[%s480 + $0x8] sm:$0xf]
        %v484 = vld [vmem:[%s480 + $0xc] sm:$0xf]
        %v485 = vld [vmem:[%s480 + $0x10] sm:$0xf]
        %v486 = vld [vmem:[%s480 + $0x14] sm:$0xf]
        %v487 = vld [vmem:[%s480 + $0x18] sm:$0xf]
        %v488 = vld [vmem:[%s480 + $0x1c] sm:$0xf]
        %s489 = scalar_lea.vmem %s429, 96 [#allocation2]
        %v490 = vld [vmem:[%s489] sm:$0xf]
        %v491 = vld [vmem:[%s489 + $0x4] sm:$0xf]
        %v492 = vld [vmem:[%s489 + $0x8] sm:$0xf]
        %v493 = vld [vmem:[%s489 + $0xc] sm:$0xf]
        %v494 = vld [vmem:[%s489 + $0x10] sm:$0xf]
        %v495 = vld [vmem:[%s489 + $0x14] sm:$0xf]
        %v496 = vld [vmem:[%s489 + $0x18] sm:$0xf]
        %v497 = vld [vmem:[%s489 + $0x1c] sm:$0xf]
        %v506 = vunpack.c.l.b16 %v463
        %v507 = vunpack.c.l.b16 %v464
        %v508 = vunpack.c.l.b16 %v465
        %v509 = vunpack.c.l.b16 %v466
        %v510 = vunpack.c.l.b16 %v467
        %v511 = vunpack.c.l.b16 %v468
        %v512 = vunpack.c.l.b16 %v469
        %v513 = vunpack.c.l.b16 %v470
        %v514 = vpack.c.b16 %v507, %v506
        %v515 = vpack.c.b16 %v509, %v508
        %v516 = vpack.c.b16 %v511, %v510
        %v517 = vpack.c.b16 %v513, %v512
        %v526 = vunpack.c.l.b16 %v472
        %v527 = vunpack.c.l.b16 %v473
        %v528 = vunpack.c.l.b16 %v474
        %v529 = vunpack.c.l.b16 %v475
        %v530 = vunpack.c.l.b16 %v476
        %v531 = vunpack.c.l.b16 %v477
        %v532 = vunpack.c.l.b16 %v478
        %v533 = vunpack.c.l.b16 %v479
        %v534 = vpack.c.b16 %v527, %v526
        %v535 = vpack.c.b16 %v529, %v528
        %v536 = vpack.c.b16 %v531, %v530
        %v537 = vpack.c.b16 %v533, %v532
        %v546 = vunpack.c.l.b16 %v481
        %v547 = vunpack.c.l.b16 %v482
        %v548 = vunpack.c.l.b16 %v483
        %v549 = vunpack.c.l.b16 %v484
        %v550 = vunpack.c.l.b16 %v485
        %v551 = vunpack.c.l.b16 %v486
        %v552 = vunpack.c.l.b16 %v487
        %v553 = vunpack.c.l.b16 %v488
        %v554 = vpack.c.b16 %v547, %v546
        %v555 = vpack.c.b16 %v549, %v548
        %v556 = vpack.c.b16 %v551, %v550
        %v557 = vpack.c.b16 %v553, %v552
        %v566 = vunpack.c.l.b16 %v490
        %v567 = vunpack.c.l.b16 %v491
        %v568 = vunpack.c.l.b16 %v492
        %v569 = vunpack.c.l.b16 %v493
        %v570 = vunpack.c.l.b16 %v494
        %v571 = vunpack.c.l.b16 %v495
        %v572 = vunpack.c.l.b16 %v496
        %v573 = vunpack.c.l.b16 %v497
        %v574 = vpack.c.b16 %v567, %v566
        %v575 = vpack.c.b16 %v569, %v568
        %v576 = vpack.c.b16 %v571, %v570
        %v577 = vpack.c.b16 %v573, %v572
        %v581 = vunpack.c.l.b16 %v460
        %v582 = vunpack.c.l.b16 %v461
        %v583 = vunpack.c.l.b16 %v462
        %v584 = vpack.c.b16 %v582, %v581
        %v585 = vpack.c.b16 %v583, %v583
        %vm587 = vcmask 195584
        %v589 = vsel %vm587, %v514, 0
        %v592 = vsel %vm587, %v515, 0
        %v595 = vsel %vm587, %v516, 0
        %v598 = vsel %vm587, %v517, 0
        %v601 = vsel %vm587, %v534, 0
        %v604 = vsel %vm587, %v535, 0
        %v607 = vsel %vm587, %v536, 0
        %v610 = vsel %vm587, %v537, 0
        %v613 = vsel %vm587, %v554, 0
        %v616 = vsel %vm587, %v555, 0
        %v619 = vsel %vm587, %v556, 0
        %v622 = vsel %vm587, %v557, 0
        %v625 = vsel %vm587, %v574, 0
        %v628 = vsel %vm587, %v575, 0
        %v631 = vsel %vm587, %v576, 0
        %v634 = vsel %vm587, %v577, 0
        %vm636 = vcmask 1043456
        %v638 = vsel %vm636, %v585, 0
        %640 = vmatprep.subr.bf16.mxu0 0
        %641 = vmatpush1.bf16.msra.mxu0 %v584
        %642 = vmatprep.subr.bf16.mxu0 0
        %643 = vmatpush1.bf16.msra.mxu0 %v638
        %644 = vmatprep.subr.bf16.mxu0 0
        %645 = vmatpush1.bf16.msra.mxu0 0
        %646 = vmatprep.subr.bf16.mxu0 0
        %647 = vmatpush1.bf16.msra.mxu0 0
        %648 = vmatprep.subr.bf16.mxu0 0
        %649 = vmatpush1.bf16.msra.mxu0 0
        %650 = vmatprep.subr.bf16.mxu0 0
        %651 = vmatpush1.bf16.msra.mxu0 0
        %652 = vmatprep.subr.bf16.mxu0 0
        %653 = vmatpush1.bf16.msra.mxu0 0
        %654 = vmatprep.subr.bf16.mxu0 0
        %655 = vmatpush1.bf16.msra.mxu0 0
        %656 = vmatprep.subr.bf16.mxu0 0
        %657 = vmatpush1.bf16.msra.mxu0 0
        %658 = vmatprep.subr.bf16.mxu0 0
        %659 = vmatpush1.bf16.msra.mxu0 0
        %660 = vmatprep.subr.bf16.mxu0 0
        %661 = vmatpush1.bf16.msra.mxu0 0
        %662 = vmatprep.subr.bf16.mxu0 0
        %663 = vmatpush1.bf16.msra.mxu0 0
        %664 = vmatprep.subr.bf16.mxu0 0
        %665 = vmatpush1.bf16.msra.mxu0 0
        %666 = vmatprep.subr.bf16.mxu0 0
        %667 = vmatpush1.bf16.msra.mxu0 0
        %668 = vmatprep.subr.bf16.mxu0 0
        %669 = vmatpush1.bf16.msra.mxu0 0
        %670 = vmatprep.subr.bf16.mxu0 0
        %671 = vmatpush1.bf16.msra.mxu0 0
        %672 = vmatprep.mubr.bf16.mxu0 0
        %673 = vmatmul.mubr.bf16.gmra.mrb[0].mxu0 %v589
        %v674 = vpop.f32.mrb[0].mxu0
        %v675 = vadd.f32 0.0, %v674
        %v676 = vpop.f32.mrb[0].mxu0
        %v677 = vpop.f32.mrb[0].mxu0
        %v678 = vadd.f32 0.0, %v677
        %v679 = vpop.f32.mrb[0].mxu0
        %680 = vmatprep.mubr.bf16.mxu0 0
        %681 = vmatmul.mubr.bf16.gmra.mrb[0].mxu0 %v592
        %v682 = vpop.f32.mrb[0].mxu0
        %v683 = vadd.f32 0.0, %v682
        %v684 = vpop.f32.mrb[0].mxu0
        %v685 = vpop.f32.mrb[0].mxu0
        %v686 = vadd.f32 0.0, %v685
        %v687 = vpop.f32.mrb[0].mxu0
        %688 = vmatprep.mubr.bf16.mxu0 0
        %689 = vmatmul.mubr.bf16.gmra.mrb[0].mxu0 %v595
        %v690 = vpop.f32.mrb[0].mxu0
        %v691 = vadd.f32 0.0, %v690
        %v692 = vpop.f32.mrb[0].mxu0
        %v693 = vpop.f32.mrb[0].mxu0
        %v694 = vadd.f32 0.0, %v693
        %v695 = vpop.f32.mrb[0].mxu0
        %696 = vmatprep.mubr.bf16.mxu0 0
        %697 = vmatmul.mubr.bf16.gmra.mrb[0].mxu0 %v598
        %v698 = vpop.f32.mrb[0].mxu0
        %v699 = vadd.f32 0.0, %v698
        %v700 = vpop.f32.mrb[0].mxu0
        %v701 = vpop.f32.mrb[0].mxu0
        %v702 = vadd.f32 0.0, %v701
        %v703 = vpop.f32.mrb[0].mxu0
        %704 = vmatprep.mubr.bf16.mxu0 0
        %705 = vmatmul.mubr.bf16.gmra.mrb[0].mxu0 %v601
        %v706 = vpop.f32.mrb[0].mxu0
        %v707 = vadd.f32 0.0, %v706
        %v708 = vpop.f32.mrb[0].mxu0
        %v709 = vpop.f32.mrb[0].mxu0
        %v710 = vadd.f32 0.0, %v709
        %v711 = vpop.f32.mrb[0].mxu0
        %712 = vmatprep.mubr.bf16.mxu0 0
        %713 = vmatmul.mubr.bf16.gmra.mrb[0].mxu0 %v604
        %v714 = vpop.f32.mrb[0].mxu0
        %v715 = vadd.f32 0.0, %v714
        %v716 = vpop.f32.mrb[0].mxu0
        %v717 = vpop.f32.mrb[0].mxu0
        %v718 = vadd.f32 0.0, %v717
        %v719 = vpop.f32.mrb[0].mxu0
        %720 = vmatprep.mubr.bf16.mxu0 0
        %721 = vmatmul.mubr.bf16.gmra.mrb[0].mxu0 %v607
        %v722 = vpop.f32.mrb[0].mxu0
        %v723 = vadd.f32 0.0, %v722
        %v724 = vpop.f32.mrb[0].mxu0
        %v725 = vpop.f32.mrb[0].mxu0
        %v726 = vadd.f32 0.0, %v725
        %v727 = vpop.f32.mrb[0].mxu0
        %728 = vmatprep.mubr.bf16.mxu0 0
        %729 = vmatmul.mubr.bf16.gmra.mrb[0].mxu0 %v610
        %v730 = vpop.f32.mrb[0].mxu0
        %v731 = vadd.f32 0.0, %v730
        %v732 = vpop.f32.mrb[0].mxu0
        %v733 = vpop.f32.mrb[0].mxu0
        %v734 = vadd.f32 0.0, %v733
        %v735 = vpop.f32.mrb[0].mxu0
        %736 = vmatprep.mubr.bf16.mxu0 0
        %737 = vmatmul.mubr.bf16.gmra.mrb[0].mxu0 %v613
        %v738 = vpop.f32.mrb[0].mxu0
        %v739 = vadd.f32 0.0, %v738
        %v740 = vpop.f32.mrb[0].mxu0
        %v741 = vpop.f32.mrb[0].mxu0
        %v742 = vadd.f32 0.0, %v741
        %v743 = vpop.f32.mrb[0].mxu0
        %744 = vmatprep.mubr.bf16.mxu0 0
        %745 = vmatmul.mubr.bf16.gmra.mrb[0].mxu0 %v616
        %v746 = vpop.f32.mrb[0].mxu0
        %v747 = vadd.f32 0.0, %v746
        %v748 = vpop.f32.mrb[0].mxu0
        %v749 = vpop.f32.mrb[0].mxu0
        %v750 = vadd.f32 0.0, %v749
        %v751 = vpop.f32.mrb[0].mxu0
        %752 = vmatprep.mubr.bf16.mxu0 0
        %753 = vmatmul.mubr.bf16.gmra.mrb[0].mxu0 %v619
        %v754 = vpop.f32.mrb[0].mxu0
        %v755 = vadd.f32 0.0, %v754
        %v756 = vpop.f32.mrb[0].mxu0
        %v757 = vpop.f32.mrb[0].mxu0
        %v758 = vadd.f32 0.0, %v757
        %v759 = vpop.f32.mrb[0].mxu0
        %760 = vmatprep.mubr.bf16.mxu0 0
        %761 = vmatmul.mubr.bf16.gmra.mrb[0].mxu0 %v622
        %v762 = vpop.f32.mrb[0].mxu0
        %v763 = vadd.f32 0.0, %v762
        %v764 = vpop.f32.mrb[0].mxu0
        %v765 = vpop.f32.mrb[0].mxu0
        %v766 = vadd.f32 0.0, %v765
        %v767 = vpop.f32.mrb[0].mxu0
        %768 = vmatprep.mubr.bf16.mxu0 0
        %769 = vmatmul.mubr.bf16.gmra.mrb[0].mxu0 %v625
        %v770 = vpop.f32.mrb[0].mxu0
        %v771 = vadd.f32 0.0, %v770
        %v772 = vpop.f32.mrb[0].mxu0
        %v773 = vpop.f32.mrb[0].mxu0
        %v774 = vadd.f32 0.0, %v773
        %v775 = vpop.f32.mrb[0].mxu0
        %776 = vmatprep.mubr.bf16.mxu0 0
        %777 = vmatmul.mubr.bf16.gmra.mrb[0].mxu0 %v628
        %v778 = vpop.f32.mrb[0].mxu0
        %v779 = vadd.f32 0.0, %v778
        %v780 = vpop.f32.mrb[0].mxu0
        %v781 = vpop.f32.mrb[0].mxu0
        %v782 = vadd.f32 0.0, %v781
        %v783 = vpop.f32.mrb[0].mxu0
        %784 = vmatprep.mubr.bf16.mxu0 0
        %785 = vmatmul.mubr.bf16.gmra.mrb[0].mxu0 %v631
        %v786 = vpop.f32.mrb[0].mxu0
        %v787 = vadd.f32 0.0, %v786
        %v788 = vpop.f32.mrb[0].mxu0
        %v789 = vpop.f32.mrb[0].mxu0
        %v790 = vadd.f32 0.0, %v789
        %v791 = vpop.f32.mrb[0].mxu0
        %792 = vmatprep.mubr.bf16.mxu0 0
        %793 = vmatmul.mubr.bf16.gmra.mrb[0].mxu0 %v634
        %v794 = vpop.f32.mrb[0].mxu0
        %v795 = vadd.f32 0.0, %v794
        %v796 = vpop.f32.mrb[0].mxu0
        %v797 = vpop.f32.mrb[0].mxu0
        %v798 = vadd.f32 0.0, %v797
        %v799 = vpop.f32.mrb[0].mxu0
        %800 = vdwg.mxu0
        %v801 = vmax.f32 %v675, %v707
        %v802 = vmax.f32 %v678, %v710
        %v803 = vmax.f32 %v683, %v715
        %v804 = vmax.f32 %v686, %v718
        %v805 = vmax.f32 %v691, %v723
        %v806 = vmax.f32 %v694, %v726
        %v807 = vmax.f32 %v699, %v731
        %v808 = vmax.f32 %v702, %v734
        %v809 = vmax.f32 %v739, %v771
        %v810 = vmax.f32 %v742, %v774
        %v811 = vmax.f32 %v747, %v779
        %v812 = vmax.f32 %v750, %v782
        %v813 = vmax.f32 %v755, %v787
        %v814 = vmax.f32 %v758, %v790
        %v815 = vmax.f32 %v763, %v795
        %v816 = vmax.f32 %v766, %v798
        %v817 = vmax.f32 %v801, %v809
        %v818 = vmax.f32 %v802, %v810
        %v819 = vmax.f32 %v803, %v811
        %v820 = vmax.f32 %v804, %v812
        %v821 = vmax.f32 %v805, %v813
        %v822 = vmax.f32 %v806, %v814
        %v823 = vmax.f32 %v807, %v815
        %v824 = vmax.f32 %v808, %v816
        %v825 = vld [vmem:[%s2] sm:$0x1]
        %v827 = vlaneseq
        %v828 = vshrl.u32 %v827, 7
        %v829 = vsub.s32 0, %v828
        %v830 = vrot.slane %v825, %v829
        %v832 = vadd.f32 %v817, %v830
        %v833 = vadd.f32 %v818, %v830
        %v834 = vadd.f32 %v819, %v830
        %v835 = vadd.f32 %v820, %v830
        %v836 = vadd.f32 %v821, %v830
        %v837 = vadd.f32 %v822, %v830
        %v838 = vadd.f32 %v823, %v830
        %v839 = vadd.f32 %v824, %v830
        %v840 = vmax.f32 %v832, 0.0
        %v841 = vmax.f32 %v833, 0.0
        %v842 = vmax.f32 %v834, 0.0
        %v843 = vmax.f32 %v835, 0.0
        %v844 = vmax.f32 %v836, 0.0
        %v845 = vmax.f32 %v837, 0.0
        %v846 = vmax.f32 %v838, 0.0
        %v847 = vmax.f32 %v839, 0.0
        %v848 = vpack.c.bf16 %v841, %v840
        %v849 = vpack.c.bf16 %v843, %v842
        %v850 = vpack.c.bf16 %v845, %v844
        %v851 = vpack.c.bf16 %v847, %v846
        %v856 = vunpack.c.l.b16 %v848
        %v857 = vunpack.c.h.b16 %v848
        %v858 = vunpack.c.l.b16 %v849
        %v859 = vunpack.c.h.b16 %v849
        %v860 = vunpack.c.l.b16 %v850
        %v861 = vunpack.c.h.b16 %v850
        %v862 = vunpack.c.l.b16 %v851
        %v863 = vunpack.c.h.b16 %v851
        %v864 = vpack.c.b16 %v856, %v856
        %v865 = vpack.c.b16 %v857, %v857
        %v866 = vpack.c.b16 %v858, %v858
        %v867 = vpack.c.b16 %v859, %v859
        %v868 = vpack.c.b16 %v860, %v860
        %v869 = vpack.c.b16 %v861, %v861
        %v870 = vpack.c.b16 %v862, %v862
        %v871 = vpack.c.b16 %v863, %v863
        %vm880 = vcmask 142336
        %881 = vst.msk [vmem:[%s448] sm:$0xf] %vm880, %v864
        %882 = vst.msk [vmem:[%s448 + $0x4] sm:$0xf] %vm880, %v865
        %883 = vst.msk [vmem:[%s448 + $0x8] sm:$0xf] %vm880, %v866
        %884 = vst.msk [vmem:[%s448 + $0xc] sm:$0xf] %vm880, %v867
        %885 = vst.msk [vmem:[%s448 + $0x10] sm:$0xf] %vm880, %v868
        %886 = vst.msk [vmem:[%s448 + $0x14] sm:$0xf] %vm880, %v869
        %887 = vst.msk [vmem:[%s448 + $0x18] sm:$0xf] %vm880, %v870
        %888 = vst.msk [vmem:[%s448 + $0x1c] sm:$0xf] %vm880, %v871
        %s889 = sand.u32 %s90, 1
        %s890 = sand.u32 %s90, 1
        %s891 = smul.addr %s890, 32
        %s892 = scalar_lea.vmem [#allocation3], %s891
        // Predicated region
        $region95: #{forward.5} parent=89 // pred_check
          %p893 = pneg %p100
        $region96: #{forward.5} parent=89 // pred_check_branch
          %895 = sbr.rel (%p893) target = $region98
        $region97: #{forward.5} parent=89 // pred_region
          %s896 = smul.u32 8, %s14
          %s897 = ssub.s32 13, %s896
          %p898 = scmp.lt.s32.totalorder %s897, 8
          %s899 = scalar_select %p898, %s897, 8
          %s900 = smul.u32 64, %s899
          %p901 = scmp.ne.s32.totalorder 0, %s900
          %s902 = smul.addr %s896, 4
          %s903 = scalar_lea.vmem %s3, %s902
          // Predicated region
          $region99: #{forward.5} parent=97 // pred_check
            %p904 = pneg %p901
          $region100: #{forward.5} parent=97 // pred_check_branch
            %906 = sbr.rel (%p904) target = $region102
          $region101: #{forward.5} parent=97 // pred_region
            // Predicated region
            $region103: #{forward.5} parent=101 // pred_check
              _
            $region104: #{forward.5} parent=101 // pred_check_branch
              %908 = sbr.rel target = $region106
            $region105: #{forward.5} parent=101 // pred_region
              // Predicated region
              $region125: #{forward.5} parent=105 // pred_check
                _
              $region126: #{forward.5} parent=105 // pred_check_branch
                %971 = sbr.rel (0) target = $region128
              $region127: #{forward.5} parent=105 // pred_region
                %s973 = sshrl.u32 %s899, 3
                // While loop
                $region129: #{forward.5} parent=127 // loop_pre_header
                  _
                $region130: #{forward.5} parent=127 // loop_header
                  %s975 = sphi 0, %s977
                  %p976 = scmp.ge.s32.totalorder %s975, %s973
                  %s980 = sphi 0, %s1001
                  %s981 = sphi %s892, %s1004
                  %s982 = sphi %s903, %s1005
                $region131: #{forward.5} parent=127 // loop_header_branch
                  %979 = sbr.rel (%p976) target = $region135
                $region132: #{forward.5} parent=127 // loop_body
                  %v983 = vld [vmem:[%s981] sm:$0xf]
                  %984 = vst [vmem:[%s982] sm:$0xf] %v983
                  %v985 = vld [vmem:[%s981 + $0x4] sm:$0xf]
                  %986 = vst [vmem:[%s982 + $0x4] sm:$0xf] %v985
                  %v987 = vld [vmem:[%s981 + $0x8] sm:$0xf]
                  %988 = vst [vmem:[%s982 + $0x8] sm:$0xf] %v987
                  %v989 = vld [vmem:[%s981 + $0xc] sm:$0xf]
                  %990 = vst [vmem:[%s982 + $0xc] sm:$0xf] %v989
                  %v991 = vld [vmem:[%s981 + $0x10] sm:$0xf]
                  %992 = vst [vmem:[%s982 + $0x10] sm:$0xf] %v991
                  %v993 = vld [vmem:[%s981 + $0x14] sm:$0xf]
                  %994 = vst [vmem:[%s982 + $0x14] sm:$0xf] %v993
                  %v995 = vld [vmem:[%s981 + $0x18] sm:$0xf]
                  %996 = vst [vmem:[%s982 + $0x18] sm:$0xf] %v995
                  %v997 = vld [vmem:[%s981 + $0x1c] sm:$0xf]
                  %998 = vst [vmem:[%s982 + $0x1c] sm:$0xf] %v997
                  %s999 = sadd.s32 1, %s980
                  %p1000 = scmp.ge.s32.totalorder %s999, %s973
                  %s1001 = scalar_select %p1000, 0, %s999
                  %s1002 = smul.u32 %s1001, 32
                  %s1003 = smul.u32 %s1001, 32
                  %s1004 = scalar_lea.vmem %s892, %s1002 [#allocation3]
                  %s1005 = scalar_lea.vmem %s903, %s1003
                $region133: #{forward.5} parent=127 // loop_footer
                  %s977 = sadd.s32 %s975, 1
                $region134: #{forward.5} parent=127 // loop_footer_branch
                  %974 = sbr.rel target = $region130
                $region135: #{forward.5} parent=127 // loop_exit
                  _
                %s1006 = sshrl.u32 %s899, 3
                %s1007 = sand.u32 %s899, 7
                %s1008 = smul.u32 %s1006, 8
                %s1009 = smul.u32 4, %s1008
                %s1010 = scalar_lea.vmem %s892, %s1009 [#allocation3]
                %s1011 = smul.u32 4, %s1008
                %s1012 = scalar_lea.vmem %s903, %s1011
                // While loop
                $region136: #{forward.5} parent=127 // loop_pre_header
                  _
                $region137: #{forward.5} parent=127 // loop_header
                  %s1014 = sphi 0, %s1016
                  %p1015 = scmp.ge.s32.totalorder %s1014, %s1007
                  %s1019 = sphi 0, %s1026
                  %s1020 = sphi %s1010, %s1029
                  %s1021 = sphi %s1012, %s1030
                $region138: #{forward.5} parent=127 // loop_header_branch
                  %1018 = sbr.rel (%p1015) target = $region142
                $region139: #{forward.5} parent=127 // loop_body
                  %v1022 = vld [vmem:[%s1020] sm:$0xf]
                  %1023 = vst [vmem:[%s1021] sm:$0xf] %v1022
                  %s1024 = sadd.s32 1, %s1019
                  %p1025 = scmp.ge.s32.totalorder %s1024, %s1007
                  %s1026 = scalar_select %p1025, 0, %s1024
                  %s1027 = smul.u32 %s1026, 4
                  %s1028 = smul.u32 %s1026, 4
                  %s1029 = scalar_lea.vmem %s1010, %s1027 [#allocation3]
                  %s1030 = scalar_lea.vmem %s1012, %s1028
                $region140: #{forward.5} parent=127 // loop_footer
                  %s1016 = sadd.s32 %s1014, 1
                $region141: #{forward.5} parent=127 // loop_footer_branch
                  %1013 = sbr.rel target = $region137
                $region142: #{forward.5} parent=127 // loop_exit
                  _
              $region128: #{forward.5} parent=105 // pred_fallthru
                _
            $region106: #{forward.5} parent=101 // pred_fallthru
              _
            // Predicated region
            $region107: #{forward.5} parent=101 // pred_check
              _
            $region108: #{forward.5} parent=101 // pred_check_branch
              %910 = sbr.rel (0) target = $region110
            $region109: #{forward.5} parent=101 // pred_region
              %s912 = sshrl.u32 %s899, 3
              // While loop
              $region111: #{forward.5} parent=109 // loop_pre_header
                _
              $region112: #{forward.5} parent=109 // loop_header
                %s914 = sphi 0, %s916
                %p915 = scmp.ge.s32.totalorder %s914, %s912
                %s919 = sphi 0, %s940
                %s920 = sphi %s892, %s943
                %s921 = sphi %s903, %s944
              $region113: #{forward.5} parent=109 // loop_header_branch
                %918 = sbr.rel (%p915) target = $region117
              $region114: #{forward.5} parent=109 // loop_body
                %v922 = vld [vmem:[%s920] sm:$0xf]
                %923 = vst [vmem:[%s921] sm:$0xf] %v922
                %v924 = vld [vmem:[%s920 + $0x4] sm:$0xf]
                %925 = vst [vmem:[%s921 + $0x4] sm:$0xf] %v924
                %v926 = vld [vmem:[%s920 + $0x8] sm:$0xf]
                %927 = vst [vmem:[%s921 + $0x8] sm:$0xf] %v926
                %v928 = vld [vmem:[%s920 + $0xc] sm:$0xf]
                %929 = vst [vmem:[%s921 + $0xc] sm:$0xf] %v928
                %v930 = vld [vmem:[%s920 + $0x10] sm:$0xf]
                %931 = vst [vmem:[%s921 + $0x10] sm:$0xf] %v930
                %v932 = vld [vmem:[%s920 + $0x14] sm:$0xf]
                %933 = vst [vmem:[%s921 + $0x14] sm:$0xf] %v932
                %v934 = vld [vmem:[%s920 + $0x18] sm:$0xf]
                %935 = vst [vmem:[%s921 + $0x18] sm:$0xf] %v934
                %v936 = vld [vmem:[%s920 + $0x1c] sm:$0xf]
                %937 = vst [vmem:[%s921 + $0x1c] sm:$0xf] %v936
                %s938 = sadd.s32 1, %s919
                %p939 = scmp.ge.s32.totalorder %s938, %s912
                %s940 = scalar_select %p939, 0, %s938
                %s941 = smul.u32 %s940, 32
                %s942 = smul.u32 %s940, 32
                %s943 = scalar_lea.vmem %s892, %s941 [#allocation3]
                %s944 = scalar_lea.vmem %s903, %s942
              $region115: #{forward.5} parent=109 // loop_footer
                %s916 = sadd.s32 %s914, 1
              $region116: #{forward.5} parent=109 // loop_footer_branch
                %913 = sbr.rel target = $region112
              $region117: #{forward.5} parent=109 // loop_exit
                _
              %s945 = sshrl.u32 %s899, 3
              %s946 = sand.u32 %s899, 7
              %s947 = smul.u32 %s945, 8
              %s948 = smul.u32 4, %s947
              %s949 = scalar_lea.vmem %s892, %s948 [#allocation3]
              %s950 = smul.u32 4, %s947
              %s951 = scalar_lea.vmem %s903, %s950
              // While loop
              $region118: #{forward.5} parent=109 // loop_pre_header
                _
              $region119: #{forward.5} parent=109 // loop_header
                %s953 = sphi 0, %s955
                %p954 = scmp.ge.s32.totalorder %s953, %s946
                %s958 = sphi 0, %s965
                %s959 = sphi %s949, %s968
                %s960 = sphi %s951, %s969
              $region120: #{forward.5} parent=109 // loop_header_branch
                %957 = sbr.rel (%p954) target = $region124
              $region121: #{forward.5} parent=109 // loop_body
                %v961 = vld [vmem:[%s959] sm:$0xf]
                %962 = vst [vmem:[%s960] sm:$0xf] %v961
                %s963 = sadd.s32 1, %s958
                %p964 = scmp.ge.s32.totalorder %s963, %s946
                %s965 = scalar_select %p964, 0, %s963
                %s966 = smul.u32 %s965, 4
                %s967 = smul.u32 %s965, 4
                %s968 = scalar_lea.vmem %s949, %s966 [#allocation3]
                %s969 = scalar_lea.vmem %s951, %s967
              $region122: #{forward.5} parent=109 // loop_footer
                %s955 = sadd.s32 %s953, 1
              $region123: #{forward.5} parent=109 // loop_footer_branch
                %952 = sbr.rel target = $region119
              $region124: #{forward.5} parent=109 // loop_exit
                _
            $region110: #{forward.5} parent=101 // pred_fallthru
              _
          $region102: #{forward.5} parent=97 // pred_fallthru
            _
          %1031 = vnop
        $region98: #{forward.5} parent=89 // pred_fallthru
          _
      $region90: #{forward.5} parent=5 // pred_fallthru
        _
      %p1032 = scmp.le.s32.totalorder 2, %s9
      // Predicated region
      $region143: #{forward.5} parent=5 // pred_check
        %p1033 = pneg %p1032
      $region144: #{forward.5} parent=5 // pred_check_branch
        %1035 = sbr.rel (%p1033) target = $region146
      $region145: #{forward.5} parent=5 // pred_region
        %s1036 = ssub.s32 %s9, 2
        // Predicated region
        $region147: #{forward.5} parent=145 // pred_check
          %p1037 = pneg %p106
        $region148: #{forward.5} parent=145 // pred_check_branch
          %1039 = sbr.rel (%p1037) target = $region150
        $region149: #{forward.5} parent=145 // pred_region
          %s1040 = sand.u32 %s91, 1
          %s1041 = sand.u32 %s91, 1
          %s1042 = smul.addr %s1041, 32
          %s1043 = scalar_lea.vmem [#allocation3], %s1042
        $region150: #{forward.5} parent=145 // pred_fallthru
          _
      $region146: #{forward.5} parent=5 // pred_fallthru
        _
    $region6: #{forward.5} parent=1 // loop_footer
      %s13 = sadd.s32 1, %s9
    $region7: #{forward.5} parent=1 // loop_footer_branch
      %8 = sbr.rel target = $region3
    $region8: #{forward.5} parent=1 // loop_exit
      _

// kernel: forward.6
$region0: #{forward.6}
  #allocation0 [shape = 'u32[]', space=smem, size = 0x4, offset = 0x4, fixed_abs, tag = 'smem constant byte address 0x4 - core index']
  #allocation1 [shape = 'u32[144,128]{1,0:T(1,128)}', space=vmem, size = 0x12000, scoped, tag = 'internal scratch']
  %s0 = inlined_call_operand.vmem [shape: bf16[4,18,72], index: 0, kind: input, shape index: {}]
  %s1 = inlined_call_operand.vmem [shape: bf16[72,32], index: 1, kind: input, shape index: {}]
  %s2 = inlined_call_operand.vmem [shape: f32[1,32], index: 2, kind: input, shape index: {}]
  %s3 = inlined_call_operand.vmem [shape: bf16[18,32], index: 3, kind: output, shape index: {}]
  %s4 = sld [smem:[#allocation0]]
  $region151: #{forward.6} parent=0
    _
  %s6 = ssub.s32 1, %s4
  %s7 = scalar_select 0, %s6, %s4
  $region1: #{forward.6} parent=0
    #allocation2 [shape = 'u8[32768]{0}', space=vmem, size = 0x8000, scoped, tag = 'input window, operand 0']
    #allocation3 [shape = 'u8[8192]{0}', space=vmem, size = 0x2000, scoped, tag = 'output window, operand 0']
    loop: start=0, step=1, limit=4
    $region2: #{forward.6} parent=1 // loop_pre_header
      _
    $region3: #{forward.6} parent=1 // loop_header
      %s9 = sphi 0, %s13
      %p10 = scmp.ge.s32.totalorder %s9, 4
      %s19 = sphi 0, %s21
      %s22 = sphi 0, %s19
      %s23 = sphi 0, %s22
      %s39 = sphi 0, %s23
      %s43 = sphi 0, %s43
      %s45 = sphi 0, %s43
      %s46 = sphi 0, %s45
      %s60 = sphi 0, %s46
      %s64 = sphi 0, %s64
      %s66 = sphi 0, %s64
      %s67 = sphi 0, %s66
      %s81 = sphi 0, %s67
      %s87 = sphi 0, %s89
      %s90 = sphi 0, %s87
      %s91 = sphi 0, %s90
      %s107 = sphi 0, %s91
    $region4: #{forward.6} parent=1 // loop_header_branch
      %12 = sbr.rel (%p10) target = $region8
    $region5: #{forward.6} parent=1 // loop_body
      %s14 = ssub.s32 %s9, 1
      %s15 = ssub.s32 %s9, 2
      %s16 = sadd.s32 %s9, 1
      %s17 = ssub.s32 %s9, %s16
      %p18 = scmp.eq.s32.totalorder %s17, 0
      %s20 = sadd.s32 %s19, 1
      %s21 = scalar_select %p18, %s19, %s20
      %p24 = pneg %p18
      %p25 = scmp.eq.s32.totalorder %s9, 1
      %p26 = por %p24, %p25
      %p27 = scmp.ne.s32.totalorder %s19, %s22
      %p28 = scmp.eq.s32.totalorder %s9, 0
      %p29 = por %p27, %p28
      %p30 = scmp.ne.s32.totalorder %s19, %s22
      %p31 = scmp.eq.s32.totalorder %s14, 1
      %p32 = por %p30, %p31
      %p33 = scmp.ne.s32.totalorder %s22, %s23
      %p34 = scmp.eq.s32.totalorder %s14, 0
      %p35 = por %p33, %p34
      %p36 = scmp.ne.s32.totalorder %s22, %s23
      %p37 = scmp.eq.s32.totalorder %s15, 1
      %p38 = por %p36, %p37
      %p40 = scmp.ne.s32.totalorder %s23, %s39
      %p41 = scmp.eq.s32.totalorder %s15, 0
      %p42 = por %p40, %p41
      %s44 = sadd.s32 %s43, 1
      %p47 = scmp.eq.s32.totalorder %s9, 1
      %p48 = scmp.ne.s32.totalorder %s43, %s45
      %p49 = scmp.eq.s32.totalorder %s9, 0
      %p50 = por %p48, %p49
      %p51 = scmp.ne.s32.totalorder %s43, %s45
      %p52 = scmp.eq.s32.totalorder %s14, 1
      %p53 = por %p51, %p52
      %p54 = scmp.ne.s32.totalorder %s45, %s46
      %p55 = scmp.eq.s32.totalorder %s14, 0
      %p56 = por %p54, %p55
      %p57 = scmp.ne.s32.totalorder %s45, %s46
      %p58 = scmp.eq.s32.totalorder %s15, 1
      %p59 = por %p57, %p58
      %p61 = scmp.ne.s32.totalorder %s46, %s60
      %p62 = scmp.eq.s32.totalorder %s15, 0
      %p63 = por %p61, %p62
      %s65 = sadd.s32 %s64, 1
      %p68 = scmp.eq.s32.totalorder %s9, 1
      %p69 = scmp.ne.s32.totalorder %s64, %s66
      %p70 = scmp.eq.s32.totalorder %s9, 0
      %p71 = por %p69, %p70
      %p72 = scmp.ne.s32.totalorder %s64, %s66
      %p73 = scmp.eq.s32.totalorder %s14, 1
      %p74 = por %p72, %p73
      %p75 = scmp.ne.s32.totalorder %s66, %s67
      %p76 = scmp.eq.s32.totalorder %s14, 0
      %p77 = por %p75, %p76
      %p78 = scmp.ne.s32.totalorder %s66, %s67
      %p79 = scmp.eq.s32.totalorder %s15, 1
      %p80 = por %p78, %p79
      %p82 = scmp.ne.s32.totalorder %s67, %s81
      %p83 = scmp.eq.s32.totalorder %s15, 0
      %p84 = por %p82, %p83
      %s85 = ssub.s32 %s9, %s16
      %p86 = scmp.eq.s32.totalorder %s85, 0
      %s88 = sadd.s32 %s87, 1
      %s89 = scalar_select %p86, %s87, %s88
      %p92 = pneg %p86
      %p93 = scmp.eq.s32.totalorder %s9, 1
      %p94 = por %p92, %p93
      %p95 = scmp.ne.s32.totalorder %s87, %s90
      %p96 = scmp.eq.s32.totalorder %s9, 0
      %p97 = por %p95, %p96
      %p98 = scmp.ne.s32.totalorder %s87, %s90
      %p99 = scmp.eq.s32.totalorder %s14, 1
      %p100 = por %p98, %p99
      %p101 = scmp.ne.s32.totalorder %s90, %s91
      %p102 = scmp.eq.s32.totalorder %s14, 0
      %p103 = por %p101, %p102
      %p104 = scmp.ne.s32.totalorder %s90, %s91
      %p105 = scmp.eq.s32.totalorder %s15, 1
      %p106 = por %p104, %p105
      %p108 = scmp.ne.s32.totalorder %s91, %s107
      %p109 = scmp.eq.s32.totalorder %s15, 0
      %p110 = por %p108, %p109
      %p111 = scmp.le.s32.totalorder 1, %s9
      %p112 = scmp.lt.s32.totalorder %s9, 3
      %p113 = pnand %p111, %p112
      %p114 = pneg %p113
      // Predicated region
      $region9: #{forward.6} parent=5 // pred_check
        _
      $region10: #{forward.6} parent=5 // pred_check_branch
        %116 = sbr.rel (%p113) target = $region12
      $region11: #{forward.6} parent=5 // pred_region
        %s117 = ssub.s32 %s9, 1
        // Predicated region
        $region13: #{forward.6} parent=11 // pred_check
          %p118 = pneg %p56
        $region14: #{forward.6} parent=11 // pred_check_branch
          %120 = sbr.rel (%p118) target = $region16
        $region15: #{forward.6} parent=11 // pred_region
          _
        $region16: #{forward.6} parent=11 // pred_fallthru
          _
        // Predicated region
        $region17: #{forward.6} parent=11 // pred_check
          %p121 = pneg %p77
        $region18: #{forward.6} parent=11 // pred_check_branch
          %123 = sbr.rel (%p121) target = $region20
        $region19: #{forward.6} parent=11 // pred_region
          _
        $region20: #{forward.6} parent=11 // pred_fallthru
          _
      $region12: #{forward.6} parent=5 // pred_fallthru
        _
      %p124 = scmp.lt.s32.totalorder %s9, 2
      // Predicated region
      $region21: #{forward.6} parent=5 // pred_check
        %p125 = pneg %p124
      $region22: #{forward.6} parent=5 // pred_check_branch
        %127 = sbr.rel (%p125) target = $region24
      $region23: #{forward.6} parent=5 // pred_region
        // Predicated region
        $region25: #{forward.6} parent=23 // pred_check
          %p128 = pneg %p29
        $region26: #{forward.6} parent=23 // pred_check_branch
          %130 = sbr.rel (%p128) target = $region28
        $region27: #{forward.6} parent=23 // pred_region
          %s131 = sand.u32 %s19, 1
          %s132 = sand.u32 %s19, 1
          %s133 = smul.addr %s132, 32
          %s134 = scalar_lea.vmem [#allocation2], %s133
          %s135 = smul.u32 2, %s9
          %s136 = ssub.s32 3, %s135
          %p137 = scmp.lt.s32.totalorder %s136, 2
          %s138 = scalar_select %p137, %s136, 2
          %s139 = smul.u32 256, %s138
          %p140 = scmp.ne.s32.totalorder 0, %s139
          %s141 = smul.addr %s135, 4
          %s142 = scalar_lea.vmem %s0, %s141
          // Predicated region
          $region29: #{forward.6} parent=27 // pred_check
            %p143 = pneg %p140
          $region30: #{forward.6} parent=27 // pred_check_branch
            %145 = sbr.rel (%p143) target = $region32
          $region31: #{forward.6} parent=27 // pred_region
            // Predicated region
            $region33: #{forward.6} parent=31 // pred_check
              _
            $region34: #{forward.6} parent=31 // pred_check_branch
              %147 = sbr.rel target = $region36
            $region35: #{forward.6} parent=31 // pred_region
              // Predicated region
              $region55: #{forward.6} parent=35 // pred_check
                _
              $region56: #{forward.6} parent=35 // pred_check_branch
                %216 = sbr.rel (0) target = $region58
              $region57: #{forward.6} parent=35 // pred_region
                %s217 = sshrl.u32 %s138, 1
                // While loop
                $region59: #{forward.6} parent=57 // loop_pre_header
                  _
                $region60: #{forward.6} parent=57 // loop_header
                  %s219 = sphi 0, %s221
                  %p220 = scmp.ge.s32.totalorder %s219, %s217
                  %s224 = sphi 0, %s229
                  %s225 = sphi %s142, %s232
                  %s226 = sphi %s134, %s233
                $region61: #{forward.6} parent=57 // loop_header_branch
                  %223 = sbr.rel (%p220) target = $region65
                $region62: #{forward.6} parent=57 // loop_body
                  %s227 = sadd.s32 1, %s224
                  %p228 = scmp.ge.s32.totalorder %s227, %s217
                  %s229 = scalar_select %p228, 0, %s227
                  %s230 = smul.u32 %s229, 8
                  %s231 = smul.u32 %s229, 8
                  %s232 = scalar_lea.vmem %s142, %s230
                  %s233 = scalar_lea.vmem %s134, %s231 [#allocation2]
                $region63: #{forward.6} parent=57 // loop_footer
                  %s221 = sadd.s32 %s219, 1
                $region64: #{forward.6} parent=57 // loop_footer_branch
                  %218 = sbr.rel target = $region60
                $region65: #{forward.6} parent=57 // loop_exit
                  _
                %s234 = sshrl.u32 %s138, 1
                %s235 = sand.u32 %s138, 1
                %s236 = smul.u32 %s234, 2
                %s237 = smul.u32 4, %s236
                %s238 = scalar_lea.vmem %s142, %s237
                %s239 = smul.u32 4, %s236
                %s240 = scalar_lea.vmem %s134, %s239 [#allocation2]
                // While loop
                $region66: #{forward.6} parent=57 // loop_pre_header
                  _
                $region67: #{forward.6} parent=57 // loop_header
                  %s242 = sphi 0, %s244
                  %p243 = scmp.ge.s32.totalorder %s242, %s235
                  %s247 = sphi 0, %s252
                  %s248 = sphi %s238, %s255
                  %s249 = sphi %s240, %s256
                $region68: #{forward.6} parent=57 // loop_header_branch
                  %246 = sbr.rel (%p243) target = $region72
                $region69: #{forward.6} parent=57 // loop_body
                  %s250 = sadd.s32 1, %s247
                  %p251 = scmp.ge.s32.totalorder %s250, %s235
                  %s252 = scalar_select %p251, 0, %s250
                  %s253 = smul.u32 %s252, 4
                  %s254 = smul.u32 %s252, 4
                  %s255 = scalar_lea.vmem %s238, %s253
                  %s256 = scalar_lea.vmem %s240, %s254 [#allocation2]
                $region70: #{forward.6} parent=57 // loop_footer
                  %s244 = sadd.s32 %s242, 1
                $region71: #{forward.6} parent=57 // loop_footer_branch
                  %241 = sbr.rel target = $region67
                $region72: #{forward.6} parent=57 // loop_exit
                  _
                %s258 = sshrl.u32 %s138, 1
                // While loop
                $region73: #{forward.6} parent=57 // loop_pre_header
                  _
                $region74: #{forward.6} parent=57 // loop_header
                  %s260 = sphi 0, %s262
                  %p261 = scmp.ge.s32.totalorder %s260, %s258
                  %s265 = sphi 0, %s286
                  %s266 = sphi %s142, %s289
                  %s267 = sphi %s134, %s290
                $region75: #{forward.6} parent=57 // loop_header_branch
                  %264 = sbr.rel (%p261) target = $region79
                $region76: #{forward.6} parent=57 // loop_body
                  %v268 = vld [vmem:[%s266] sm:$0xf]
                  %269 = vst [vmem:[%s267] sm:$0xf] %v268
                  %v270 = vld [vmem:[%s266 + $0x4] sm:$0xf]
                  %271 = vst [vmem:[%s267 + $0x4] sm:$0xf] %v270
                  %v272 = vld [vmem:[%s266 + $0xc] sm:$0xf]
                  %273 = vst [vmem:[%s267 + $0x8] sm:$0xf] %v272
                  %v274 = vld [vmem:[%s266 + $0x10] sm:$0xf]
                  %275 = vst [vmem:[%s267 + $0xc] sm:$0xf] %v274
                  %v276 = vld [vmem:[%s266 + $0x18] sm:$0xf]
                  %277 = vst [vmem:[%s267 + $0x10] sm:$0xf] %v276
                  %v278 = vld [vmem:[%s266 + $0x1c] sm:$0xf]
                  %279 = vst [vmem:[%s267 + $0x14] sm:$0xf] %v278
                  %v280 = vld [vmem:[%s266 + $0x24] sm:$0xf]
                  %281 = vst [vmem:[%s267 + $0x18] sm:$0xf] %v280
                  %v282 = vld [vmem:[%s266 + $0x28] sm:$0xf]
                  %283 = vst [vmem:[%s267 + $0x1c] sm:$0xf] %v282
                  %s284 = sadd.s32 1, %s265
                  %p285 = scmp.ge.s32.totalorder %s284, %s258
                  %s286 = scalar_select %p285, 0, %s284
                  %s287 = smul.u32 %s286, 8
                  %s288 = smul.u32 %s286, 8
                  %s289 = scalar_lea.vmem %s142, %s287
                  %s290 = scalar_lea.vmem %s134, %s288 [#allocation2]
                $region77: #{forward.6} parent=57 // loop_footer
                  %s262 = sadd.s32 %s260, 1
                $region78: #{forward.6} parent=57 // loop_footer_branch
                  %259 = sbr.rel target = $region74
                $region79: #{forward.6} parent=57 // loop_exit
                  _
                %s291 = sshrl.u32 %s138, 1
                %s292 = sand.u32 %s138, 1
                %s293 = smul.u32 %s291, 2
                %s294 = smul.u32 4, %s293
                %s295 = scalar_lea.vmem %s142, %s294
                %s296 = smul.u32 4, %s293
                %s297 = scalar_lea.vmem %s134, %s296 [#allocation2]
                // While loop
                $region80: #{forward.6} parent=57 // loop_pre_header
                  _
                $region81: #{forward.6} parent=57 // loop_header
                  %s299 = sphi 0, %s301
                  %p300 = scmp.ge.s32.totalorder %s299, %s292
                  %s304 = sphi 0, %s317
                  %s305 = sphi %s295, %s320
                  %s306 = sphi %s297, %s321
                $region82: #{forward.6} parent=57 // loop_header_branch
                  %303 = sbr.rel (%p300) target = $region86
                $region83: #{forward.6} parent=57 // loop_body
                  %v307 = vld [vmem:[%s305] sm:$0xf]
                  %308 = vst [vmem:[%s306] sm:$0xf] %v307
                  %v309 = vld [vmem:[%s305 + $0xc] sm:$0xf]
                  %310 = vst [vmem:[%s306 + $0x8] sm:$0xf] %v309
                  %v311 = vld [vmem:[%s305 + $0x18] sm:$0xf]
                  %312 = vst [vmem:[%s306 + $0x10] sm:$0xf] %v311
                  %v313 = vld [vmem:[%s305 + $0x24] sm:$0xf]
                  %314 = vst [vmem:[%s306 + $0x18] sm:$0xf] %v313
                  %s315 = sadd.s32 1, %s304
                  %p316 = scmp.ge.s32.totalorder %s315, %s292
                  %s317 = scalar_select %p316, 0, %s315
                  %s318 = smul.u32 %s317, 4
                  %s319 = smul.u32 %s317, 4
                  %s320 = scalar_lea.vmem %s295, %s318
                  %s321 = scalar_lea.vmem %s297, %s319 [#allocation2]
                $region84: #{forward.6} parent=57 // loop_footer
                  %s301 = sadd.s32 %s299, 1
                $region85: #{forward.6} parent=57 // loop_footer_branch
                  %298 = sbr.rel target = $region81
                $region86: #{forward.6} parent=57 // loop_exit
                  _
              $region58: #{forward.6} parent=35 // pred_fallthru
                _
            $region36: #{forward.6} parent=31 // pred_fallthru
              _
            // Predicated region
            $region37: #{forward.6} parent=31 // pred_check
              _
            $region38: #{forward.6} parent=31 // pred_check_branch
              %149 = sbr.rel (0) target = $region40
            $region39: #{forward.6} parent=31 // pred_region
              %s151 = sshrl.u32 %s138, 1
              // While loop
              $region41: #{forward.6} parent=39 // loop_pre_header
                _
              $region42: #{forward.6} parent=39 // loop_header
                %s153 = sphi 0, %s155
                %p154 = scmp.ge.s32.totalorder %s153, %s151
                %s158 = sphi 0, %s179
                %s159 = sphi %s142, %s182
                %s160 = sphi %s134, %s183
              $region43: #{forward.6} parent=39 // loop_header_branch
                %157 = sbr.rel (%p154) target = $region47
              $region44: #{forward.6} parent=39 // loop_body
                %v161 = vld [vmem:[%s159] sm:$0xf]
                %162 = vst [vmem:[%s160] sm:$0xf] %v161
                %v163 = vld [vmem:[%s159 + $0x4] sm:$0xf]
                %164 = vst [vmem:[%s160 + $0x4] sm:$0xf] %v163
                %v165 = vld [vmem:[%s159 + $0xc] sm:$0xf]
                %166 = vst [vmem:[%s160 + $0x8] sm:$0xf] %v165
                %v167 = vld [vmem:[%s159 + $0x10] sm:$0xf]
                %168 = vst [vmem:[%s160 + $0xc] sm:$0xf] %v167
                %v169 = vld [vmem:[%s159 + $0x18] sm:$0xf]
                %170 = vst [vmem:[%s160 + $0x10] sm:$0xf] %v169
                %v171 = vld [vmem:[%s159 + $0x1c] sm:$0xf]
                %172 = vst [vmem:[%s160 + $0x14] sm:$0xf] %v171
                %v173 = vld [vmem:[%s159 + $0x24] sm:$0xf]
                %174 = vst [vmem:[%s160 + $0x18] sm:$0xf] %v173
                %v175 = vld [vmem:[%s159 + $0x28] sm:$0xf]
                %176 = vst [vmem:[%s160 + $0x1c] sm:$0xf] %v175
                %s177 = sadd.s32 1, %s158
                %p178 = scmp.ge.s32.totalorder %s177, %s151
                %s179 = scalar_select %p178, 0, %s177
                %s180 = smul.u32 %s179, 8
                %s181 = smul.u32 %s179, 8
                %s182 = scalar_lea.vmem %s142, %s180
                %s183 = scalar_lea.vmem %s134, %s181 [#allocation2]
              $region45: #{forward.6} parent=39 // loop_footer
                %s155 = sadd.s32 %s153, 1
              $region46: #{forward.6} parent=39 // loop_footer_branch
                %152 = sbr.rel target = $region42
              $region47: #{forward.6} parent=39 // loop_exit
                _
              %s184 = sshrl.u32 %s138, 1
              %s185 = sand.u32 %s138, 1
              %s186 = smul.u32 %s184, 2
              %s187 = smul.u32 4, %s186
              %s188 = scalar_lea.vmem %s142, %s187
              %s189 = smul.u32 4, %s186
              %s190 = scalar_lea.vmem %s134, %s189 [#allocation2]
              // While loop
              $region48: #{forward.6} parent=39 // loop_pre_header
                _
              $region49: #{forward.6} parent=39 // loop_header
                %s192 = sphi 0, %s194
                %p193 = scmp.ge.s32.totalorder %s192, %s185
                %s197 = sphi 0, %s210
                %s198 = sphi %s188, %s213
                %s199 = sphi %s190, %s214
              $region50: #{forward.6} parent=39 // loop_header_branch
                %196 = sbr.rel (%p193) target = $region54
              $region51: #{forward.6} parent=39 // loop_body
                %v200 = vld [vmem:[%s198] sm:$0xf]
                %201 = vst [vmem:[%s199] sm:$0xf] %v200
                %v202 = vld [vmem:[%s198 + $0xc] sm:$0xf]
                %203 = vst [vmem:[%s199 + $0x8] sm:$0xf] %v202
                %v204 = vld [vmem:[%s198 + $0x18] sm:$0xf]
                %205 = vst [vmem:[%s199 + $0x10] sm:$0xf] %v204
                %v206 = vld [vmem:[%s198 + $0x24] sm:$0xf]
                %207 = vst [vmem:[%s199 + $0x18] sm:$0xf] %v206
                %s208 = sadd.s32 1, %s197
                %p209 = scmp.ge.s32.totalorder %s208, %s185
                %s210 = scalar_select %p209, 0, %s208
                %s211 = smul.u32 %s210, 4
                %s212 = smul.u32 %s210, 4
                %s213 = scalar_lea.vmem %s188, %s211
                %s214 = scalar_lea.vmem %s190, %s212 [#allocation2]
              $region52: #{forward.6} parent=39 // loop_footer
                %s194 = sadd.s32 %s192, 1
              $region53: #{forward.6} parent=39 // loop_footer_branch
                %191 = sbr.rel target = $region49
              $region54: #{forward.6} parent=39 // loop_exit
                _
            $region40: #{forward.6} parent=31 // pred_fallthru
              _
          $region32: #{forward.6} parent=27 // pred_fallthru
            _
          %322 = vnop
        $region28: #{forward.6} parent=23 // pred_fallthru
          _
      $region24: #{forward.6} parent=5 // pred_fallthru
        _
      %p323 = scmp.le.s32.totalorder 1, %s9
      %p324 = scmp.lt.s32.totalorder %s9, 3
      %p325 = pnand %p323, %p324
      %p326 = pneg %p325
      // Predicated region
      $region87: #{forward.6} parent=5 // pred_check
        _
      $region88: #{forward.6} parent=5 // pred_check_branch
        %328 = sbr.rel (%p325) target = $region90
      $region89: #{forward.6} parent=5 // pred_region
        %s329 = ssub.s32 %s9, 1
        %s330 = sand.u32 %s22, 1
        %s331 = sand.u32 %s22, 1
        %s332 = smul.addr %s331, 32
        %s333 = scalar_lea.vmem [#allocation2], %s332
        // Predicated region
        $region91: #{forward.6} parent=89 // pred_check
          %p334 = pneg %p35
        $region92: #{forward.6} parent=89 // pred_check_branch
          %336 = sbr.rel (%p334) target = $region94
        $region93: #{forward.6} parent=89 // pred_region
          _
        $region94: #{forward.6} parent=89 // pred_fallthru
          _
        %s337 = sand.u32 %s22, 1
        %s338 = sand.u32 %s22, 1
        %s339 = smul.addr %s338, 32
        %s340 = scalar_lea.vmem [#allocation2], %s339
        %p341 = pneg %p35
        %p342 = pneg %p32
        %p343 = pneg %p56
        %p344 = pneg %p53
        %p345 = pneg %p77
        %p346 = pneg %p74
        %p347 = pneg %p103
        %p348 = pneg %p100
        %s349 = sand.u32 %s90, 1
        %s350 = sand.u32 %s90, 1
        %s351 = smul.addr %s350, 8
        %s352 = scalar_lea.vmem [#allocation3], %s351
        %s353 = smul.u32 2, %s14
        %s354 = ssub.s32 3, %s353
        %p355 = scmp.lt.s32.totalorder %s354, 2
        %s356 = scalar_select %p355, %s354, 2
        %s357 = smul.u32 256, %s356
        %s358 = smul.u32 2, %s14
        %s359 = ssub.s32 3, %s358
        %p360 = scmp.lt.s32.totalorder %s359, 2
        %s361 = scalar_select %p360, %s359, 2
        %s362 = smul.u32 64, %s361
        %v364 = vld [vmem:[%s1] sm:$0xf]
        %v365 = vld [vmem:[%s1 + $0x4] sm:$0xf]
        %v366 = vld [vmem:[%s1 + $0x8] sm:$0xf]
        %v367 = vld [vmem:[%s1 + $0xc] sm:$0xf]
        %v368 = vld [vmem:[%s1 + $0x10] sm:$0xf]
        %v369 = vld [vmem:[%s1 + $0x14] sm:$0xf]
        %v370 = vld [vmem:[%s1 + $0x18] sm:$0xf]
        %v371 = vld [vmem:[%s1 + $0x1c] sm:$0xf]
        %v372 = vld [vmem:[%s1 + $0x20] sm:$0xf]
        %v373 = vld [vmem:[%s333] sm:$0xf]
        %v374 = vld [vmem:[%s333 + $0x4] sm:$0xf]
        %s375 = scalar_lea.vmem %s333, 8 [#allocation2]
        %v376 = vld [vmem:[%s375] sm:$0xf]
        %v377 = vld [vmem:[%s375 + $0x4] sm:$0xf]
        %s378 = scalar_lea.vmem %s333, 16 [#allocation2]
        %v379 = vld [vmem:[%s378] sm:$0xf]
        %v380 = vld [vmem:[%s378 + $0x4] sm:$0xf]
        %s381 = scalar_lea.vmem %s333, 24 [#allocation2]
        %v382 = vld [vmem:[%s381] sm:$0xf]
        %v383 = vld [vmem:[%s381 + $0x4] sm:$0xf]
        %v386 = vunpack.c.l.b16 %v373
        %v387 = vunpack.c.l.b16 %v374
        %v388 = vpack.c.b16 %v387, %v386
        %v391 = vunpack.c.l.b16 %v376
        %v392 = vunpack.c.l.b16 %v377
        %v393 = vpack.c.b16 %v392, %v391
        %v396 = vunpack.c.l.b16 %v379
        %v397 = vunpack.c.l.b16 %v380
        %v398 = vpack.c.b16 %v397, %v396
        %v401 = vunpack.c.l.b16 %v382
        %v402 = vunpack.c.l.b16 %v383
        %v403 = vpack.c.b16 %v402, %v401
        %v413 = vunpack.c.l.b16 %v364
        %v414 = vunpack.c.l.b16 %v365
        %v415 = vunpack.c.l.b16 %v366
        %v416 = vunpack.c.l.b16 %v367
        %v417 = vunpack.c.l.b16 %v368
        %v418 = vunpack.c.l.b16 %v369
        %v419 = vunpack.c.l.b16 %v370
        %v420 = vunpack.c.l.b16 %v371
        %v421 = vunpack.c.l.b16 %v372
        %v422 = vpack.c.b16 %v414, %v413
        %v423 = vpack.c.b16 %v416, %v415
        %v424 = vpack.c.b16 %v418, %v417
        %v425 = vpack.c.b16 %v420, %v419
        %v426 = vpack.c.b16 %v421, %v421
        %vm431 = vcmask 588800
        %v433 = vsel %vm431, %v388, 0
        %v436 = vsel %vm431, %v393, 0
        %v439 = vsel %vm431, %v398, 0
        %v442 = vsel %vm431, %v403, 0
        %vm444 = vcmask 1043456
        %v446 = vsel %vm444, %v426, 0
        %448 = vmatprep.subr.bf16.mxu0 0
        %449 = vmatpush1.bf16.msra.mxu0 %v422
        %450 = vmatprep.subr.bf16.mxu0 0
        %451 = vmatpush1.bf16.msra.mxu0 %v423
        %452 = vmatprep.subr.bf16.mxu0 0
        %453 = vmatpush1.bf16.msra.mxu0 %v424
        %454 = vmatprep.subr.bf16.mxu0 0
        %455 = vmatpush1.bf16.msra.mxu0 %v425
        %456 = vmatprep.subr.bf16.mxu0 0
        %457 = vmatpush1.bf16.msra.mxu0 %v446
        %458 = vmatprep.subr.bf16.mxu0 0
        %459 = vmatpush1.bf16.msra.mxu0 0
        %460 = vmatprep.subr.bf16.mxu0 0
        %461 = vmatpush1.bf16.msra.mxu0 0
        %462 = vmatprep.subr.bf16.mxu0 0
        %463 = vmatpush1.bf16.msra.mxu0 0
        %464 = vmatprep.subr.bf16.mxu0 0
        %465 = vmatpush1.bf16.msra.mxu0 0
        %466 = vmatprep.subr.bf16.mxu0 0
        %467 = vmatpush1.bf16.msra.mxu0 0
        %468 = vmatprep.subr.bf16.mxu0 0
        %469 = vmatpush1.bf16.msra.mxu0 0
        %470 = vmatprep.subr.bf16.mxu0 0
        %471 = vmatpush1.bf16.msra.mxu0 0
        %472 = vmatprep.subr.bf16.mxu0 0
        %473 = vmatpush1.bf16.msra.mxu0 0
        %474 = vmatprep.subr.bf16.mxu0 0
        %475 = vmatpush1.bf16.msra.mxu0 0
        %476 = vmatprep.subr.bf16.mxu0 0
        %477 = vmatpush1.bf16.msra.mxu0 0
        %478 = vmatprep.subr.bf16.mxu0 0
        %479 = vmatpush1.bf16.msra.mxu0 0
        %480 = vmatprep.mubr.bf16.mxu0 0
        %481 = vmatmul.mubr.bf16.gmra.mrb[0].mxu0 %v433
        %v482 = vpop.f32.mrb[0].mxu0
        %v483 = vadd.f32 0.0, %v482
        %v484 = vpop.f32.mrb[0].mxu0
        %v485 = vpop.f32.mrb[0].mxu0
        %v486 = vadd.f32 0.0, %v485
        %v487 = vpop.f32.mrb[0].mxu0
        %488 = vmatprep.mubr.bf16.mxu0 0
        %489 = vmatmul.mubr.bf16.gmra.mrb[0].mxu0 %v436
        %v490 = vpop.f32.mrb[0].mxu0
        %v491 = vadd.f32 0.0, %v490
        %v492 = vpop.f32.mrb[0].mxu0
        %v493 = vpop.f32.mrb[0].mxu0
        %v494 = vadd.f32 0.0, %v493
        %v495 = vpop.f32.mrb[0].mxu0
        %496 = vmatprep.mubr.bf16.mxu0 0
        %497 = vmatmul.mubr.bf16.gmra.mrb[0].mxu0 %v439
        %v498 = vpop.f32.mrb[0].mxu0
        %v499 = vadd.f32 0.0, %v498
        %v500 = vpop.f32.mrb[0].mxu0
        %v501 = vpop.f32.mrb[0].mxu0
        %v502 = vadd.f32 0.0, %v501
        %v503 = vpop.f32.mrb[0].mxu0
        %504 = vmatprep.mubr.bf16.mxu0 0
        %505 = vmatmul.mubr.bf16.gmra.mrb[0].mxu0 %v442
        %v506 = vpop.f32.mrb[0].mxu0
        %v507 = vadd.f32 0.0, %v506
        %v508 = vpop.f32.mrb[0].mxu0
        %v509 = vpop.f32.mrb[0].mxu0
        %v510 = vadd.f32 0.0, %v509
        %v511 = vpop.f32.mrb[0].mxu0
        %512 = vdwg.mxu0
        %v513 = vmax.f32 %v483, %v491
        %v514 = vmax.f32 %v486, %v494
        %v515 = vmax.f32 %v499, %v507
        %v516 = vmax.f32 %v502, %v510
        %v517 = vmax.f32 %v513, %v515
        %v518 = vmax.f32 %v514, %v516
        %v519 = vld [vmem:[%s2] sm:$0x1]
        %v521 = vlaneseq
        %v522 = vshrl.u32 %v521, 7
        %v523 = vsub.s32 0, %v522
        %v524 = vrot.slane %v519, %v523
        %v526 = vadd.f32 %v517, %v524
        %v527 = vadd.f32 %v518, %v524
        %v528 = vmax.f32 %v526, 0.0
        %v529 = vmax.f32 %v527, 0.0
        %v530 = vpack.c.bf16 %v529, %v528
        %v532 = vunpack.c.l.b16 %v530
        %v533 = vunpack.c.h.b16 %v530
        %v534 = vpack.c.b16 %v532, %v532
        %v535 = vpack.c.b16 %v533, %v533
        %vm538 = vcmask 257024
        %539 = vst.msk [vmem:[%s352] sm:$0xf] %vm538, %v534
        %540 = vst.msk [vmem:[%s352 + $0x4] sm:$0xf] %vm538, %v535
        %s541 = sand.u32 %s90, 1
        %s542 = sand.u32 %s90, 1
        %s543 = smul.addr %s542, 8
        %s544 = scalar_lea.vmem [#allocation3], %s543
        // Predicated region
        $region95: #{forward.6} parent=89 // pred_check
          %p545 = pneg %p100
        $region96: #{forward.6} parent=89 // pred_check_branch
          %547 = sbr.rel (%p545) target = $region98
        $region97: #{forward.6} parent=89 // pred_region
          %s548 = smul.u32 2, %s14
          %s549 = ssub.s32 3, %s548
          %p550 = scmp.lt.s32.totalorder %s549, 2
          %s551 = scalar_select %p550, %s549, 2
          %s552 = smul.u32 64, %s551
          %p553 = scmp.ne.s32.totalorder 0, %s552
          %s554 = smul.addr %s548, 4
          %s555 = scalar_lea.vmem %s3, %s554
          // Predicated region
          $region99: #{forward.6} parent=97 // pred_check
            %p556 = pneg %p553
          $region100: #{forward.6} parent=97 // pred_check_branch
            %558 = sbr.rel (%p556) target = $region102
          $region101: #{forward.6} parent=97 // pred_region
            // Predicated region
            $region103: #{forward.6} parent=101 // pred_check
              _
            $region104: #{forward.6} parent=101 // pred_check_branch
              %560 = sbr.rel target = $region106
            $region105: #{forward.6} parent=101 // pred_region
              // Predicated region
              $region125: #{forward.6} parent=105 // pred_check
                _
              $region126: #{forward.6} parent=105 // pred_check_branch
                %611 = sbr.rel (0) target = $region128
              $region127: #{forward.6} parent=105 // pred_region
                %s613 = sshrl.u32 %s551, 1
                // While loop
                $region129: #{forward.6} parent=127 // loop_pre_header
                  _
                $region130: #{forward.6} parent=127 // loop_header
                  %s615 = sphi 0, %s617
                  %p616 = scmp.ge.s32.totalorder %s615, %s613
                  %s620 = sphi 0, %s629
                  %s621 = sphi %s544, %s632
                  %s622 = sphi %s555, %s633
                $region131: #{forward.6} parent=127 // loop_header_branch
                  %619 = sbr.rel (%p616) target = $region135
                $region132: #{forward.6} parent=127 // loop_body
                  %v623 = vld [vmem:[%s621] sm:$0xf]
                  %624 = vst [vmem:[%s622] sm:$0xf] %v623
                  %v625 = vld [vmem:[%s621 + $0x4] sm:$0xf]
                  %626 = vst [vmem:[%s622 + $0x4] sm:$0xf] %v625
                  %s627 = sadd.s32 1, %s620
                  %p628 = scmp.ge.s32.totalorder %s627, %s613
                  %s629 = scalar_select %p628, 0, %s627
                  %s630 = smul.u32 %s629, 8
                  %s631 = smul.u32 %s629, 8
                  %s632 = scalar_lea.vmem %s544, %s630 [#allocation3]
                  %s633 = scalar_lea.vmem %s555, %s631
                $region133: #{forward.6} parent=127 // loop_footer
                  %s617 = sadd.s32 %s615, 1
                $region134: #{forward.6} parent=127 // loop_footer_branch
                  %614 = sbr.rel target = $region130
                $region135: #{forward.6} parent=127 // loop_exit
                  _
                %s634 = sshrl.u32 %s551, 1
                %s635 = sand.u32 %s551, 1
                %s636 = smul.u32 %s634, 2
                %s637 = smul.u32 4, %s636
                %s638 = scalar_lea.vmem %s544, %s637 [#allocation3]
                %s639 = smul.u32 4, %s636
                %s640 = scalar_lea.vmem %s555, %s639
                // While loop
                $region136: #{forward.6} parent=127 // loop_pre_header
                  _
                $region137: #{forward.6} parent=127 // loop_header
                  %s642 = sphi 0, %s644
                  %p643 = scmp.ge.s32.totalorder %s642, %s635
                  %s647 = sphi 0, %s654
                  %s648 = sphi %s638, %s657
                  %s649 = sphi %s640, %s658
                $region138: #{forward.6} parent=127 // loop_header_branch
                  %646 = sbr.rel (%p643) target = $region142
                $region139: #{forward.6} parent=127 // loop_body
                  %v650 = vld [vmem:[%s648] sm:$0xf]
                  %651 = vst [vmem:[%s649] sm:$0xf] %v650
                  %s652 = sadd.s32 1, %s647
                  %p653 = scmp.ge.s32.totalorder %s652, %s635
                  %s654 = scalar_select %p653, 0, %s652
                  %s655 = smul.u32 %s654, 4
                  %s656 = smul.u32 %s654, 4
                  %s657 = scalar_lea.vmem %s638, %s655 [#allocation3]
                  %s658 = scalar_lea.vmem %s640, %s656
                $region140: #{forward.6} parent=127 // loop_footer
                  %s644 = sadd.s32 %s642, 1
                $region141: #{forward.6} parent=127 // loop_footer_branch
                  %641 = sbr.rel target = $region137
                $region142: #{forward.6} parent=127 // loop_exit
                  _
              $region128: #{forward.6} parent=105 // pred_fallthru
                _
            $region106: #{forward.6} parent=101 // pred_fallthru
              _
            // Predicated region
            $region107: #{forward.6} parent=101 // pred_check
              _
            $region108: #{forward.6} parent=101 // pred_check_branch
              %562 = sbr.rel (0) target = $region110
            $region109: #{forward.6} parent=101 // pred_region
              %s564 = sshrl.u32 %s551, 1
              // While loop
              $region111: #{forward.6} parent=109 // loop_pre_header
                _
              $region112: #{forward.6} parent=109 // loop_header
                %s566 = sphi 0, %s568
                %p567 = scmp.ge.s32.totalorder %s566, %s564
                %s571 = sphi 0, %s580
                %s572 = sphi %s544, %s583
                %s573 = sphi %s555, %s584
              $region113: #{forward.6} parent=109 // loop_header_branch
                %570 = sbr.rel (%p567) target = $region117
              $region114: #{forward.6} parent=109 // loop_body
                %v574 = vld [vmem:[%s572] sm:$0xf]
                %575 = vst [vmem:[%s573] sm:$0xf] %v574
                %v576 = vld [vmem:[%s572 + $0x4] sm:$0xf]
                %577 = vst [vmem:[%s573 + $0x4] sm:$0xf] %v576
                %s578 = sadd.s32 1, %s571
                %p579 = scmp.ge.s32.totalorder %s578, %s564
                %s580 = scalar_select %p579, 0, %s578
                %s581 = smul.u32 %s580, 8
                %s582 = smul.u32 %s580, 8
                %s583 = scalar_lea.vmem %s544, %s581 [#allocation3]
                %s584 = scalar_lea.vmem %s555, %s582
              $region115: #{forward.6} parent=109 // loop_footer
                %s568 = sadd.s32 %s566, 1
              $region116: #{forward.6} parent=109 // loop_footer_branch
                %565 = sbr.rel target = $region112
              $region117: #{forward.6} parent=109 // loop_exit
                _
              %s585 = sshrl.u32 %s551, 1
              %s586 = sand.u32 %s551, 1
              %s587 = smul.u32 %s585, 2
              %s588 = smul.u32 4, %s587
              %s589 = scalar_lea.vmem %s544, %s588 [#allocation3]
              %s590 = smul.u32 4, %s587
              %s591 = scalar_lea.vmem %s555, %s590
              // While loop
              $region118: #{forward.6} parent=109 // loop_pre_header
                _
              $region119: #{forward.6} parent=109 // loop_header
                %s593 = sphi 0, %s595
                %p594 = scmp.ge.s32.totalorder %s593, %s586
                %s598 = sphi 0, %s605
                %s599 = sphi %s589, %s608
                %s600 = sphi %s591, %s609
              $region120: #{forward.6} parent=109 // loop_header_branch
                %597 = sbr.rel (%p594) target = $region124
              $region121: #{forward.6} parent=109 // loop_body
                %v601 = vld [vmem:[%s599] sm:$0xf]
                %602 = vst [vmem:[%s600] sm:$0xf] %v601
                %s603 = sadd.s32 1, %s598
                %p604 = scmp.ge.s32.totalorder %s603, %s586
                %s605 = scalar_select %p604, 0, %s603
                %s606 = smul.u32 %s605, 4
                %s607 = smul.u32 %s605, 4
                %s608 = scalar_lea.vmem %s589, %s606 [#allocation3]
                %s609 = scalar_lea.vmem %s591, %s607
              $region122: #{forward.6} parent=109 // loop_footer
                %s595 = sadd.s32 %s593, 1
              $region123: #{forward.6} parent=109 // loop_footer_branch
                %592 = sbr.rel target = $region119
              $region124: #{forward.6} parent=109 // loop_exit
                _
            $region110: #{forward.6} parent=101 // pred_fallthru
              _
          $region102: #{forward.6} parent=97 // pred_fallthru
            _
          %659 = vnop
        $region98: #{forward.6} parent=89 // pred_fallthru
          _
      $region90: #{forward.6} parent=5 // pred_fallthru
        _
      %p660 = scmp.le.s32.totalorder 2, %s9
      // Predicated region
      $region143: #{forward.6} parent=5 // pred_check
        %p661 = pneg %p660
      $region144: #{forward.6} parent=5 // pred_check_branch
        %663 = sbr.rel (%p661) target = $region146
      $region145: #{forward.6} parent=5 // pred_region
        %s664 = ssub.s32 %s9, 2
        // Predicated region
        $region147: #{forward.6} parent=145 // pred_check
          %p665 = pneg %p106
        $region148: #{forward.6} parent=145 // pred_check_branch
          %667 = sbr.rel (%p665) target = $region150
        $region149: #{forward.6} parent=145 // pred_region
          %s668 = sand.u32 %s91, 1
          %s669 = sand.u32 %s91, 1
          %s670 = smul.addr %s669, 8
          %s671 = scalar_lea.vmem [#allocation3], %s670
        $region150: #{forward.6} parent=145 // pred_fallthru
          _
      $region146: #{forward.6} parent=5 // pred_fallthru
        _
    $region6: #{forward.6} parent=1 // loop_footer
      %s13 = sadd.s32 1, %s9
    $region7: #{forward.6} parent=1 // loop_footer_branch
      %8 = sbr.rel target = $region3
    $region8: #{forward.6} parent=1 // loop_exit
      _

// kernel: forward.7
$region0: #{forward.7}
  #allocation0 [shape = 'u32[]', space=smem, size = 0x4, offset = 0x4, fixed_abs, tag = 'smem constant byte address 0x4 - core index']
  #allocation1 [shape = 'u32[144,128]{1,0:T(1,128)}', space=vmem, size = 0x12000, scoped, tag = 'internal scratch']
  %s0 = inlined_call_operand.vmem [shape: bf16[2,288], index: 0, kind: input, shape index: {}]
  %s1 = inlined_call_operand.vmem [shape: bf16[288,256], index: 1, kind: input, shape index: {}]
  %s2 = inlined_call_operand.vmem [shape: f32[1,256], index: 2, kind: input, shape index: {}]
  %s3 = inlined_call_operand.vmem [shape: bf16[256,4], index: 3, kind: input, shape index: {}]
  %s4 = inlined_call_operand.vmem [shape: f32[1,4], index: 4, kind: input, shape index: {}]
  %s5 = inlined_call_operand.hbm [shape: f32[2,4], index: 5, kind: output, shape index: {}]
  %s6 = sld [smem:[#allocation0]]
  $region30: #{forward.7} parent=0
    _
  %s8 = ssub.s32 1, %s6
  %s9 = scalar_select 0, %s8, %s6
  $region1: #{forward.7} parent=0
    #allocation2 [shape = 'u8[1024]{0}', space=vmem, size = 0x400, scoped, tag = 'output window, operand 0, single buffered']
    #allocation3 [shape = 's32[1]{0}', space=sflag, size = 0x4, scoped, tag = 'scoped memory for forward.7']
    %10 = vsyncpa [#allocation3], 0
    // Predicated region
    $region2: #{forward.7} parent=1 // pred_check
      _
    $region3: #{forward.7} parent=1 // pred_check_branch
      %12 = sbr.rel (0) target = $region5
    $region4: #{forward.7} parent=1 // pred_region
      _
    $region5: #{forward.7} parent=1 // pred_fallthru
      _
    // Predicated region
    $region6: #{forward.7} parent=1 // pred_check
      _
    $region7: #{forward.7} parent=1 // pred_check_branch
      %14 = sbr.rel (0) target = $region9
    $region8: #{forward.7} parent=1 // pred_region
      _
    $region9: #{forward.7} parent=1 // pred_fallthru
      _
    // Predicated region
    $region10: #{forward.7} parent=1 // pred_check
      _
    $region11: #{forward.7} parent=1 // pred_check_branch
      %16 = sbr.rel (0) target = $region13
    $region12: #{forward.7} parent=1 // pred_region
      _
    $region13: #{forward.7} parent=1 // pred_fallthru
      _
    // Predicated region
    $region14: #{forward.7} parent=1 // pred_check
      _
    $region15: #{forward.7} parent=1 // pred_check_branch
      %18 = sbr.rel (0) target = $region17
    $region16: #{forward.7} parent=1 // pred_region
      _
    $region17: #{forward.7} parent=1 // pred_fallthru
      _
    // Predicated region
    $region18: #{forward.7} parent=1 // pred_check
      _
    $region19: #{forward.7} parent=1 // pred_check_branch
      %20 = sbr.rel (0) target = $region21
    $region20: #{forward.7} parent=1 // pred_region
      _
    $region21: #{forward.7} parent=1 // pred_fallthru
      _
    %v22 = vld [vmem:[%s0] sm:$0x7]
    %v23 = vld [vmem:[%s1] sm:$0xff]
    %v24 = vld [vmem:[%s1 + $0x8] sm:$0xff]
    %v25 = vld [vmem:[%s1 + $0x10] sm:$0xff]
    %v26 = vld [vmem:[%s1 + $0x18] sm:$0xff]
    %v27 = vld [vmem:[%s1 + $0x20] sm:$0xff]
    %v28 = vld [vmem:[%s1 + $0x28] sm:$0xff]
    %v29 = vld [vmem:[%s1 + $0x30] sm:$0xff]
    %v30 = vld [vmem:[%s1 + $0x38] sm:$0xff]
    %v31 = vld [vmem:[%s1 + $0x40] sm:$0xff]
    %v32 = vld [vmem:[%s1 + $0x48] sm:$0xff]
    %v33 = vld [vmem:[%s1 + $0x50] sm:$0xff]
    %v34 = vld [vmem:[%s1 + $0x58] sm:$0xff]
    %v35 = vld [vmem:[%s1 + $0x60] sm:$0xff]
    %v36 = vld [vmem:[%s1 + $0x68] sm:$0xff]
    %v37 = vld [vmem:[%s1 + $0x70] sm:$0xff]
    %v38 = vld [vmem:[%s1 + $0x78] sm:$0xff]
    %v39 = vld [vmem:[%s1 + $0x80] sm:$0xff]
    %v40 = vld [vmem:[%s1 + $0x88] sm:$0xff]
    %v41 = vld [vmem:[%s1 + $0x90] sm:$0xff]
    %v42 = vld [vmem:[%s1 + $0x98] sm:$0xff]
    %v43 = vld [vmem:[%s1 + $0xa0] sm:$0xff]
    %v44 = vld [vmem:[%s1 + $0xa8] sm:$0xff]
    %v45 = vld [vmem:[%s1 + $0xb0] sm:$0xff]
    %v46 = vld [vmem:[%s1 + $0xb8] sm:$0xff]
    %v47 = vld [vmem:[%s1 + $0xc0] sm:$0xff]
    %v48 = vld [vmem:[%s1 + $0xc8] sm:$0xff]
    %v49 = vld [vmem:[%s1 + $0xd0] sm:$0xff]
    %v50 = vld [vmem:[%s1 + $0xd8] sm:$0xff]
    %v51 = vld [vmem:[%s1 + $0xe0] sm:$0xff]
    %v52 = vld [vmem:[%s1 + $0xe8] sm:$0xff]
    %v53 = vld [vmem:[%s1 + $0xf0] sm:$0xff]
    %v54 = vld [vmem:[%s1 + $0xf8] sm:$0xff]
    %v55 = vld [vmem:[%s1 + $0x100] sm:$0xff]
    %v56 = vld [vmem:[%s1 + $0x108] sm:$0xff]
    %v57 = vld [vmem:[%s1 + $0x110] sm:$0xff]
    %v58 = vld [vmem:[%s1 + $0x118] sm:$0xff]
    %v59 = vld [vmem:[%s2] sm:$0x3]
    %v61 = vlaneseq
    %v62 = vshrl.u32 %v61, 7
    %v63 = vsub.s32 0, %v62
    %v64 = vrot.slane %v59, %v63
    %v65 = vlaneseq
    %v66 = vshrl.u32 %v65, 7
    %v67 = vsub.s32 1, %v66
    %v68 = vrot.slane %v59, %v67
    %v73 = vunpack.c.l.s4 1966171168
    %v74 = vunpack.c.0.s8 %v73
    %v75 = vlaneseq
    %v76 = vshrl.u32 %v75, 7
    %v77 = vsub.s32 %v74, %v76
    %v78 = vrot.slane %v22, %v77
    %v79 = vcombine.high %v78, %v78
    %v81 = vunpack.c.l.s4 1966171168
    %v82 = vunpack.c.0.s8 %v81
    %v83 = vlaneseq
    %v84 = vshrl.u32 %v83, 7
    %v85 = vsub.s32 %v82, %v84
    %v86 = vrot.slane %v78, %v85
    %v88 = vunpack.c.l.s4 1966171168
    %v89 = vunpack.c.0.s8 %v88
    %v90 = vlaneseq
    %v91 = vshrl.u32 %v90, 7
    %v92 = vsub.s32 %v89, %v91
    %v93 = vrot.slane %v79, %v92
    %v94 = vcombine.high %v86, %v86
    %v133 = vunpack.c.l.b16 %v23
    %v134 = vunpack.c.h.b16 %v23
    %v135 = vunpack.c.l.b16 %v24
    %v136 = vunpack.c.h.b16 %v24
    %v137 = vunpack.c.l.b16 %v25
    %v138 = vunpack.c.h.b16 %v25
    %v139 = vunpack.c.l.b16 %v26
    %v140 = vunpack.c.h.b16 %v26
    %v141 = vunpack.c.l.b16 %v27
    %v142 = vunpack.c.h.b16 %v27
    %v143 = vunpack.c.l.b16 %v28
    %v144 = vunpack.c.h.b16 %v28
    %v145 = vunpack.c.l.b16 %v29
    %v146 = vunpack.c.h.b16 %v29
    %v147 = vunpack.c.l.b16 %v30
    %v148 = vunpack.c.h.b16 %v30
    %v149 = vunpack.c.l.b16 %v31
    %v150 = vunpack.c.h.b16 %v31
    %v151 = vunpack.c.l.b16 %v32
    %v152 = vunpack.c.h.b16 %v32
    %v153 = vunpack.c.l.b16 %v33
    %v154 = vunpack.c.h.b16 %v33
    %v155 = vunpack.c.l.b16 %v34
    %v156 = vunpack.c.h.b16 %v34
    %v157 = vunpack.c.l.b16 %v35
    %v158 = vunpack.c.h.b16 %v35
    %v159 = vunpack.c.l.b16 %v36
    %v160 = vunpack.c.h.b16 %v36
    %v161 = vunpack.c.l.b16 %v37
    %v162 = vunpack.c.h.b16 %v37
    %v163 = vunpack.c.l.b16 %v38
    %v164 = vunpack.c.h.b16 %v38
    %v165 = vunpack.c.l.b16 %v39
    %v166 = vunpack.c.h.b16 %v39
    %v167 = vunpack.c.l.b16 %v40
    %v168 = vunpack.c.h.b16 %v40
    %v169 = vunpack.c.l.b16 %v41
    %v170 = vunpack.c.h.b16 %v41
    %v171 = vunpack.c.l.b16 %v42
    %v172 = vunpack.c.h.b16 %v42
    %v173 = vunpack.c.l.b16 %v43
    %v174 = vunpack.c.h.b16 %v43
    %v175 = vunpack.c.l.b16 %v44
    %v176 = vunpack.c.h.b16 %v44
    %v177 = vunpack.c.l.b16 %v45
    %v178 = vunpack.c.h.b16 %v45
    %v179 = vunpack.c.l.b16 %v46
    %v180 = vunpack.c.h.b16 %v46
    %v181 = vunpack.c.l.b16 %v47
    %v182 = vunpack.c.h.b16 %v47
    %v183 = vunpack.c.l.b16 %v48
    %v184 = vunpack.c.h.b16 %v48
    %v185 = vunpack.c.l.b16 %v49
    %v186 = vunpack.c.h.b16 %v49
    %v187 = vunpack.c.l.b16 %v50
    %v188 = vunpack.c.h.b16 %v50
    %v189 = vunpack.c.l.b16 %v51
    %v190 = vunpack.c.h.b16 %v51
    %v191 = vunpack.c.l.b16 %v52
    %v192 = vunpack.c.h.b16 %v52
    %v193 = vunpack.c.l.b16 %v53
    %v194 = vunpack.c.h.b16 %v53
    %v195 = vunpack.c.l.b16 %v54
    %v196 = vunpack.c.h.b16 %v54
    %v197 = vunpack.c.l.b16 %v55
    %v198 = vunpack.c.h.b16 %v55
    %v199 = vunpack.c.l.b16 %v56
    %v200 = vunpack.c.h.b16 %v56
    %v201 = vunpack.c.l.b16 %v57
    %v202 = vunpack.c.h.b16 %v57
    %v203 = vunpack.c.l.b16 %v58
    %v204 = vunpack.c.h.b16 %v58
    %v205 = vpack.c.b16 %v135, %v133
    %v206 = vpack.c.b16 %v136, %v134
    %v207 = vpack.c.b16 %v139, %v137
    %v208 = vpack.c.b16 %v140, %v138
    %v209 = vpack.c.b16 %v143, %v141
    %v210 = vpack.c.b16 %v144, %v142
    %v211 = vpack.c.b16 %v147, %v145
    %v212 = vpack.c.b16 %v148, %v146
    %v213 = vpack.c.b16 %v151, %v149
    %v214 = vpack.c.b16 %v152, %v150
    %v215 = vpack.c.b16 %v155, %v153
    %v216 = vpack.c.b16 %v156, %v154
    %v217 = vpack.c.b16 %v159, %v157
    %v218 = vpack.c.b16 %v160, %v158
    %v219 = vpack.c.b16 %v163, %v161
    %v220 = vpack.c.b16 %v164, %v162
    %v221 = vpack.c.b16 %v167, %v165
    %v222 = vpack.c.b16 %v168, %v166
    %v223 = vpack.c.b16 %v171, %v169
    %v224 = vpack.c.b16 %v172, %v170
    %v225 = vpack.c.b16 %v175, %v173
    %v226 = vpack.c.b16 %v176, %v174
    %v227 = vpack.c.b16 %v179, %v177
    %v228 = vpack.c.b16 %v180, %v178
    %v229 = vpack.c.b16 %v183, %v181
    %v230 = vpack.c.b16 %v184, %v182
    %v231 = vpack.c.b16 %v187, %v185
    %v232 = vpack.c.b16 %v188, %v186
    %v233 = vpack.c.b16 %v191, %v189
    %v234 = vpack.c.b16 %v192, %v190
    %v235 = vpack.c.b16 %v195, %v193
    %v236 = vpack.c.b16 %v196, %v194
    %v237 = vpack.c.b16 %v199, %v197
    %v238 = vpack.c.b16 %v200, %v198
    %v239 = vpack.c.b16 %v203, %v201
    %v240 = vpack.c.b16 %v204, %v202
    %vm277 = vcmask 261120
    %v279 = vsel %vm277, %v94, 0
    %281 = vmatprep.subr.bf16.mxu0 %v206
    %282 = vmatpush1.bf16.msra.mxu0 %v205
    %283 = vmatprep.subr.bf16.mxu0 %v208
    %284 = vmatpush1.bf16.msra.mxu0 %v207
    %285 = vmatprep.subr.bf16.mxu0 %v210
    %286 = vmatpush1.bf16.msra.mxu0 %v209
    %287 = vmatprep.subr.bf16.mxu0 %v212
    %288 = vmatpush1.bf16.msra.mxu0 %v211
    %289 = vmatprep.subr.bf16.mxu0 %v214
    %290 = vmatpush1.bf16.msra.mxu0 %v213
    %291 = vmatprep.subr.bf16.mxu0 %v216
    %292 = vmatpush1.bf16.msra.mxu0 %v215
    %293 = vmatprep.subr.bf16.mxu0 %v218
    %294 = vmatpush1.bf16.msra.mxu0 %v217
    %295 = vmatprep.subr.bf16.mxu0 %v220
    %296 = vmatpush1.bf16.msra.mxu0 %v219
    %297 = vmatprep.subr.bf16.mxu0 %v222
    %298 = vmatpush1.bf16.msra.mxu0 %v221
    %299 = vmatprep.subr.bf16.mxu0 %v224
    %300 = vmatpush1.bf16.msra.mxu0 %v223
    %301 = vmatprep.subr.bf16.mxu0 %v226
    %302 = vmatpush1.bf16.msra.mxu0 %v225
    %303 = vmatprep.subr.bf16.mxu0 %v228
    %304 = vmatpush1.bf16.msra.mxu0 %v227
    %305 = vmatprep.subr.bf16.mxu0 %v230
    %306 = vmatpush1.bf16.msra.mxu0 %v229
    %307 = vmatprep.subr.bf16.mxu0 %v232
    %308 = vmatpush1.bf16.msra.mxu0 %v231
    %309 = vmatprep.subr.bf16.mxu0 %v234
    %310 = vmatpush1.bf16.msra.mxu0 %v233
    %311 = vmatprep.subr.bf16.mxu0 %v236
    %312 = vmatpush1.bf16.msra.mxu0 %v235
    %313 = vmatprep.mubr.bf16.mxu0 %v93
    %314 = vmatmul.mubr.bf16.gmra.mrb[0].mxu0 %v86
    %v315 = vpop.f32.mrb[0].mxu0
    %v316 = vadd.f32 %v64, %v315
    %v317 = vpop.f32.mrb[0].mxu0
    %v318 = vadd.f32 %v68, %v317
    %v319 = vpop.f32.mrb[0].mxu0
    %v320 = vpop.f32.mrb[0].mxu0
    %321 = vdwg.mxu0
    %322 = vmatprep.subr.bf16.mxu0 %v238
    %323 = vmatpush1.bf16.msra.mxu0 %v237
    %324 = vmatprep.subr.bf16.mxu0 %v240
    %325 = vmatpush1.bf16.msra.mxu0 %v239
    %326 = vmatprep.subr.bf16.mxu0 0
    %327 = vmatpush1.bf16.msra.mxu0 0
    %328 = vmatprep.subr.bf16.mxu0 0
    %329 = vmatpush1.bf16.msra.mxu0 0
    %330 = vmatprep.subr.bf16.mxu0 0
    %331 = vmatpush1.bf16.msra.mxu0 0
    %332 = vmatprep.subr.bf16.mxu0 0
    %333 = vmatpush1.bf16.msra.mxu0 0
    %334 = vmatprep.subr.bf16.mxu0 0
    %335 = vmatpush1.bf16.msra.mxu0 0
    %336 = vmatprep.subr.bf16.mxu0 0
    %337 = vmatpush1.bf16.msra.mxu0 0
    %338 = vmatprep.subr.bf16.mxu0 0
    %339 = vmatpush1.bf16.msra.mxu0 0
    %340 = vmatprep.subr.bf16.mxu0 0
    %341 = vmatpush1.bf16.msra.mxu0 0
    %342 = vmatprep.subr.bf16.mxu0 0
    %343 = vmatpush1.bf16.msra.mxu0 0
    %344 = vmatprep.subr.bf16.mxu0 0
    %345 = vmatpush1.bf16.msra.mxu0 0
    %346 = vmatprep.subr.bf16.mxu0 0
    %347 = vmatpush1.bf16.msra.mxu0 0
    %348 = vmatprep.subr.bf16.mxu0 0
    %349 = vmatpush1.bf16.msra.mxu0 0
    %350 = vmatprep.subr.bf16.mxu0 0
    %351 = vmatpush1.bf16.msra.mxu0 0
    %352 = vmatprep.subr.bf16.mxu0 0
    %353 = vmatpush1.bf16.msra.mxu0 0
    %354 = vmatprep.mubr.bf16.mxu0 0
    %355 = vmatmul.mubr.bf16.gmra.mrb[0].mxu0 %v279
    %v356 = vpop.f32.mrb[0].mxu0
    %v357 = vadd.f32 %v316, %v356
    %v358 = vpop.f32.mrb[0].mxu0
    %v359 = vadd.f32 %v318, %v358
    %v360 = vpop.f32.mrb[0].mxu0
    %v361 = vpop.f32.mrb[0].mxu0
    %362 = vdwg.mxu0
    %v363 = vmax.f32 %v357, 0.0
    %v364 = vmax.f32 %v359, 0.0
    %v365 = vpack.c.bf16 %v363, %v363
    %v366 = vpack.c.bf16 %v364, %v364
    %v367 = vld [vmem:[%s3] sm:$0xf]
    %v368 = vld [vmem:[%s3 + $0x4] sm:$0xf]
    %v369 = vld [vmem:[%s3 + $0x8] sm:$0xf]
    %v370 = vld [vmem:[%s3 + $0xc] sm:$0xf]
    %v371 = vld [vmem:[%s3 + $0x10] sm:$0xf]
    %v372 = vld [vmem:[%s3 + $0x14] sm:$0xf]
    %v373 = vld [vmem:[%s3 + $0x18] sm:$0xf]
    %v374 = vld [vmem:[%s3 + $0x1c] sm:$0xf]
    %v375 = vld [vmem:[%s3 + $0x20] sm:$0xf]
    %v376 = vld [vmem:[%s3 + $0x24] sm:$0xf]
    %v377 = vld [vmem:[%s3 + $0x28] sm:$0xf]
    %v378 = vld [vmem:[%s3 + $0x2c] sm:$0xf]
    %v379 = vld [vmem:[%s3 + $0x30] sm:$0xf]
    %v380 = vld [vmem:[%s3 + $0x34] sm:$0xf]
    %v381 = vld [vmem:[%s3 + $0x38] sm:$0xf]
    %v382 = vld [vmem:[%s3 + $0x3c] sm:$0xf]
    %v383 = vld [vmem:[%s3 + $0x40] sm:$0xf]
    %v384 = vld [vmem:[%s3 + $0x44] sm:$0xf]
    %v385 = vld [vmem:[%s3 + $0x48] sm:$0xf]
    %v386 = vld [vmem:[%s3 + $0x4c] sm:$0xf]
    %v387 = vld [vmem:[%s3 + $0x50] sm:$0xf]
    %v388 = vld [vmem:[%s3 + $0x54] sm:$0xf]
    %v389 = vld [vmem:[%s3 + $0x58] sm:$0xf]
    %v390 = vld [vmem:[%s3 + $0x5c] sm:$0xf]
    %v391 = vld [vmem:[%s3 + $0x60] sm:$0xf]
    %v392 = vld [vmem:[%s3 + $0x64] sm:$0xf]
    %v393 = vld [vmem:[%s3 + $0x68] sm:$0xf]
    %v394 = vld [vmem:[%s3 + $0x6c] sm:$0xf]
    %v395 = vld [vmem:[%s3 + $0x70] sm:$0xf]
    %v396 = vld [vmem:[%s3 + $0x74] sm:$0xf]
    %v397 = vld [vmem:[%s3 + $0x78] sm:$0xf]
    %v398 = vld [vmem:[%s3 + $0x7c] sm:$0xf]
    %v399 = vld [vmem:[%s4] sm:$0x1]
    %v401 = vlaneseq
    %v402 = vshrl.u32 %v401, 7
    %v403 = vsub.s32 0, %v402
    %v404 = vrot.slane %v399, %v403
    %v438 = vunpack.c.l.b16 %v367
    %v439 = vunpack.c.l.b16 %v368
    %v440 = vunpack.c.l.b16 %v369
    %v441 = vunpack.c.l.b16 %v370
    %v442 = vunpack.c.l.b16 %v371
    %v443 = vunpack.c.l.b16 %v372
    %v444 = vunpack.c.l.b16 %v373
    %v445 = vunpack.c.l.b16 %v374
    %v446 = vunpack.c.l.b16 %v375
    %v447 = vunpack.c.l.b16 %v376
    %v448 = vunpack.c.l.b16 %v377
    %v449 = vunpack.c.l.b16 %v378
    %v450 = vunpack.c.l.b16 %v379
    %v451 = vunpack.c.l.b16 %v380
    %v452 = vunpack.c.l.b16 %v381
    %v453 = vunpack.c.l.b16 %v382
    %v454 = vunpack.c.l.b16 %v383
    %v455 = vunpack.c.l.b16 %v384
    %v456 = vunpack.c.l.b16 %v385
    %v457 = vunpack.c.l.b16 %v386
    %v458 = vunpack.c.l.b16 %v387
    %v459 = vunpack.c.l.b16 %v388
    %v460 = vunpack.c.l.b16 %v389
    %v461 = vunpack.c.l.b16 %v390
    %v462 = vunpack.c.l.b16 %v391
    %v463 = vunpack.c.l.b16 %v392
    %v464 = vunpack.c.l.b16 %v393
    %v465 = vunpack.c.l.b16 %v394
    %v466 = vunpack.c.l.b16 %v395
    %v467 = vunpack.c.l.b16 %v396
    %v468 = vunpack.c.l.b16 %v397
    %v469 = vunpack.c.l.b16 %v398
    %v470 = vpack.c.b16 %v439, %v438
    %v471 = vpack.c.b16 %v441, %v440
    %v472 = vpack.c.b16 %v443, %v442
    %v473 = vpack.c.b16 %v445, %v444
    %v474 = vpack.c.b16 %v447, %v446
    %v475 = vpack.c.b16 %v449, %v448
    %v476 = vpack.c.b16 %v451, %v450
    %v477 = vpack.c.b16 %v453, %v452
    %v478 = vpack.c.b16 %v455, %v454
    %v479 = vpack.c.b16 %v457, %v456
    %v480 = vpack.c.b16 %v459, %v458
    %v481 = vpack.c.b16 %v461, %v460
    %v482 = vpack.c.b16 %v463, %v462
    %v483 = vpack.c.b16 %v465, %v464
    %v484 = vpack.c.b16 %v467, %v466
    %v485 = vpack.c.b16 %v469, %v468
    %502 = vmatprep.subr.bf16.mxu0 0
    %503 = vmatpush1.bf16.msra.mxu0 %v470
    %504 = vmatprep.subr.bf16.mxu0 0
    %505 = vmatpush1.bf16.msra.mxu0 %v471
    %506 = vmatprep.subr.bf16.mxu0 0
    %507 = vmatpush1.bf16.msra.mxu0 %v472
    %508 = vmatprep.subr.bf16.mxu0 0
    %509 = vmatpush1.bf16.msra.mxu0 %v473
    %510 = vmatprep.subr.bf16.mxu0 0
    %511 = vmatpush1.bf16.msra.mxu0 %v474
    %512 = vmatprep.subr.bf16.mxu0 0
    %513 = vmatpush1.bf16.msra.mxu0 %v475
    %514 = vmatprep.subr.bf16.mxu0 0
    %515 = vmatpush1.bf16.msra.mxu0 %v476
    %516 = vmatprep.subr.bf16.mxu0 0
    %517 = vmatpush1.bf16.msra.mxu0 %v477
    %518 = vmatprep.subr.bf16.mxu0 0
    %519 = vmatpush1.bf16.msra.mxu0 %v478
    %520 = vmatprep.subr.bf16.mxu0 0
    %521 = vmatpush1.bf16.msra.mxu0 %v479
    %522 = vmatprep.subr.bf16.mxu0 0
    %523 = vmatpush1.bf16.msra.mxu0 %v480
    %524 = vmatprep.subr.bf16.mxu0 0
    %525 = vmatpush1.bf16.msra.mxu0 %v481
    %526 = vmatprep.subr.bf16.mxu0 0
    %527 = vmatpush1.bf16.msra.mxu0 %v482
    %528 = vmatprep.subr.bf16.mxu0 0
    %529 = vmatpush1.bf16.msra.mxu0 %v483
    %530 = vmatprep.subr.bf16.mxu0 0
    %531 = vmatpush1.bf16.msra.mxu0 %v484
    %532 = vmatprep.subr.bf16.mxu0 0
    %533 = vmatpush1.bf16.msra.mxu0 %v485
    %534 = vmatprep.mubr.bf16.mxu0 %v366
    %535 = vmatmul.mubr.bf16.gmra.mrb[0].mxu0 %v365
    %v536 = vpop.f32.mrb[0].mxu0
    %v537 = vadd.f32 %v404, %v536
    %v538 = vpop.f32.mrb[0].mxu0
    %v539 = vpop.f32.mrb[0].mxu0
    %v540 = vpop.f32.mrb[0].mxu0
    %541 = vdwg.mxu0
    %vm542 = vcmask 25600
    %543 = vst.msk [vmem:[#allocation2] sm:$0x3] %vm542, %v537
    // Predicated region
    $region22: #{forward.7} parent=1 // pred_check
      _
    $region23: #{forward.7} parent=1 // pred_check_branch
      %545 = sbr.rel (0) target = $region25
    $region24: #{forward.7} parent=1 // pred_region
      %s547 = ssub.s32 32, 32
      %548 = vsyncadd [#allocation3], %s547
      %s550 = sshll.u32 [#allocation2], 4
      %s551 = int_to_ptr.vmem [resolvable:$true] %s550
      %553 = dma.vmem_to_hbm [thread:$0]  %s551, 32, %s5, [#allocation3]
    $region25: #{forward.7} parent=1 // pred_fallthru
      _
    // Predicated region
    $region26: #{forward.7} parent=1 // pred_check
      _
    $region27: #{forward.7} parent=1 // pred_check_branch
      %555 = sbr.rel (0) target = $region29
    $region28: #{forward.7} parent=1 // pred_region
      %556 = dma.done [#allocation3], 32
    $region29: #{forward.7} parent=1 // pred_fallthru
      _
    %557 = vsyncpa [#allocation3], 1

</llo_original>
